<compile_context>
chip_gen: v7x
topology: tpu7x:2x2x1
jax: 0.10.0
libtpu: 0.0.40
codegen_flags: <defaults>
</compile_context>

<pallas_src>
import jax
import jax.numpy as jnp
import numpy as np
from jax import lax
from jax.experimental import pallas as pl
from jax.experimental.pallas import tpu as pltpu

BN_EPS = 1e-3  # nn.BatchNorm2d(out_ch, eps=0.001), inference mode (running stats)


# --------------------------- small host-side helpers ---------------------------

def _bilinear_matrix(out_size, in_size):
    """Interpolation matrix A (out_size, in_size) for align_corners=True."""
    if out_size == 1:
        src = jnp.zeros((1,), jnp.float32)
    else:
        src = jnp.arange(out_size, dtype=jnp.float32) * ((in_size - 1) / (out_size - 1))
    lo = jnp.clip(jnp.floor(src).astype(jnp.int32), 0, in_size - 1)
    hi = jnp.clip(lo + 1, 0, in_size - 1)
    frac = src - lo.astype(jnp.float32)
    rows = jnp.arange(out_size)
    A = jnp.zeros((out_size, in_size), jnp.float32)
    A = A.at[rows, lo].add(1.0 - frac)
    A = A.at[rows, hi].add(frac)
    return A


def _row_select(K, P, S, h_in, h_out):
    """A[kh, i, r] = 1 iff r == i*S + kh - P (row window + stride + zero pad)."""
    A = np.zeros((K, h_out, h_in), np.float32)
    for i in range(h_out):
        for kh in range(K):
            r = i * S + kh - P
            if 0 <= r < h_in:
                A[kh, i, r] = 1.0
    return jnp.asarray(A)


def _col_mix_onehot(K, P, S, w_in, w_out):
    """T[kw, m, j] = 1 iff m == j*S + kw - P (column window + stride + zero pad)."""
    T = np.zeros((K, w_in, w_out), np.float32)
    for j in range(w_out):
        for kw in range(K):
            m = j * S + kw - P
            if 0 <= m < w_in:
                T[kw, m, j] = 1.0
    return jnp.asarray(T)


def _blockdiag(mat, G):
    """Block-diagonal packing of the last two dims over G lane-packed samples."""
    I = jnp.eye(G, dtype=jnp.float32)
    r, c = mat.shape[-2], mat.shape[-1]
    out = jnp.einsum('gh,...mj->...gmhj', I, mat)
    return out.reshape(mat.shape[:-2] + (G * r, G * c))


def _fold_conv_bn(p):
    """Fold conv bias + inference BatchNorm into scaled weights + scalar shift."""
    inv = 1.0 / jnp.sqrt(p["var"] + BN_EPS)
    scale = (p["gamma"] * inv).reshape(())                    # Cout == 1
    w = (p["w"][0] * scale).astype(jnp.float32)               # (Cin, K, K)
    shift = (p["beta"] + (p["b"] - p["mean"]) * (p["gamma"] * inv)).reshape(())
    return w, shift.astype(jnp.float32)


# ------------------------------- fused APN kernel -------------------------------

def apn_forward(x, params):
    """APN_Module.forward as one fused Pallas kernel (grid over sample groups)."""
    N, Cin, H, W = x.shape
    assert H % 8 == 0 and W % 8 == 0, "spatial dims must be divisible by 8"
    assert params["depth_w"].size == 1, "reference forward requires out_ch == 1"
    H2, W2, H4, W4, H8, W8 = H // 2, W // 2, H // 4, W // 4, H // 8, W // 8

    # ---- batch packing along the lane axis (block-diagonal column matrices) ----
    G = max(1, min(N, 128 // W))                 # samples per grid step (lane fill)
    num_groups = -(-N // G)
    if num_groups == 1 and N > 1:
        G = -(-N // 2)                           # keep >=2 steps so both v7x TCs work
        num_groups = -(-N // G)
    Npad = num_groups * G
    CL, GW, GW2, GW4, GW8 = Cin * G * W, G * W, G * W2, G * W4, G * W8

    xf = x.astype(jnp.float32)
    if Npad != N:
        xf = jnp.pad(xf, ((0, Npad - N), (0, 0), (0, 0), (0, 0)))
    # (ng, G, Cin, H, W) -> (ng, H, Cin, G, W) -> (ng, H, Cin*G*W); lane = (c*G+g)*W+w
    xp = xf.reshape(num_groups, G, Cin, H, W).transpose(0, 3, 2, 1, 4) \
           .reshape(num_groups, H, CL)

    # ---- fold conv bias + BN (wrapper-side, once) ----
    folded = {k: _fold_conv_bn(params[k])
              for k in ("mid", "down1", "down2", "down3a", "down3b", "conv2", "conv1")}
    wd = params["depth_w"].reshape(()).astype(jnp.float32)
    bd = params["depth_b"].reshape(()).astype(jnp.float32)

    shift_names = ["mid", "down1", "down2", "down3a", "down3b", "conv2", "conv1"]
    scal = jnp.stack([folded[k][1] for k in shift_names] + [wd, bd])   # (9,) -> SMEM
    S_MID, S_D1, S_D2, S_D3A, S_D3B, S_C2, S_C1, S_WD, S_BD = range(9)

    # ---- build per-conv A (row) and B (column) matrices, packed over samples ----
    conv_defs = {   # name: (K, P, S, h_in, w_in, h_out, w_out)
        "down1":  (7, 3, 2, H,  W,  H2, W2),
        "down2":  (5, 2, 2, H2, W2, H4, W4),
        "down3a": (3, 1, 2, H4, W4, H8, W8),
        "down3b": (3, 1, 1, H8, W8, H8, W8),
        "conv2":  (5, 2, 1, H4, W4, H4, W4),
        "conv1":  (7, 3, 1, H2, W2, H2, W2),
    }

    row_mats, row_meta = [], {}
    cbig_mats, cbig_meta = [], {}
    csml_mats, csml_meta = [], {}

    def _add(mats, meta, name, arr):
        arr = arr if arr.ndim == 3 else arr[None]
        meta[name] = (len(mats), int(arr.shape[0]), int(arr.shape[1]), int(arr.shape[2]))
        for i in range(arr.shape[0]):
            mats.append(arr[i])

    for name, (K, P, S, hi_, wi_, ho_, wo_) in conv_defs.items():
        w_f = folded[name][0]                                  # (cin_conv, K, K)
        A = _row_select(K, P, S, hi_, ho_)                     # (K, ho, hi)   static
        T = _col_mix_onehot(K, P, S, wi_, wo_)                 # (K, wi, wo)   static
        B = jnp.einsum('chq,qmj->chmj', w_f, T)                # (cin, K, wi, wo)
        Bp = _blockdiag(B, G)                                  # (cin, K, G*wi, G*wo)
        Bp = jnp.transpose(Bp, (1, 0, 2, 3)).reshape(K, -1, G * wo_)
        _add(row_mats, row_meta, name, A)
        if name == "down1":
            _add(cbig_mats, cbig_meta, name, Bp)               # rows = Cin*G*W
        else:
            _add(csml_mats, csml_meta, name, Bp)

    # mid: 1x1 conv (Cin -> 1) as a single lane-mixing matmul (BN folded in)
    wmid = folded["mid"][0][:, 0, 0]                           # (Cin,)
    M = jnp.einsum('c,gh,wv->cgwhv', wmid,
                   jnp.eye(G, dtype=jnp.float32),
                   jnp.eye(W, dtype=jnp.float32)).reshape(CL, GW)
    _add(cbig_mats, cbig_meta, "mid", M)

    # align_corners=True bilinear upsamples (row matrix + block-diag column matrix)
    for rname, cname, (ho_, hi_, wo_, wi_) in (
            ("a34", "a34t", (H4, H8, W4, W8)),
            ("a48", "a48t", (H2, H4, W2, W4)),
            ("af",  "aft",  (H,  H2, W,  W2))):
        _add(row_mats, row_meta, rname, _bilinear_matrix(ho_, hi_))
        _add(csml_mats, csml_meta, cname, _blockdiag(_bilinear_matrix(wo_, wi_).T, G))

    def _pad_stack(mats, rmax, cmax):
        return jnp.stack([jnp.pad(m, ((0, rmax - m.shape[0]), (0, cmax - m.shape[1])))
                          for m in mats])

    rowpack = _pad_stack(row_mats, H, H)                 # (33, H, H)
    colbig = _pad_stack(cbig_mats, CL, GW)               # (8, Cin*G*W, G*W)
    colsmall = _pad_stack(csml_mats, GW2, GW)            # (26, G*W2, G*W)

    # ------------------------------- kernel body -------------------------------
    def kernel(x_ref, scal_ref, row_ref, cbig_ref, csml_ref, o_ref):
        f32 = jnp.float32

        def mm(a, b):
            return jnp.dot(a, b, preferred_element_type=f32)

        def conv(z, name, col_ref, col_meta, shift_idx):
            ri, K, ho, hi = row_meta[name]
            ci, _, br, bc = col_meta[name]
            acc = None
            for kh in range(K):       # K independent MXU matmul pairs, K-1 VPU adds
                t = mm(row_ref[ri + kh, :ho, :hi], mm(z, col_ref[ci + kh, :br, :bc]))
                acc = t if acc is None else acc + t
            return jnp.maximum(acc + scal_ref[shift_idx], 0.0)

        def resize(z, rname, cname):
            ri, _, ho, hi = row_meta[rname]
            ci, _, br, bc = csml_meta[cname]
            return mm(row_ref[ri, :ho, :hi], mm(z, csml_ref[ci, :br, :bc]))

        x = x_ref[0]                                               # (H, Cin*G*W)

        # mid: 1x1 conv + BN + ReLU as one matmul
        mi, _, mr, mc = cbig_meta["mid"]
        mid = jnp.maximum(mm(x, cbig_ref[mi, :mr, :mc]) + scal_ref[S_MID], 0.0)

        x1 = conv(x,  "down1",  cbig_ref, cbig_meta, S_D1)         # (H2, G*W2)
        x2 = conv(x1, "down2",  csml_ref, csml_meta, S_D2)         # (H4, G*W4)
        x3 = conv(x2, "down3a", csml_ref, csml_meta, S_D3A)        # (H8, G*W8)
        x3 = conv(x3, "down3b", csml_ref, csml_meta, S_D3B)        # (H8, G*W8)

        y = conv(x2, "conv2", csml_ref, csml_meta, S_C2) + resize(x3, "a34", "a34t")
        y = conv(x1, "conv1", csml_ref, csml_meta, S_C1) + resize(y, "a48", "a48t")
        y = resize(y, "af", "aft") + mid                           # (H, G*W)

        # depth: 1x1 conv (1 -> 1) == scalar affine
        o_ref[0] = (y * scal_ref[S_WD] + scal_ref[S_BD]).astype(o_ref.dtype)

    out = pl.pallas_call(
        kernel,
        out_shape=jax.ShapeDtypeStruct((num_groups, H, GW), jnp.float32),
        grid=(num_groups,),
        in_specs=[
            pl.BlockSpec((1, H, CL), lambda n: (n, 0, 0)),
            pl.BlockSpec(memory_space=pltpu.MemorySpace.SMEM),     # scalar table
            pl.BlockSpec(rowpack.shape, lambda n: (0, 0, 0)),
            pl.BlockSpec(colbig.shape, lambda n: (0, 0, 0)),
            pl.BlockSpec(colsmall.shape, lambda n: (0, 0, 0)),
        ],
        out_specs=pl.BlockSpec((1, H, GW), lambda n: (n, 0, 0)),
        compiler_params=pltpu.CompilerParams(dimension_semantics=("parallel",)),
    )(xp, scal, rowpack, colbig, colsmall)

    # (ng, H, G*W) -> (N, 1, H, W)
    out = out.reshape(num_groups, H, G, W).transpose(0, 2, 1, 3).reshape(Npad, H, W)
    return out[:N].reshape(N, 1, H, W)


# --------------------- pure-JAX reference (numerics self-check) ---------------------

def _conv_bn_relu_ref(x, p, stride, pad):
    y = lax.conv_general_dilated(
        x, p["w"], window_strides=(stride, stride),
        padding=[(pad, pad), (pad, pad)],
        dimension_numbers=("NCHW", "OIHW", "NCHW"),
        precision=lax.Precision.HIGHEST)
    y = y + p["b"].reshape(1, -1, 1, 1)
    inv = 1.0 / jnp.sqrt(p["var"] + BN_EPS)
    y = (y - p["mean"].reshape(1, -1, 1, 1)) * (p["gamma"] * inv).reshape(1, -1, 1, 1) \
        + p["beta"].reshape(1, -1, 1, 1)
    return jnp.maximum(y, 0.0)


def _resize_ref(x, hout, wout):
    _, _, hin, win = x.shape
    ah = _bilinear_matrix(hout, hin)
    aw = _bilinear_matrix(wout, win)
    return jnp.einsum("ia,ncab,jb->ncij", ah, x, aw, precision=lax.Precision.HIGHEST)


def apn_forward_ref(x, params):
    mid = _conv_bn_relu_ref(x, params["mid"], 1, 0)
    x1 = _conv_bn_relu_ref(x, params["down1"], 2, 3)
    x2 = _conv_bn_relu_ref(x1, params["down2"], 2, 2)
    x3 = _conv_bn_relu_ref(x2, params["down3a"], 2, 1)
    x3 = _conv_bn_relu_ref(x3, params["down3b"], 1, 1)
    y = _conv_bn_relu_ref(x2, params["conv2"], 1, 2) + _resize_ref(x3, x2.shape[2], x2.shape[3])
    y = _resize_ref(y, x1.shape[2], x1.shape[3]) + _conv_bn_relu_ref(x1, params["conv1"], 1, 3)
    y = _resize_ref(y, x.shape[2], x.shape[3]) + mid
    return y * params["depth_w"].reshape(()) + params["depth_b"].reshape(())


# ----------------------------------- params ----------------------------------------

def init_params(key, in_ch, out_ch):
    def conv_bn(k, cin, cout, ksz):
        kw, kb, kg, kbe, km, kv = jax.random.split(k, 6)
        fan = cin * ksz * ksz
        return dict(
            w=jax.random.normal(kw, (cout, cin, ksz, ksz), jnp.float32) / jnp.sqrt(fan),
            b=0.1 * jax.random.normal(kb, (cout,), jnp.float32),
            gamma=1.0 + 0.1 * jax.random.normal(kg, (cout,), jnp.float32),
            beta=0.1 * jax.random.normal(kbe, (cout,), jnp.float32),
            mean=0.1 * jax.random.normal(km, (cout,), jnp.float32),
            var=jnp.abs(jax.random.normal(kv, (cout,), jnp.float32)) + 0.5,
        )

    keys = jax.random.split(key, 9)
    return dict(
        mid=conv_bn(keys[0], in_ch, out_ch, 1),
        down1=conv_bn(keys[1], in_ch, 1, 7),
        down2=conv_bn(keys[2], 1, 1, 5),
        down3a=conv_bn(keys[3], 1, 1, 3),
        down3b=conv_bn(keys[4], 1, 1, 3),
        conv2=conv_bn(keys[5], 1, 1, 5),
        conv1=conv_bn(keys[6], 1, 1, 7),
        depth_w=jax.random.normal(keys[7], (out_ch, 1, 1, 1), jnp.float32),
        depth_b=0.1 * jax.random.normal(keys[8], (out_ch,), jnp.float32),
    )


if __name__ == "__main__":
    in_ch, out_ch = 4, 1   # out_ch must be 1 for the reference forward to be well-formed
    N, H, W = 2, 16, 16

    key = jax.random.PRNGKey(0)
    kx, kp = jax.random.split(key)
    x = jax.random.normal(kx, (N, in_ch, H, W), jnp.float32)
    params = init_params(kp, in_ch, out_ch)

    out = jax.block_until_ready(jax.jit(apn_forward)(x, params))
    ref = jax.block_until_ready(jax.jit(apn_forward_ref)(x, params))

    assert out.shape == (N, out_ch, H, W), out.shape
    assert bool(jnp.all(jnp.isfinite(out)))
    err = float(jnp.max(jnp.abs(out - ref)))
    tol = 5e-2 * max(1.0, float(jnp.max(jnp.abs(ref))))
    assert err < tol, f"max abs error vs reference: {err} (tol {tol})"
    print("KERNEL_OK")
</pallas_src>

<mosaic_0001>
module attributes {stable_mosaic.version = 11 : i64} {
  func.func private @main(%arg0: i32) attributes {dimension_semantics = [#tpu.dimension_semantics<core_parallel>], iteration_bounds = array<i64: 2>, tpu.core_type = #tpu.core_type<sc_scalar_subcore>, window_params = []} {
    return
  }
}

module attributes {stable_mosaic.version = 11 : i64} {
  func.func private @main(%arg0: i32) attributes {dimension_semantics = [#tpu.dimension_semantics<core_parallel>], iteration_bounds = array<i64: 2>, tpu.core_type = #tpu.core_type<sc_scalar_subcore>, window_params = []} {
    return
  }
}

module attributes {stable_mosaic.version = 11 : i64} {
  func.func @kernel(%arg0: i32, %arg1: memref<1x16x64xf32, #tpu.memory_space<vmem>>, %arg2: memref<9xf32, #tpu.memory_space<smem>>, %arg3: memref<33x16x16xf32, #tpu.memory_space<vmem>>, %arg4: memref<8x64x16xf32, #tpu.memory_space<vmem>>, %arg5: memref<26x8x16xf32, #tpu.memory_space<vmem>>, %arg6: memref<1x16x16xf32, #tpu.memory_space<vmem>>) attributes {dimension_semantics = [#tpu.dimension_semantics<parallel>], iteration_bounds = array<i64: 2>, scalar_prefetch = 0 : i64, scratch_operands = 0 : i64, tpu.core_type = #tpu.core_type<tc>, window_params = [{transform_indices = @transform_0, window_bounds = array<i64: 1, 16, 64>}, {transform_indices = @transform_1, window_bounds = array<i64: 9>}, {pipeline_mode = #tpu.pipeline_mode<synchronous>, transform_indices = @transform_2, window_bounds = array<i64: 33, 16, 16>}, {pipeline_mode = #tpu.pipeline_mode<synchronous>, transform_indices = @transform_3, window_bounds = array<i64: 8, 64, 16>}, {pipeline_mode = #tpu.pipeline_mode<synchronous>, transform_indices = @transform_4, window_bounds = array<i64: 26, 8, 16>}, {transform_indices = @transform_5, window_bounds = array<i64: 1, 16, 16>}]} {
    %c0 = arith.constant 0 : index
    %c0_0 = arith.constant 0 : index
    %c0_1 = arith.constant 0 : index
    %0 = vector.load %arg1[%c0, %c0_0, %c0_1] : memref<1x16x64xf32, #tpu.memory_space<vmem>>, vector<1x16x64xf32>
    %1 = vector.shape_cast %0 : vector<1x16x64xf32> to vector<16x64xf32>
    %c7 = arith.constant 7 : index
    %c0_2 = arith.constant 0 : index
    %c0_3 = arith.constant 0 : index
    %2 = vector.load %arg4[%c7, %c0_2, %c0_3] : memref<8x64x16xf32, #tpu.memory_space<vmem>>, vector<1x64x16xf32>
    %3 = vector.shape_cast %2 : vector<1x64x16xf32> to vector<64x16xf32>
    %cst = arith.constant dense<0.000000e+00> : vector<16x16xf32>
    %4 = tpu.matmul %1, %3, %cst {dimension_numbers = #tpu.dot_dimension_numbers<[1], [0], [0], [1], [0, 0, 1, 1], [], []>} : vector<16x64xf32>, vector<64x16xf32>, vector<16x16xf32> -> vector<16x16xf32>
    %c0_4 = arith.constant 0 : index
    %5 = memref.load %arg2[%c0_4] : memref<9xf32, #tpu.memory_space<smem>>
    %6 = vector.broadcast %5 : f32 to vector<16x16xf32>
    %7 = arith.addf %4, %6 : vector<16x16xf32>
    %cst_5 = arith.constant 0.000000e+00 : f32
    %8 = vector.broadcast %cst_5 : f32 to vector<16x16xf32>
    %9 = arith.maximumf %7, %8 : vector<16x16xf32>
    %c0_6 = arith.constant 0 : index
    %c0_7 = arith.constant 0 : index
    %c0_8 = arith.constant 0 : index
    %10 = vector.load %arg3[%c0_6, %c0_7, %c0_8] : memref<33x16x16xf32, #tpu.memory_space<vmem>>, vector<1x8x16xf32>
    %11 = vector.shape_cast %10 : vector<1x8x16xf32> to vector<8x16xf32>
    %c0_9 = arith.constant 0 : index
    %c0_10 = arith.constant 0 : index
    %c0_11 = arith.constant 0 : index
    %12 = vector.load %arg4[%c0_9, %c0_10, %c0_11] : memref<8x64x16xf32, #tpu.memory_space<vmem>>, vector<1x64x8xf32>
    %13 = vector.shape_cast %12 : vector<1x64x8xf32> to vector<64x8xf32>
    %cst_12 = arith.constant dense<0.000000e+00> : vector<16x8xf32>
    %14 = tpu.matmul %1, %13, %cst_12 {dimension_numbers = #tpu.dot_dimension_numbers<[1], [0], [0], [1], [0, 0, 1, 1], [], []>} : vector<16x64xf32>, vector<64x8xf32>, vector<16x8xf32> -> vector<16x8xf32>
    %cst_13 = arith.constant dense<0.000000e+00> : vector<8x8xf32>
    %15 = tpu.matmul %11, %14, %cst_13 {dimension_numbers = #tpu.dot_dimension_numbers<[1], [0], [0], [1], [0, 0, 1, 1], [], []>} : vector<8x16xf32>, vector<16x8xf32>, vector<8x8xf32> -> vector<8x8xf32>
    %c1 = arith.constant 1 : index
    %c0_14 = arith.constant 0 : index
    %c0_15 = arith.constant 0 : index
    %16 = vector.load %arg3[%c1, %c0_14, %c0_15] : memref<33x16x16xf32, #tpu.memory_space<vmem>>, vector<1x8x16xf32>
    %17 = vector.shape_cast %16 : vector<1x8x16xf32> to vector<8x16xf32>
    %c1_16 = arith.constant 1 : index
    %c0_17 = arith.constant 0 : index
    %c0_18 = arith.constant 0 : index
    %18 = vector.load %arg4[%c1_16, %c0_17, %c0_18] : memref<8x64x16xf32, #tpu.memory_space<vmem>>, vector<1x64x8xf32>
    %19 = vector.shape_cast %18 : vector<1x64x8xf32> to vector<64x8xf32>
    %cst_19 = arith.constant dense<0.000000e+00> : vector<16x8xf32>
    %20 = tpu.matmul %1, %19, %cst_19 {dimension_numbers = #tpu.dot_dimension_numbers<[1], [0], [0], [1], [0, 0, 1, 1], [], []>} : vector<16x64xf32>, vector<64x8xf32>, vector<16x8xf32> -> vector<16x8xf32>
    %cst_20 = arith.constant dense<0.000000e+00> : vector<8x8xf32>
    %21 = tpu.matmul %17, %20, %cst_20 {dimension_numbers = #tpu.dot_dimension_numbers<[1], [0], [0], [1], [0, 0, 1, 1], [], []>} : vector<8x16xf32>, vector<16x8xf32>, vector<8x8xf32> -> vector<8x8xf32>
    %22 = arith.addf %15, %21 : vector<8x8xf32>
    %c2 = arith.constant 2 : index
    %c0_21 = arith.constant 0 : index
    %c0_22 = arith.constant 0 : index
    %23 = vector.load %arg3[%c2, %c0_21, %c0_22] : memref<33x16x16xf32, #tpu.memory_space<vmem>>, vector<1x8x16xf32>
    %24 = vector.shape_cast %23 : vector<1x8x16xf32> to vector<8x16xf32>
    %c2_23 = arith.constant 2 : index
    %c0_24 = arith.constant 0 : index
    %c0_25 = arith.constant 0 : index
    %25 = vector.load %arg4[%c2_23, %c0_24, %c0_25] : memref<8x64x16xf32, #tpu.memory_space<vmem>>, vector<1x64x8xf32>
    %26 = vector.shape_cast %25 : vector<1x64x8xf32> to vector<64x8xf32>
    %cst_26 = arith.constant dense<0.000000e+00> : vector<16x8xf32>
    %27 = tpu.matmul %1, %26, %cst_26 {dimension_numbers = #tpu.dot_dimension_numbers<[1], [0], [0], [1], [0, 0, 1, 1], [], []>} : vector<16x64xf32>, vector<64x8xf32>, vector<16x8xf32> -> vector<16x8xf32>
    %cst_27 = arith.constant dense<0.000000e+00> : vector<8x8xf32>
    %28 = tpu.matmul %24, %27, %cst_27 {dimension_numbers = #tpu.dot_dimension_numbers<[1], [0], [0], [1], [0, 0, 1, 1], [], []>} : vector<8x16xf32>, vector<16x8xf32>, vector<8x8xf32> -> vector<8x8xf32>
    %29 = arith.addf %22, %28 : vector<8x8xf32>
    %c3 = arith.constant 3 : index
    %c0_28 = arith.constant 0 : index
    %c0_29 = arith.constant 0 : index
    %30 = vector.load %arg3[%c3, %c0_28, %c0_29] : memref<33x16x16xf32, #tpu.memory_space<vmem>>, vector<1x8x16xf32>
    %31 = vector.shape_cast %30 : vector<1x8x16xf32> to vector<8x16xf32>
    %c3_30 = arith.constant 3 : index
    %c0_31 = arith.constant 0 : index
    %c0_32 = arith.constant 0 : index
    %32 = vector.load %arg4[%c3_30, %c0_31, %c0_32] : memref<8x64x16xf32, #tpu.memory_space<vmem>>, vector<1x64x8xf32>
    %33 = vector.shape_cast %32 : vector<1x64x8xf32> to vector<64x8xf32>
    %cst_33 = arith.constant dense<0.000000e+00> : vector<16x8xf32>
    %34 = tpu.matmul %1, %33, %cst_33 {dimension_numbers = #tpu.dot_dimension_numbers<[1], [0], [0], [1], [0, 0, 1, 1], [], []>} : vector<16x64xf32>, vector<64x8xf32>, vector<16x8xf32> -> vector<16x8xf32>
    %cst_34 = arith.constant dense<0.000000e+00> : vector<8x8xf32>
    %35 = tpu.matmul %31, %34, %cst_34 {dimension_numbers = #tpu.dot_dimension_numbers<[1], [0], [0], [1], [0, 0, 1, 1], [], []>} : vector<8x16xf32>, vector<16x8xf32>, vector<8x8xf32> -> vector<8x8xf32>
    %36 = arith.addf %29, %35 : vector<8x8xf32>
    %c4 = arith.constant 4 : index
    %c0_35 = arith.constant 0 : index
    %c0_36 = arith.constant 0 : index
    %37 = vector.load %arg3[%c4, %c0_35, %c0_36] : memref<33x16x16xf32, #tpu.memory_space<vmem>>, vector<1x8x16xf32>
    %38 = vector.shape_cast %37 : vector<1x8x16xf32> to vector<8x16xf32>
    %c4_37 = arith.constant 4 : index
    %c0_38 = arith.constant 0 : index
    %c0_39 = arith.constant 0 : index
    %39 = vector.load %arg4[%c4_37, %c0_38, %c0_39] : memref<8x64x16xf32, #tpu.memory_space<vmem>>, vector<1x64x8xf32>
    %40 = vector.shape_cast %39 : vector<1x64x8xf32> to vector<64x8xf32>
    %cst_40 = arith.constant dense<0.000000e+00> : vector<16x8xf32>
    %41 = tpu.matmul %1, %40, %cst_40 {dimension_numbers = #tpu.dot_dimension_numbers<[1], [0], [0], [1], [0, 0, 1, 1], [], []>} : vector<16x64xf32>, vector<64x8xf32>, vector<16x8xf32> -> vector<16x8xf32>
    %cst_41 = arith.constant dense<0.000000e+00> : vector<8x8xf32>
    %42 = tpu.matmul %38, %41, %cst_41 {dimension_numbers = #tpu.dot_dimension_numbers<[1], [0], [0], [1], [0, 0, 1, 1], [], []>} : vector<8x16xf32>, vector<16x8xf32>, vector<8x8xf32> -> vector<8x8xf32>
    %43 = arith.addf %36, %42 : vector<8x8xf32>
    %c5 = arith.constant 5 : index
    %c0_42 = arith.constant 0 : index
    %c0_43 = arith.constant 0 : index
    %44 = vector.load %arg3[%c5, %c0_42, %c0_43] : memref<33x16x16xf32, #tpu.memory_space<vmem>>, vector<1x8x16xf32>
    %45 = vector.shape_cast %44 : vector<1x8x16xf32> to vector<8x16xf32>
    %c5_44 = arith.constant 5 : index
    %c0_45 = arith.constant 0 : index
    %c0_46 = arith.constant 0 : index
    %46 = vector.load %arg4[%c5_44, %c0_45, %c0_46] : memref<8x64x16xf32, #tpu.memory_space<vmem>>, vector<1x64x8xf32>
    %47 = vector.shape_cast %46 : vector<1x64x8xf32> to vector<64x8xf32>
    %cst_47 = arith.constant dense<0.000000e+00> : vector<16x8xf32>
    %48 = tpu.matmul %1, %47, %cst_47 {dimension_numbers = #tpu.dot_dimension_numbers<[1], [0], [0], [1], [0, 0, 1, 1], [], []>} : vector<16x64xf32>, vector<64x8xf32>, vector<16x8xf32> -> vector<16x8xf32>
    %cst_48 = arith.constant dense<0.000000e+00> : vector<8x8xf32>
    %49 = tpu.matmul %45, %48, %cst_48 {dimension_numbers = #tpu.dot_dimension_numbers<[1], [0], [0], [1], [0, 0, 1, 1], [], []>} : vector<8x16xf32>, vector<16x8xf32>, vector<8x8xf32> -> vector<8x8xf32>
    %50 = arith.addf %43, %49 : vector<8x8xf32>
    %c6 = arith.constant 6 : index
    %c0_49 = arith.constant 0 : index
    %c0_50 = arith.constant 0 : index
    %51 = vector.load %arg3[%c6, %c0_49, %c0_50] : memref<33x16x16xf32, #tpu.memory_space<vmem>>, vector<1x8x16xf32>
    %52 = vector.shape_cast %51 : vector<1x8x16xf32> to vector<8x16xf32>
    %c6_51 = arith.constant 6 : index
    %c0_52 = arith.constant 0 : index
    %c0_53 = arith.constant 0 : index
    %53 = vector.load %arg4[%c6_51, %c0_52, %c0_53] : memref<8x64x16xf32, #tpu.memory_space<vmem>>, vector<1x64x8xf32>
    %54 = vector.shape_cast %53 : vector<1x64x8xf32> to vector<64x8xf32>
    %cst_54 = arith.constant dense<0.000000e+00> : vector<16x8xf32>
    %55 = tpu.matmul %1, %54, %cst_54 {dimension_numbers = #tpu.dot_dimension_numbers<[1], [0], [0], [1], [0, 0, 1, 1], [], []>} : vector<16x64xf32>, vector<64x8xf32>, vector<16x8xf32> -> vector<16x8xf32>
    %cst_55 = arith.constant dense<0.000000e+00> : vector<8x8xf32>
    %56 = tpu.matmul %52, %55, %cst_55 {dimension_numbers = #tpu.dot_dimension_numbers<[1], [0], [0], [1], [0, 0, 1, 1], [], []>} : vector<8x16xf32>, vector<16x8xf32>, vector<8x8xf32> -> vector<8x8xf32>
    %57 = arith.addf %50, %56 : vector<8x8xf32>
    %c1_56 = arith.constant 1 : index
    %58 = memref.load %arg2[%c1_56] : memref<9xf32, #tpu.memory_space<smem>>
    %59 = vector.broadcast %58 : f32 to vector<8x8xf32>
    %60 = arith.addf %57, %59 : vector<8x8xf32>
    %cst_57 = arith.constant 0.000000e+00 : f32
    %61 = vector.broadcast %cst_57 : f32 to vector<8x8xf32>
    %62 = arith.maximumf %60, %61 : vector<8x8xf32>
    %c7_58 = arith.constant 7 : index
    %c0_59 = arith.constant 0 : index
    %c0_60 = arith.constant 0 : index
    %63 = vector.load %arg3[%c7_58, %c0_59, %c0_60] : memref<33x16x16xf32, #tpu.memory_space<vmem>>, vector<1x4x8xf32>
    %64 = vector.shape_cast %63 : vector<1x4x8xf32> to vector<4x8xf32>
    %c0_61 = arith.constant 0 : index
    %c0_62 = arith.constant 0 : index
    %c0_63 = arith.constant 0 : index
    %65 = vector.load %arg5[%c0_61, %c0_62, %c0_63] : memref<26x8x16xf32, #tpu.memory_space<vmem>>, vector<1x8x4xf32>
    %66 = vector.shape_cast %65 : vector<1x8x4xf32> to vector<8x4xf32>
    %cst_64 = arith.constant dense<0.000000e+00> : vector<8x4xf32>
    %67 = tpu.matmul %62, %66, %cst_64 {dimension_numbers = #tpu.dot_dimension_numbers<[1], [0], [0], [1], [0, 0, 1, 1], [], []>} : vector<8x8xf32>, vector<8x4xf32>, vector<8x4xf32> -> vector<8x4xf32>
    %cst_65 = arith.constant dense<0.000000e+00> : vector<4x4xf32>
    %68 = tpu.matmul %64, %67, %cst_65 {dimension_numbers = #tpu.dot_dimension_numbers<[1], [0], [0], [1], [0, 0, 1, 1], [], []>} : vector<4x8xf32>, vector<8x4xf32>, vector<4x4xf32> -> vector<4x4xf32>
    %c8 = arith.constant 8 : index
    %c0_66 = arith.constant 0 : index
    %c0_67 = arith.constant 0 : index
    %69 = vector.load %arg3[%c8, %c0_66, %c0_67] : memref<33x16x16xf32, #tpu.memory_space<vmem>>, vector<1x4x8xf32>
    %70 = vector.shape_cast %69 : vector<1x4x8xf32> to vector<4x8xf32>
    %c1_68 = arith.constant 1 : index
    %c0_69 = arith.constant 0 : index
    %c0_70 = arith.constant 0 : index
    %71 = vector.load %arg5[%c1_68, %c0_69, %c0_70] : memref<26x8x16xf32, #tpu.memory_space<vmem>>, vector<1x8x4xf32>
    %72 = vector.shape_cast %71 : vector<1x8x4xf32> to vector<8x4xf32>
    %cst_71 = arith.constant dense<0.000000e+00> : vector<8x4xf32>
    %73 = tpu.matmul %62, %72, %cst_71 {dimension_numbers = #tpu.dot_dimension_numbers<[1], [0], [0], [1], [0, 0, 1, 1], [], []>} : vector<8x8xf32>, vector<8x4xf32>, vector<8x4xf32> -> vector<8x4xf32>
    %cst_72 = arith.constant dense<0.000000e+00> : vector<4x4xf32>
    %74 = tpu.matmul %70, %73, %cst_72 {dimension_numbers = #tpu.dot_dimension_numbers<[1], [0], [0], [1], [0, 0, 1, 1], [], []>} : vector<4x8xf32>, vector<8x4xf32>, vector<4x4xf32> -> vector<4x4xf32>
    %75 = arith.addf %68, %74 : vector<4x4xf32>
    %c9 = arith.constant 9 : index
    %c0_73 = arith.constant 0 : index
    %c0_74 = arith.constant 0 : index
    %76 = vector.load %arg3[%c9, %c0_73, %c0_74] : memref<33x16x16xf32, #tpu.memory_space<vmem>>, vector<1x4x8xf32>
    %77 = vector.shape_cast %76 : vector<1x4x8xf32> to vector<4x8xf32>
    %c2_75 = arith.constant 2 : index
    %c0_76 = arith.constant 0 : index
    %c0_77 = arith.constant 0 : index
    %78 = vector.load %arg5[%c2_75, %c0_76, %c0_77] : memref<26x8x16xf32, #tpu.memory_space<vmem>>, vector<1x8x4xf32>
    %79 = vector.shape_cast %78 : vector<1x8x4xf32> to vector<8x4xf32>
    %cst_78 = arith.constant dense<0.000000e+00> : vector<8x4xf32>
    %80 = tpu.matmul %62, %79, %cst_78 {dimension_numbers = #tpu.dot_dimension_numbers<[1], [0], [0], [1], [0, 0, 1, 1], [], []>} : vector<8x8xf32>, vector<8x4xf32>, vector<8x4xf32> -> vector<8x4xf32>
    %cst_79 = arith.constant dense<0.000000e+00> : vector<4x4xf32>
    %81 = tpu.matmul %77, %80, %cst_79 {dimension_numbers = #tpu.dot_dimension_numbers<[1], [0], [0], [1], [0, 0, 1, 1], [], []>} : vector<4x8xf32>, vector<8x4xf32>, vector<4x4xf32> -> vector<4x4xf32>
    %82 = arith.addf %75, %81 : vector<4x4xf32>
    %c10 = arith.constant 10 : index
    %c0_80 = arith.constant 0 : index
    %c0_81 = arith.constant 0 : index
    %83 = vector.load %arg3[%c10, %c0_80, %c0_81] : memref<33x16x16xf32, #tpu.memory_space<vmem>>, vector<1x4x8xf32>
    %84 = vector.shape_cast %83 : vector<1x4x8xf32> to vector<4x8xf32>
    %c3_82 = arith.constant 3 : index
    %c0_83 = arith.constant 0 : index
    %c0_84 = arith.constant 0 : index
    %85 = vector.load %arg5[%c3_82, %c0_83, %c0_84] : memref<26x8x16xf32, #tpu.memory_space<vmem>>, vector<1x8x4xf32>
    %86 = vector.shape_cast %85 : vector<1x8x4xf32> to vector<8x4xf32>
    %cst_85 = arith.constant dense<0.000000e+00> : vector<8x4xf32>
    %87 = tpu.matmul %62, %86, %cst_85 {dimension_numbers = #tpu.dot_dimension_numbers<[1], [0], [0], [1], [0, 0, 1, 1], [], []>} : vector<8x8xf32>, vector<8x4xf32>, vector<8x4xf32> -> vector<8x4xf32>
    %cst_86 = arith.constant dense<0.000000e+00> : vector<4x4xf32>
    %88 = tpu.matmul %84, %87, %cst_86 {dimension_numbers = #tpu.dot_dimension_numbers<[1], [0], [0], [1], [0, 0, 1, 1], [], []>} : vector<4x8xf32>, vector<8x4xf32>, vector<4x4xf32> -> vector<4x4xf32>
    %89 = arith.addf %82, %88 : vector<4x4xf32>
    %c11 = arith.constant 11 : index
    %c0_87 = arith.constant 0 : index
    %c0_88 = arith.constant 0 : index
    %90 = vector.load %arg3[%c11, %c0_87, %c0_88] : memref<33x16x16xf32, #tpu.memory_space<vmem>>, vector<1x4x8xf32>
    %91 = vector.shape_cast %90 : vector<1x4x8xf32> to vector<4x8xf32>
    %c4_89 = arith.constant 4 : index
    %c0_90 = arith.constant 0 : index
    %c0_91 = arith.constant 0 : index
    %92 = vector.load %arg5[%c4_89, %c0_90, %c0_91] : memref<26x8x16xf32, #tpu.memory_space<vmem>>, vector<1x8x4xf32>
    %93 = vector.shape_cast %92 : vector<1x8x4xf32> to vector<8x4xf32>
    %cst_92 = arith.constant dense<0.000000e+00> : vector<8x4xf32>
    %94 = tpu.matmul %62, %93, %cst_92 {dimension_numbers = #tpu.dot_dimension_numbers<[1], [0], [0], [1], [0, 0, 1, 1], [], []>} : vector<8x8xf32>, vector<8x4xf32>, vector<8x4xf32> -> vector<8x4xf32>
    %cst_93 = arith.constant dense<0.000000e+00> : vector<4x4xf32>
    %95 = tpu.matmul %91, %94, %cst_93 {dimension_numbers = #tpu.dot_dimension_numbers<[1], [0], [0], [1], [0, 0, 1, 1], [], []>} : vector<4x8xf32>, vector<8x4xf32>, vector<4x4xf32> -> vector<4x4xf32>
    %96 = arith.addf %89, %95 : vector<4x4xf32>
    %c2_94 = arith.constant 2 : index
    %97 = memref.load %arg2[%c2_94] : memref<9xf32, #tpu.memory_space<smem>>
    %98 = vector.broadcast %97 : f32 to vector<4x4xf32>
    %99 = arith.addf %96, %98 : vector<4x4xf32>
    %cst_95 = arith.constant 0.000000e+00 : f32
    %100 = vector.broadcast %cst_95 : f32 to vector<4x4xf32>
    %101 = arith.maximumf %99, %100 : vector<4x4xf32>
    %c12 = arith.constant 12 : index
    %c0_96 = arith.constant 0 : index
    %c0_97 = arith.constant 0 : index
    %102 = vector.load %arg3[%c12, %c0_96, %c0_97] : memref<33x16x16xf32, #tpu.memory_space<vmem>>, vector<1x2x4xf32>
    %103 = vector.shape_cast %102 : vector<1x2x4xf32> to vector<2x4xf32>
    %c5_98 = arith.constant 5 : index
    %c0_99 = arith.constant 0 : index
    %c0_100 = arith.constant 0 : index
    %104 = vector.load %arg5[%c5_98, %c0_99, %c0_100] : memref<26x8x16xf32, #tpu.memory_space<vmem>>, vector<1x4x2xf32>
    %105 = vector.shape_cast %104 : vector<1x4x2xf32> to vector<4x2xf32>
    %cst_101 = arith.constant dense<0.000000e+00> : vector<4x2xf32>
    %106 = tpu.matmul %101, %105, %cst_101 {dimension_numbers = #tpu.dot_dimension_numbers<[1], [0], [0], [1], [0, 0, 1, 1], [], []>} : vector<4x4xf32>, vector<4x2xf32>, vector<4x2xf32> -> vector<4x2xf32>
    %cst_102 = arith.constant dense<0.000000e+00> : vector<2x2xf32>
    %107 = tpu.matmul %103, %106, %cst_102 {dimension_numbers = #tpu.dot_dimension_numbers<[1], [0], [0], [1], [0, 0, 1, 1], [], []>} : vector<2x4xf32>, vector<4x2xf32>, vector<2x2xf32> -> vector<2x2xf32>
    %c13 = arith.constant 13 : index
    %c0_103 = arith.constant 0 : index
    %c0_104 = arith.constant 0 : index
    %108 = vector.load %arg3[%c13, %c0_103, %c0_104] : memref<33x16x16xf32, #tpu.memory_space<vmem>>, vector<1x2x4xf32>
    %109 = vector.shape_cast %108 : vector<1x2x4xf32> to vector<2x4xf32>
    %c6_105 = arith.constant 6 : index
    %c0_106 = arith.constant 0 : index
    %c0_107 = arith.constant 0 : index
    %110 = vector.load %arg5[%c6_105, %c0_106, %c0_107] : memref<26x8x16xf32, #tpu.memory_space<vmem>>, vector<1x4x2xf32>
    %111 = vector.shape_cast %110 : vector<1x4x2xf32> to vector<4x2xf32>
    %cst_108 = arith.constant dense<0.000000e+00> : vector<4x2xf32>
    %112 = tpu.matmul %101, %111, %cst_108 {dimension_numbers = #tpu.dot_dimension_numbers<[1], [0], [0], [1], [0, 0, 1, 1], [], []>} : vector<4x4xf32>, vector<4x2xf32>, vector<4x2xf32> -> vector<4x2xf32>
    %cst_109 = arith.constant dense<0.000000e+00> : vector<2x2xf32>
    %113 = tpu.matmul %109, %112, %cst_109 {dimension_numbers = #tpu.dot_dimension_numbers<[1], [0], [0], [1], [0, 0, 1, 1], [], []>} : vector<2x4xf32>, vector<4x2xf32>, vector<2x2xf32> -> vector<2x2xf32>
    %114 = arith.addf %107, %113 : vector<2x2xf32>
    %c14 = arith.constant 14 : index
    %c0_110 = arith.constant 0 : index
    %c0_111 = arith.constant 0 : index
    %115 = vector.load %arg3[%c14, %c0_110, %c0_111] : memref<33x16x16xf32, #tpu.memory_space<vmem>>, vector<1x2x4xf32>
    %116 = vector.shape_cast %115 : vector<1x2x4xf32> to vector<2x4xf32>
    %c7_112 = arith.constant 7 : index
    %c0_113 = arith.constant 0 : index
    %c0_114 = arith.constant 0 : index
    %117 = vector.load %arg5[%c7_112, %c0_113, %c0_114] : memref<26x8x16xf32, #tpu.memory_space<vmem>>, vector<1x4x2xf32>
    %118 = vector.shape_cast %117 : vector<1x4x2xf32> to vector<4x2xf32>
    %cst_115 = arith.constant dense<0.000000e+00> : vector<4x2xf32>
    %119 = tpu.matmul %101, %118, %cst_115 {dimension_numbers = #tpu.dot_dimension_numbers<[1], [0], [0], [1], [0, 0, 1, 1], [], []>} : vector<4x4xf32>, vector<4x2xf32>, vector<4x2xf32> -> vector<4x2xf32>
    %cst_116 = arith.constant dense<0.000000e+00> : vector<2x2xf32>
    %120 = tpu.matmul %116, %119, %cst_116 {dimension_numbers = #tpu.dot_dimension_numbers<[1], [0], [0], [1], [0, 0, 1, 1], [], []>} : vector<2x4xf32>, vector<4x2xf32>, vector<2x2xf32> -> vector<2x2xf32>
    %121 = arith.addf %114, %120 : vector<2x2xf32>
    %c3_117 = arith.constant 3 : index
    %122 = memref.load %arg2[%c3_117] : memref<9xf32, #tpu.memory_space<smem>>
    %123 = vector.broadcast %122 : f32 to vector<2x2xf32>
    %124 = arith.addf %121, %123 : vector<2x2xf32>
    %cst_118 = arith.constant 0.000000e+00 : f32
    %125 = vector.broadcast %cst_118 : f32 to vector<2x2xf32>
    %126 = arith.maximumf %124, %125 : vector<2x2xf32>
    %c15 = arith.constant 15 : index
    %c0_119 = arith.constant 0 : index
    %c0_120 = arith.constant 0 : index
    %127 = vector.load %arg3[%c15, %c0_119, %c0_120] : memref<33x16x16xf32, #tpu.memory_space<vmem>>, vector<1x2x2xf32>
    %128 = vector.shape_cast %127 : vector<1x2x2xf32> to vector<2x2xf32>
    %c8_121 = arith.constant 8 : index
    %c0_122 = arith.constant 0 : index
    %c0_123 = arith.constant 0 : index
    %129 = vector.load %arg5[%c8_121, %c0_122, %c0_123] : memref<26x8x16xf32, #tpu.memory_space<vmem>>, vector<1x2x2xf32>
    %130 = vector.shape_cast %129 : vector<1x2x2xf32> to vector<2x2xf32>
    %cst_124 = arith.constant dense<0.000000e+00> : vector<2x2xf32>
    %131 = tpu.matmul %126, %130, %cst_124 {dimension_numbers = #tpu.dot_dimension_numbers<[1], [0], [0], [1], [0, 0, 1, 1], [], []>} : vector<2x2xf32>, vector<2x2xf32>, vector<2x2xf32> -> vector<2x2xf32>
    %cst_125 = arith.constant dense<0.000000e+00> : vector<2x2xf32>
    %132 = tpu.matmul %128, %131, %cst_125 {dimension_numbers = #tpu.dot_dimension_numbers<[1], [0], [0], [1], [0, 0, 1, 1], [], []>} : vector<2x2xf32>, vector<2x2xf32>, vector<2x2xf32> -> vector<2x2xf32>
    %c16 = arith.constant 16 : index
    %c0_126 = arith.constant 0 : index
    %c0_127 = arith.constant 0 : index
    %133 = vector.load %arg3[%c16, %c0_126, %c0_127] : memref<33x16x16xf32, #tpu.memory_space<vmem>>, vector<1x2x2xf32>
    %134 = vector.shape_cast %133 : vector<1x2x2xf32> to vector<2x2xf32>
    %c9_128 = arith.constant 9 : index
    %c0_129 = arith.constant 0 : index
    %c0_130 = arith.constant 0 : index
    %135 = vector.load %arg5[%c9_128, %c0_129, %c0_130] : memref<26x8x16xf32, #tpu.memory_space<vmem>>, vector<1x2x2xf32>
    %136 = vector.shape_cast %135 : vector<1x2x2xf32> to vector<2x2xf32>
    %cst_131 = arith.constant dense<0.000000e+00> : vector<2x2xf32>
    %137 = tpu.matmul %126, %136, %cst_131 {dimension_numbers = #tpu.dot_dimension_numbers<[1], [0], [0], [1], [0, 0, 1, 1], [], []>} : vector<2x2xf32>, vector<2x2xf32>, vector<2x2xf32> -> vector<2x2xf32>
    %cst_132 = arith.constant dense<0.000000e+00> : vector<2x2xf32>
    %138 = tpu.matmul %134, %137, %cst_132 {dimension_numbers = #tpu.dot_dimension_numbers<[1], [0], [0], [1], [0, 0, 1, 1], [], []>} : vector<2x2xf32>, vector<2x2xf32>, vector<2x2xf32> -> vector<2x2xf32>
    %139 = arith.addf %132, %138 : vector<2x2xf32>
    %c17 = arith.constant 17 : index
    %c0_133 = arith.constant 0 : index
    %c0_134 = arith.constant 0 : index
    %140 = vector.load %arg3[%c17, %c0_133, %c0_134] : memref<33x16x16xf32, #tpu.memory_space<vmem>>, vector<1x2x2xf32>
    %141 = vector.shape_cast %140 : vector<1x2x2xf32> to vector<2x2xf32>
    %c10_135 = arith.constant 10 : index
    %c0_136 = arith.constant 0 : index
    %c0_137 = arith.constant 0 : index
    %142 = vector.load %arg5[%c10_135, %c0_136, %c0_137] : memref<26x8x16xf32, #tpu.memory_space<vmem>>, vector<1x2x2xf32>
    %143 = vector.shape_cast %142 : vector<1x2x2xf32> to vector<2x2xf32>
    %cst_138 = arith.constant dense<0.000000e+00> : vector<2x2xf32>
    %144 = tpu.matmul %126, %143, %cst_138 {dimension_numbers = #tpu.dot_dimension_numbers<[1], [0], [0], [1], [0, 0, 1, 1], [], []>} : vector<2x2xf32>, vector<2x2xf32>, vector<2x2xf32> -> vector<2x2xf32>
    %cst_139 = arith.constant dense<0.000000e+00> : vector<2x2xf32>
    %145 = tpu.matmul %141, %144, %cst_139 {dimension_numbers = #tpu.dot_dimension_numbers<[1], [0], [0], [1], [0, 0, 1, 1], [], []>} : vector<2x2xf32>, vector<2x2xf32>, vector<2x2xf32> -> vector<2x2xf32>
    %146 = arith.addf %139, %145 : vector<2x2xf32>
    %c4_140 = arith.constant 4 : index
    %147 = memref.load %arg2[%c4_140] : memref<9xf32, #tpu.memory_space<smem>>
    %148 = vector.broadcast %147 : f32 to vector<2x2xf32>
    %149 = arith.addf %146, %148 : vector<2x2xf32>
    %cst_141 = arith.constant 0.000000e+00 : f32
    %150 = vector.broadcast %cst_141 : f32 to vector<2x2xf32>
    %151 = arith.maximumf %149, %150 : vector<2x2xf32>
    %c18 = arith.constant 18 : index
    %c0_142 = arith.constant 0 : index
    %c0_143 = arith.constant 0 : index
    %152 = vector.load %arg3[%c18, %c0_142, %c0_143] : memref<33x16x16xf32, #tpu.memory_space<vmem>>, vector<1x4x4xf32>
    %153 = vector.shape_cast %152 : vector<1x4x4xf32> to vector<4x4xf32>
    %c11_144 = arith.constant 11 : index
    %c0_145 = arith.constant 0 : index
    %c0_146 = arith.constant 0 : index
    %154 = vector.load %arg5[%c11_144, %c0_145, %c0_146] : memref<26x8x16xf32, #tpu.memory_space<vmem>>, vector<1x4x4xf32>
    %155 = vector.shape_cast %154 : vector<1x4x4xf32> to vector<4x4xf32>
    %cst_147 = arith.constant dense<0.000000e+00> : vector<4x4xf32>
    %156 = tpu.matmul %101, %155, %cst_147 {dimension_numbers = #tpu.dot_dimension_numbers<[1], [0], [0], [1], [0, 0, 1, 1], [], []>} : vector<4x4xf32>, vector<4x4xf32>, vector<4x4xf32> -> vector<4x4xf32>
    %cst_148 = arith.constant dense<0.000000e+00> : vector<4x4xf32>
    %157 = tpu.matmul %153, %156, %cst_148 {dimension_numbers = #tpu.dot_dimension_numbers<[1], [0], [0], [1], [0, 0, 1, 1], [], []>} : vector<4x4xf32>, vector<4x4xf32>, vector<4x4xf32> -> vector<4x4xf32>
    %c19 = arith.constant 19 : index
    %c0_149 = arith.constant 0 : index
    %c0_150 = arith.constant 0 : index
    %158 = vector.load %arg3[%c19, %c0_149, %c0_150] : memref<33x16x16xf32, #tpu.memory_space<vmem>>, vector<1x4x4xf32>
    %159 = vector.shape_cast %158 : vector<1x4x4xf32> to vector<4x4xf32>
    %c12_151 = arith.constant 12 : index
    %c0_152 = arith.constant 0 : index
    %c0_153 = arith.constant 0 : index
    %160 = vector.load %arg5[%c12_151, %c0_152, %c0_153] : memref<26x8x16xf32, #tpu.memory_space<vmem>>, vector<1x4x4xf32>
    %161 = vector.shape_cast %160 : vector<1x4x4xf32> to vector<4x4xf32>
    %cst_154 = arith.constant dense<0.000000e+00> : vector<4x4xf32>
    %162 = tpu.matmul %101, %161, %cst_154 {dimension_numbers = #tpu.dot_dimension_numbers<[1], [0], [0], [1], [0, 0, 1, 1], [], []>} : vector<4x4xf32>, vector<4x4xf32>, vector<4x4xf32> -> vector<4x4xf32>
    %cst_155 = arith.constant dense<0.000000e+00> : vector<4x4xf32>
    %163 = tpu.matmul %159, %162, %cst_155 {dimension_numbers = #tpu.dot_dimension_numbers<[1], [0], [0], [1], [0, 0, 1, 1], [], []>} : vector<4x4xf32>, vector<4x4xf32>, vector<4x4xf32> -> vector<4x4xf32>
    %164 = arith.addf %157, %163 : vector<4x4xf32>
    %c20 = arith.constant 20 : index
    %c0_156 = arith.constant 0 : index
    %c0_157 = arith.constant 0 : index
    %165 = vector.load %arg3[%c20, %c0_156, %c0_157] : memref<33x16x16xf32, #tpu.memory_space<vmem>>, vector<1x4x4xf32>
    %166 = vector.shape_cast %165 : vector<1x4x4xf32> to vector<4x4xf32>
    %c13_158 = arith.constant 13 : index
    %c0_159 = arith.constant 0 : index
    %c0_160 = arith.constant 0 : index
    %167 = vector.load %arg5[%c13_158, %c0_159, %c0_160] : memref<26x8x16xf32, #tpu.memory_space<vmem>>, vector<1x4x4xf32>
    %168 = vector.shape_cast %167 : vector<1x4x4xf32> to vector<4x4xf32>
    %cst_161 = arith.constant dense<0.000000e+00> : vector<4x4xf32>
    %169 = tpu.matmul %101, %168, %cst_161 {dimension_numbers = #tpu.dot_dimension_numbers<[1], [0], [0], [1], [0, 0, 1, 1], [], []>} : vector<4x4xf32>, vector<4x4xf32>, vector<4x4xf32> -> vector<4x4xf32>
    %cst_162 = arith.constant dense<0.000000e+00> : vector<4x4xf32>
    %170 = tpu.matmul %166, %169, %cst_162 {dimension_numbers = #tpu.dot_dimension_numbers<[1], [0], [0], [1], [0, 0, 1, 1], [], []>} : vector<4x4xf32>, vector<4x4xf32>, vector<4x4xf32> -> vector<4x4xf32>
    %171 = arith.addf %164, %170 : vector<4x4xf32>
    %c21 = arith.constant 21 : index
    %c0_163 = arith.constant 0 : index
    %c0_164 = arith.constant 0 : index
    %172 = vector.load %arg3[%c21, %c0_163, %c0_164] : memref<33x16x16xf32, #tpu.memory_space<vmem>>, vector<1x4x4xf32>
    %173 = vector.shape_cast %172 : vector<1x4x4xf32> to vector<4x4xf32>
    %c14_165 = arith.constant 14 : index
    %c0_166 = arith.constant 0 : index
    %c0_167 = arith.constant 0 : index
    %174 = vector.load %arg5[%c14_165, %c0_166, %c0_167] : memref<26x8x16xf32, #tpu.memory_space<vmem>>, vector<1x4x4xf32>
    %175 = vector.shape_cast %174 : vector<1x4x4xf32> to vector<4x4xf32>
    %cst_168 = arith.constant dense<0.000000e+00> : vector<4x4xf32>
    %176 = tpu.matmul %101, %175, %cst_168 {dimension_numbers = #tpu.dot_dimension_numbers<[1], [0], [0], [1], [0, 0, 1, 1], [], []>} : vector<4x4xf32>, vector<4x4xf32>, vector<4x4xf32> -> vector<4x4xf32>
    %cst_169 = arith.constant dense<0.000000e+00> : vector<4x4xf32>
    %177 = tpu.matmul %173, %176, %cst_169 {dimension_numbers = #tpu.dot_dimension_numbers<[1], [0], [0], [1], [0, 0, 1, 1], [], []>} : vector<4x4xf32>, vector<4x4xf32>, vector<4x4xf32> -> vector<4x4xf32>
    %178 = arith.addf %171, %177 : vector<4x4xf32>
    %c22 = arith.constant 22 : index
    %c0_170 = arith.constant 0 : index
    %c0_171 = arith.constant 0 : index
    %179 = vector.load %arg3[%c22, %c0_170, %c0_171] : memref<33x16x16xf32, #tpu.memory_space<vmem>>, vector<1x4x4xf32>
    %180 = vector.shape_cast %179 : vector<1x4x4xf32> to vector<4x4xf32>
    %c15_172 = arith.constant 15 : index
    %c0_173 = arith.constant 0 : index
    %c0_174 = arith.constant 0 : index
    %181 = vector.load %arg5[%c15_172, %c0_173, %c0_174] : memref<26x8x16xf32, #tpu.memory_space<vmem>>, vector<1x4x4xf32>
    %182 = vector.shape_cast %181 : vector<1x4x4xf32> to vector<4x4xf32>
    %cst_175 = arith.constant dense<0.000000e+00> : vector<4x4xf32>
    %183 = tpu.matmul %101, %182, %cst_175 {dimension_numbers = #tpu.dot_dimension_numbers<[1], [0], [0], [1], [0, 0, 1, 1], [], []>} : vector<4x4xf32>, vector<4x4xf32>, vector<4x4xf32> -> vector<4x4xf32>
    %cst_176 = arith.constant dense<0.000000e+00> : vector<4x4xf32>
    %184 = tpu.matmul %180, %183, %cst_176 {dimension_numbers = #tpu.dot_dimension_numbers<[1], [0], [0], [1], [0, 0, 1, 1], [], []>} : vector<4x4xf32>, vector<4x4xf32>, vector<4x4xf32> -> vector<4x4xf32>
    %185 = arith.addf %178, %184 : vector<4x4xf32>
    %c5_177 = arith.constant 5 : index
    %186 = memref.load %arg2[%c5_177] : memref<9xf32, #tpu.memory_space<smem>>
    %187 = vector.broadcast %186 : f32 to vector<4x4xf32>
    %188 = arith.addf %185, %187 : vector<4x4xf32>
    %cst_178 = arith.constant 0.000000e+00 : f32
    %189 = vector.broadcast %cst_178 : f32 to vector<4x4xf32>
    %190 = arith.maximumf %188, %189 : vector<4x4xf32>
    %c30 = arith.constant 30 : index
    %c0_179 = arith.constant 0 : index
    %c0_180 = arith.constant 0 : index
    %191 = vector.load %arg3[%c30, %c0_179, %c0_180] : memref<33x16x16xf32, #tpu.memory_space<vmem>>, vector<1x4x2xf32>
    %192 = vector.shape_cast %191 : vector<1x4x2xf32> to vector<4x2xf32>
    %c23 = arith.constant 23 : index
    %c0_181 = arith.constant 0 : index
    %c0_182 = arith.constant 0 : index
    %193 = vector.load %arg5[%c23, %c0_181, %c0_182] : memref<26x8x16xf32, #tpu.memory_space<vmem>>, vector<1x2x4xf32>
    %194 = vector.shape_cast %193 : vector<1x2x4xf32> to vector<2x4xf32>
    %cst_183 = arith.constant dense<0.000000e+00> : vector<2x4xf32>
    %195 = tpu.matmul %151, %194, %cst_183 {dimension_numbers = #tpu.dot_dimension_numbers<[1], [0], [0], [1], [0, 0, 1, 1], [], []>} : vector<2x2xf32>, vector<2x4xf32>, vector<2x4xf32> -> vector<2x4xf32>
    %cst_184 = arith.constant dense<0.000000e+00> : vector<4x4xf32>
    %196 = tpu.matmul %192, %195, %cst_184 {dimension_numbers = #tpu.dot_dimension_numbers<[1], [0], [0], [1], [0, 0, 1, 1], [], []>} : vector<4x2xf32>, vector<2x4xf32>, vector<4x4xf32> -> vector<4x4xf32>
    %197 = arith.addf %190, %196 : vector<4x4xf32>
    %c23_185 = arith.constant 23 : index
    %c0_186 = arith.constant 0 : index
    %c0_187 = arith.constant 0 : index
    %198 = vector.load %arg3[%c23_185, %c0_186, %c0_187] : memref<33x16x16xf32, #tpu.memory_space<vmem>>, vector<1x8x8xf32>
    %199 = vector.shape_cast %198 : vector<1x8x8xf32> to vector<8x8xf32>
    %c16_188 = arith.constant 16 : index
    %c0_189 = arith.constant 0 : index
    %c0_190 = arith.constant 0 : index
    %200 = vector.load %arg5[%c16_188, %c0_189, %c0_190] : memref<26x8x16xf32, #tpu.memory_space<vmem>>, vector<1x8x8xf32>
    %201 = vector.shape_cast %200 : vector<1x8x8xf32> to vector<8x8xf32>
    %cst_191 = arith.constant dense<0.000000e+00> : vector<8x8xf32>
    %202 = tpu.matmul %62, %201, %cst_191 {dimension_numbers = #tpu.dot_dimension_numbers<[1], [0], [0], [1], [0, 0, 1, 1], [], []>} : vector<8x8xf32>, vector<8x8xf32>, vector<8x8xf32> -> vector<8x8xf32>
    %cst_192 = arith.constant dense<0.000000e+00> : vector<8x8xf32>
    %203 = tpu.matmul %199, %202, %cst_192 {dimension_numbers = #tpu.dot_dimension_numbers<[1], [0], [0], [1], [0, 0, 1, 1], [], []>} : vector<8x8xf32>, vector<8x8xf32>, vector<8x8xf32> -> vector<8x8xf32>
    %c24 = arith.constant 24 : index
    %c0_193 = arith.constant 0 : index
    %c0_194 = arith.constant 0 : index
    %204 = vector.load %arg3[%c24, %c0_193, %c0_194] : memref<33x16x16xf32, #tpu.memory_space<vmem>>, vector<1x8x8xf32>
    %205 = vector.shape_cast %204 : vector<1x8x8xf32> to vector<8x8xf32>
    %c17_195 = arith.constant 17 : index
    %c0_196 = arith.constant 0 : index
    %c0_197 = arith.constant 0 : index
    %206 = vector.load %arg5[%c17_195, %c0_196, %c0_197] : memref<26x8x16xf32, #tpu.memory_space<vmem>>, vector<1x8x8xf32>
    %207 = vector.shape_cast %206 : vector<1x8x8xf32> to vector<8x8xf32>
    %cst_198 = arith.constant dense<0.000000e+00> : vector<8x8xf32>
    %208 = tpu.matmul %62, %207, %cst_198 {dimension_numbers = #tpu.dot_dimension_numbers<[1], [0], [0], [1], [0, 0, 1, 1], [], []>} : vector<8x8xf32>, vector<8x8xf32>, vector<8x8xf32> -> vector<8x8xf32>
    %cst_199 = arith.constant dense<0.000000e+00> : vector<8x8xf32>
    %209 = tpu.matmul %205, %208, %cst_199 {dimension_numbers = #tpu.dot_dimension_numbers<[1], [0], [0], [1], [0, 0, 1, 1], [], []>} : vector<8x8xf32>, vector<8x8xf32>, vector<8x8xf32> -> vector<8x8xf32>
    %210 = arith.addf %203, %209 : vector<8x8xf32>
    %c25 = arith.constant 25 : index
    %c0_200 = arith.constant 0 : index
    %c0_201 = arith.constant 0 : index
    %211 = vector.load %arg3[%c25, %c0_200, %c0_201] : memref<33x16x16xf32, #tpu.memory_space<vmem>>, vector<1x8x8xf32>
    %212 = vector.shape_cast %211 : vector<1x8x8xf32> to vector<8x8xf32>
    %c18_202 = arith.constant 18 : index
    %c0_203 = arith.constant 0 : index
    %c0_204 = arith.constant 0 : index
    %213 = vector.load %arg5[%c18_202, %c0_203, %c0_204] : memref<26x8x16xf32, #tpu.memory_space<vmem>>, vector<1x8x8xf32>
    %214 = vector.shape_cast %213 : vector<1x8x8xf32> to vector<8x8xf32>
    %cst_205 = arith.constant dense<0.000000e+00> : vector<8x8xf32>
    %215 = tpu.matmul %62, %214, %cst_205 {dimension_numbers = #tpu.dot_dimension_numbers<[1], [0], [0], [1], [0, 0, 1, 1], [], []>} : vector<8x8xf32>, vector<8x8xf32>, vector<8x8xf32> -> vector<8x8xf32>
    %cst_206 = arith.constant dense<0.000000e+00> : vector<8x8xf32>
    %216 = tpu.matmul %212, %215, %cst_206 {dimension_numbers = #tpu.dot_dimension_numbers<[1], [0], [0], [1], [0, 0, 1, 1], [], []>} : vector<8x8xf32>, vector<8x8xf32>, vector<8x8xf32> -> vector<8x8xf32>
    %217 = arith.addf %210, %216 : vector<8x8xf32>
    %c26 = arith.constant 26 : index
    %c0_207 = arith.constant 0 : index
    %c0_208 = arith.constant 0 : index
    %218 = vector.load %arg3[%c26, %c0_207, %c0_208] : memref<33x16x16xf32, #tpu.memory_space<vmem>>, vector<1x8x8xf32>
    %219 = vector.shape_cast %218 : vector<1x8x8xf32> to vector<8x8xf32>
    %c19_209 = arith.constant 19 : index
    %c0_210 = arith.constant 0 : index
    %c0_211 = arith.constant 0 : index
    %220 = vector.load %arg5[%c19_209, %c0_210, %c0_211] : memref<26x8x16xf32, #tpu.memory_space<vmem>>, vector<1x8x8xf32>
    %221 = vector.shape_cast %220 : vector<1x8x8xf32> to vector<8x8xf32>
    %cst_212 = arith.constant dense<0.000000e+00> : vector<8x8xf32>
    %222 = tpu.matmul %62, %221, %cst_212 {dimension_numbers = #tpu.dot_dimension_numbers<[1], [0], [0], [1], [0, 0, 1, 1], [], []>} : vector<8x8xf32>, vector<8x8xf32>, vector<8x8xf32> -> vector<8x8xf32>
    %cst_213 = arith.constant dense<0.000000e+00> : vector<8x8xf32>
    %223 = tpu.matmul %219, %222, %cst_213 {dimension_numbers = #tpu.dot_dimension_numbers<[1], [0], [0], [1], [0, 0, 1, 1], [], []>} : vector<8x8xf32>, vector<8x8xf32>, vector<8x8xf32> -> vector<8x8xf32>
    %224 = arith.addf %217, %223 : vector<8x8xf32>
    %c27 = arith.constant 27 : index
    %c0_214 = arith.constant 0 : index
    %c0_215 = arith.constant 0 : index
    %225 = vector.load %arg3[%c27, %c0_214, %c0_215] : memref<33x16x16xf32, #tpu.memory_space<vmem>>, vector<1x8x8xf32>
    %226 = vector.shape_cast %225 : vector<1x8x8xf32> to vector<8x8xf32>
    %c20_216 = arith.constant 20 : index
    %c0_217 = arith.constant 0 : index
    %c0_218 = arith.constant 0 : index
    %227 = vector.load %arg5[%c20_216, %c0_217, %c0_218] : memref<26x8x16xf32, #tpu.memory_space<vmem>>, vector<1x8x8xf32>
    %228 = vector.shape_cast %227 : vector<1x8x8xf32> to vector<8x8xf32>
    %cst_219 = arith.constant dense<0.000000e+00> : vector<8x8xf32>
    %229 = tpu.matmul %62, %228, %cst_219 {dimension_numbers = #tpu.dot_dimension_numbers<[1], [0], [0], [1], [0, 0, 1, 1], [], []>} : vector<8x8xf32>, vector<8x8xf32>, vector<8x8xf32> -> vector<8x8xf32>
    %cst_220 = arith.constant dense<0.000000e+00> : vector<8x8xf32>
    %230 = tpu.matmul %226, %229, %cst_220 {dimension_numbers = #tpu.dot_dimension_numbers<[1], [0], [0], [1], [0, 0, 1, 1], [], []>} : vector<8x8xf32>, vector<8x8xf32>, vector<8x8xf32> -> vector<8x8xf32>
    %231 = arith.addf %224, %230 : vector<8x8xf32>
    %c28 = arith.constant 28 : index
    %c0_221 = arith.constant 0 : index
    %c0_222 = arith.constant 0 : index
    %232 = vector.load %arg3[%c28, %c0_221, %c0_222] : memref<33x16x16xf32, #tpu.memory_space<vmem>>, vector<1x8x8xf32>
    %233 = vector.shape_cast %232 : vector<1x8x8xf32> to vector<8x8xf32>
    %c21_223 = arith.constant 21 : index
    %c0_224 = arith.constant 0 : index
    %c0_225 = arith.constant 0 : index
    %234 = vector.load %arg5[%c21_223, %c0_224, %c0_225] : memref<26x8x16xf32, #tpu.memory_space<vmem>>, vector<1x8x8xf32>
    %235 = vector.shape_cast %234 : vector<1x8x8xf32> to vector<8x8xf32>
    %cst_226 = arith.constant dense<0.000000e+00> : vector<8x8xf32>
    %236 = tpu.matmul %62, %235, %cst_226 {dimension_numbers = #tpu.dot_dimension_numbers<[1], [0], [0], [1], [0, 0, 1, 1], [], []>} : vector<8x8xf32>, vector<8x8xf32>, vector<8x8xf32> -> vector<8x8xf32>
    %cst_227 = arith.constant dense<0.000000e+00> : vector<8x8xf32>
    %237 = tpu.matmul %233, %236, %cst_227 {dimension_numbers = #tpu.dot_dimension_numbers<[1], [0], [0], [1], [0, 0, 1, 1], [], []>} : vector<8x8xf32>, vector<8x8xf32>, vector<8x8xf32> -> vector<8x8xf32>
    %238 = arith.addf %231, %237 : vector<8x8xf32>
    %c29 = arith.constant 29 : index
    %c0_228 = arith.constant 0 : index
    %c0_229 = arith.constant 0 : index
    %239 = vector.load %arg3[%c29, %c0_228, %c0_229] : memref<33x16x16xf32, #tpu.memory_space<vmem>>, vector<1x8x8xf32>
    %240 = vector.shape_cast %239 : vector<1x8x8xf32> to vector<8x8xf32>
    %c22_230 = arith.constant 22 : index
    %c0_231 = arith.constant 0 : index
    %c0_232 = arith.constant 0 : index
    %241 = vector.load %arg5[%c22_230, %c0_231, %c0_232] : memref<26x8x16xf32, #tpu.memory_space<vmem>>, vector<1x8x8xf32>
    %242 = vector.shape_cast %241 : vector<1x8x8xf32> to vector<8x8xf32>
    %cst_233 = arith.constant dense<0.000000e+00> : vector<8x8xf32>
    %243 = tpu.matmul %62, %242, %cst_233 {dimension_numbers = #tpu.dot_dimension_numbers<[1], [0], [0], [1], [0, 0, 1, 1], [], []>} : vector<8x8xf32>, vector<8x8xf32>, vector<8x8xf32> -> vector<8x8xf32>
    %cst_234 = arith.constant dense<0.000000e+00> : vector<8x8xf32>
    %244 = tpu.matmul %240, %243, %cst_234 {dimension_numbers = #tpu.dot_dimension_numbers<[1], [0], [0], [1], [0, 0, 1, 1], [], []>} : vector<8x8xf32>, vector<8x8xf32>, vector<8x8xf32> -> vector<8x8xf32>
    %245 = arith.addf %238, %244 : vector<8x8xf32>
    %c6_235 = arith.constant 6 : index
    %246 = memref.load %arg2[%c6_235] : memref<9xf32, #tpu.memory_space<smem>>
    %247 = vector.broadcast %246 : f32 to vector<8x8xf32>
    %248 = arith.addf %245, %247 : vector<8x8xf32>
    %cst_236 = arith.constant 0.000000e+00 : f32
    %249 = vector.broadcast %cst_236 : f32 to vector<8x8xf32>
    %250 = arith.maximumf %248, %249 : vector<8x8xf32>
    %c31 = arith.constant 31 : index
    %c0_237 = arith.constant 0 : index
    %c0_238 = arith.constant 0 : index
    %251 = vector.load %arg3[%c31, %c0_237, %c0_238] : memref<33x16x16xf32, #tpu.memory_space<vmem>>, vector<1x8x4xf32>
    %252 = vector.shape_cast %251 : vector<1x8x4xf32> to vector<8x4xf32>
    %c24_239 = arith.constant 24 : index
    %c0_240 = arith.constant 0 : index
    %c0_241 = arith.constant 0 : index
    %253 = vector.load %arg5[%c24_239, %c0_240, %c0_241] : memref<26x8x16xf32, #tpu.memory_space<vmem>>, vector<1x4x8xf32>
    %254 = vector.shape_cast %253 : vector<1x4x8xf32> to vector<4x8xf32>
    %cst_242 = arith.constant dense<0.000000e+00> : vector<4x8xf32>
    %255 = tpu.matmul %197, %254, %cst_242 {dimension_numbers = #tpu.dot_dimension_numbers<[1], [0], [0], [1], [0, 0, 1, 1], [], []>} : vector<4x4xf32>, vector<4x8xf32>, vector<4x8xf32> -> vector<4x8xf32>
    %cst_243 = arith.constant dense<0.000000e+00> : vector<8x8xf32>
    %256 = tpu.matmul %252, %255, %cst_243 {dimension_numbers = #tpu.dot_dimension_numbers<[1], [0], [0], [1], [0, 0, 1, 1], [], []>} : vector<8x4xf32>, vector<4x8xf32>, vector<8x8xf32> -> vector<8x8xf32>
    %257 = arith.addf %250, %256 : vector<8x8xf32>
    %c32 = arith.constant 32 : index
    %c0_244 = arith.constant 0 : index
    %c0_245 = arith.constant 0 : index
    %258 = vector.load %arg3[%c32, %c0_244, %c0_245] : memref<33x16x16xf32, #tpu.memory_space<vmem>>, vector<1x16x8xf32>
    %259 = vector.shape_cast %258 : vector<1x16x8xf32> to vector<16x8xf32>
    %c25_246 = arith.constant 25 : index
    %c0_247 = arith.constant 0 : index
    %c0_248 = arith.constant 0 : index
    %260 = vector.load %arg5[%c25_246, %c0_247, %c0_248] : memref<26x8x16xf32, #tpu.memory_space<vmem>>, vector<1x8x16xf32>
    %261 = vector.shape_cast %260 : vector<1x8x16xf32> to vector<8x16xf32>
    %cst_249 = arith.constant dense<0.000000e+00> : vector<8x16xf32>
    %262 = tpu.matmul %257, %261, %cst_249 {dimension_numbers = #tpu.dot_dimension_numbers<[1], [0], [0], [1], [0, 0, 1, 1], [], []>} : vector<8x8xf32>, vector<8x16xf32>, vector<8x16xf32> -> vector<8x16xf32>
    %cst_250 = arith.constant dense<0.000000e+00> : vector<16x16xf32>
    %263 = tpu.matmul %259, %262, %cst_250 {dimension_numbers = #tpu.dot_dimension_numbers<[1], [0], [0], [1], [0, 0, 1, 1], [], []>} : vector<16x8xf32>, vector<8x16xf32>, vector<16x16xf32> -> vector<16x16xf32>
    %264 = arith.addf %263, %9 : vector<16x16xf32>
    %c7_251 = arith.constant 7 : index
    %265 = memref.load %arg2[%c7_251] : memref<9xf32, #tpu.memory_space<smem>>
    %266 = vector.broadcast %265 : f32 to vector<16x16xf32>
    %267 = arith.mulf %264, %266 : vector<16x16xf32>
    %c8_252 = arith.constant 8 : index
    %268 = memref.load %arg2[%c8_252] : memref<9xf32, #tpu.memory_space<smem>>
    %269 = vector.broadcast %268 : f32 to vector<16x16xf32>
    %270 = arith.addf %267, %269 : vector<16x16xf32>
    %c0_253 = arith.constant 0 : index
    %c0_254 = arith.constant 0 : index
    %c0_255 = arith.constant 0 : index
    %271 = vector.load %arg6[%c0_253, %c0_254, %c0_255] : memref<1x16x16xf32, #tpu.memory_space<vmem>>, vector<1x16x16xf32>
    %272 = vector.shape_cast %271 : vector<1x16x16xf32> to vector<16x16xf32>
    %273 = vector.shape_cast %270 : vector<16x16xf32> to vector<1x16x16xf32>
    tpu.vector_store %arg6[%c0_253, %c0_254, %c0_255], %273 {strides = array<i32>} : memref<1x16x16xf32, #tpu.memory_space<vmem>>, vector<1x16x16xf32>,
    return
  }
  func.func @transform_0(%arg0: i32) -> (i32, i32, i32) {
    %c0_i32 = arith.constant 0 : i32
    %c0_i32_0 = arith.constant 0 : i32
    %c0_i32_1 = arith.constant 0 : i32
    return %arg0, %c0_i32, %c0_i32_0 : i32, i32, i32
  }
  func.func @transform_1(%arg0: i32) -> i32 {
    %c0_i32 = arith.constant 0 : i32
    %c0_i32_0 = arith.constant 0 : i32
    return %c0_i32 : i32
  }
  func.func @transform_2(%arg0: i32) -> (i32, i32, i32) {
    %c0_i32 = arith.constant 0 : i32
    %c0_i32_0 = arith.constant 0 : i32
    %c0_i32_1 = arith.constant 0 : i32
    %c0_i32_2 = arith.constant 0 : i32
    return %c0_i32, %c0_i32_0, %c0_i32_1 : i32, i32, i32
  }
  func.func @transform_3(%arg0: i32) -> (i32, i32, i32) {
    %c0_i32 = arith.constant 0 : i32
    %c0_i32_0 = arith.constant 0 : i32
    %c0_i32_1 = arith.constant 0 : i32
    %c0_i32_2 = arith.constant 0 : i32
    return %c0_i32, %c0_i32_0, %c0_i32_1 : i32, i32, i32
  }
  func.func @transform_4(%arg0: i32) -> (i32, i32, i32) {
    %c0_i32 = arith.constant 0 : i32
    %c0_i32_0 = arith.constant 0 : i32
    %c0_i32_1 = arith.constant 0 : i32
    %c0_i32_2 = arith.constant 0 : i32
    return %c0_i32, %c0_i32_0, %c0_i32_1 : i32, i32, i32
  }
  func.func @transform_5(%arg0: i32) -> (i32, i32, i32) {
    %c0_i32 = arith.constant 0 : i32
    %c0_i32_0 = arith.constant 0 : i32
    %c0_i32_1 = arith.constant 0 : i32
    return %arg0, %c0_i32, %c0_i32_0 : i32, i32, i32
  }
}

</mosaic_0001>

<llo_original>
// kernel: squeeze.45
$region0: #{squeeze.45}
  %s0 = inlined_call_operand.vmem [shape: f32[1,4,16,8], index: 0, kind: input, shape index: {}]
  %s1 = inlined_call_operand.vmem [shape: f32[64,8], index: 1, kind: output, shape index: {}]
  $region1: #{squeeze.45} parent=0
    #allocation0 [shape = 'u8[32768]{0}', space=vmem, size = 0x8000, scoped, tag = 'scoped mem for input reshape']
    %s3 = sshllo.u32 0, 4
    %s4 = smul.addr 4, 7
    %s5 = scalar_lea.vmem %s0, %s4
    %v6 = vld [vmem:[%s5] sm:%s3]
    %s7 = scalar_lea.vmem [#allocation0], 56
    %8 = vst [vmem:[%s7] sm:%s3] %v6
    %s9 = smul.addr 4, 6
    %s10 = scalar_lea.vmem %s0, %s9
    %v11 = vld [vmem:[%s10] sm:%s3]
    %s12 = scalar_lea.vmem [#allocation0], 48
    %13 = vst [vmem:[%s12] sm:%s3] %v11
    %s14 = smul.addr 4, 5
    %s15 = scalar_lea.vmem %s0, %s14
    %v16 = vld [vmem:[%s15] sm:%s3]
    %s17 = scalar_lea.vmem [#allocation0], 40
    %18 = vst [vmem:[%s17] sm:%s3] %v16
    %s19 = smul.addr 4, 4
    %s20 = scalar_lea.vmem %s0, %s19
    %v21 = vld [vmem:[%s20] sm:%s3]
    %s22 = scalar_lea.vmem [#allocation0], 32
    %23 = vst [vmem:[%s22] sm:%s3] %v21
    %s24 = smul.addr 4, 3
    %s25 = scalar_lea.vmem %s0, %s24
    %v26 = vld [vmem:[%s25] sm:%s3]
    %s27 = scalar_lea.vmem [#allocation0], 24
    %28 = vst [vmem:[%s27] sm:%s3] %v26
    %s29 = smul.addr 4, 2
    %s30 = scalar_lea.vmem %s0, %s29
    %v31 = vld [vmem:[%s30] sm:%s3]
    %s32 = scalar_lea.vmem [#allocation0], 16
    %33 = vst [vmem:[%s32] sm:%s3] %v31
    %s34 = scalar_lea.vmem %s0, 4
    %v35 = vld [vmem:[%s34] sm:%s3]
    %s36 = scalar_lea.vmem [#allocation0], 8
    %37 = vst [vmem:[%s36] sm:%s3] %v35
    %v38 = vld [vmem:[%s0] sm:%s3]
    %39 = vst [vmem:[#allocation0] sm:%s3] %v38
    %v40 = vld [vmem:[#allocation0] ss:$8 sm:$0xf]
    %v41 = vld [vmem:[#allocation0] ss:$8 sm:$0xf0]
    %vm42 = vcmask 1047556
    %v43 = vsel %vm42, %v41, %v40
    %vm44 = vcmask 130048
    %45 = vst.msk [vmem:[%s1] sm:$0xff] %vm44, %v43
    %s46 = scalar_lea.vmem [#allocation0], 3
    %v47 = vld [vmem:[%s46] ss:$8 sm:$0xf]
    %s48 = scalar_lea.vmem [#allocation0], 3
    %v49 = vld [vmem:[%s48] ss:$8 sm:$0xf0]
    %vm50 = vcmask 1047556
    %v51 = vsel %vm50, %v49, %v47
    %52 = vrot.lane.b32.xlu0 %v51, 48
    %v53 = vpop.permute.xlu0 %52
    %vm54 = vcmask 523648
    %55 = vst.msk [vmem:[%s1] sm:$0xff] %vm54, %v53
    %s56 = scalar_lea.vmem [#allocation0], 2
    %v57 = vld [vmem:[%s56] ss:$8 sm:$0xf]
    %s58 = scalar_lea.vmem [#allocation0], 2
    %v59 = vld [vmem:[%s58] ss:$8 sm:$0xf0]
    %vm60 = vcmask 1047556
    %v61 = vsel %vm60, %v59, %v57
    %62 = vrot.lane.b32.xlu0 %v61, 32
    %v63 = vpop.permute.xlu0 %62
    %vm64 = vcmask 392448
    %65 = vst.msk [vmem:[%s1] sm:$0xff] %vm64, %v63
    %s66 = scalar_lea.vmem [#allocation0], 1
    %v67 = vld [vmem:[%s66] ss:$8 sm:$0xf]
    %s68 = scalar_lea.vmem [#allocation0], 1
    %v69 = vld [vmem:[%s68] ss:$8 sm:$0xf0]
    %vm70 = vcmask 1047556
    %v71 = vsel %vm70, %v69, %v67
    %72 = vrot.lane.b32.xlu0 %v71, 16
    %v73 = vpop.permute.xlu0 %72
    %vm74 = vcmask 261248
    %75 = vst.msk [vmem:[%s1] sm:$0xff] %vm74, %v73

// kernel: apn_forward.1
$region0: #{apn_forward.1}
  #allocation0 [shape = 'u32[]', space=smem, size = 0x4, offset = 0x4, fixed_abs, tag = 'smem constant byte address 0x4 - core index']
  #allocation1 [shape = 'u32[144,128]{1,0:T(1,128)}', space=vmem, size = 0x12000, scoped, tag = 'internal scratch']
  %s0 = inlined_call_operand.vmem [shape: f32[2,16,64], index: 0, kind: input, shape index: {}]
  %s1 = inlined_call_operand.vmem [shape: f32[9], index: 1, kind: input, shape index: {}]
  %s2 = inlined_call_operand.vmem [shape: f32[33,16,16], index: 2, kind: input, shape index: {}]
  %s3 = inlined_call_operand.vmem [shape: f32[8,64,16], index: 3, kind: input, shape index: {}]
  %s4 = inlined_call_operand.vmem [shape: f32[26,8,16], index: 4, kind: input, shape index: {}]
  %s5 = inlined_call_operand.hbm [shape: f32[2,16,16], index: 5, kind: output, shape index: {}]
  %s6 = sld [smem:[#allocation0]]
  $region57: #{apn_forward.1} parent=0
    _
  %s8 = ssub.s32 1, %s6
  %s9 = scalar_select 0, %s8, %s6
  $region1: #{apn_forward.1} parent=0
    #allocation2 [shape = 'u8[512]{0}', space=smem, size = 0x200, scoped, tag = 'input window, operand 1, single buffered']
    #allocation3 [shape = 's32[2]{0}', space=sflag, size = 0x8, scoped, tag = 'scoped memory for apn_forward.1']
    #allocation4 [shape = 's32[2]{0}', space=sflag, size = 0x8, scoped, tag = 'scoped memory for apn_forward.1']
    #allocation5 [shape = 'u8[16384]{0}', space=vmem, size = 0x4000, scoped, tag = 'output window, operand 0']
    %10 = vsyncpa [#allocation4], 0
    %11 = vsyncpa [#allocation3], 0
    %s12 = scalar_lea.sflag [#allocation3], 1
    %13 = vsyncpa %s12, 0
    loop: start=0, step=1, limit=4
    $region2: #{apn_forward.1} parent=1 // loop_pre_header
      _
    $region3: #{apn_forward.1} parent=1 // loop_header
      %s15 = sphi 0, %s19
      %p16 = scmp.ge.s32.totalorder %s15, 4
      %s25 = sphi 0, %s27
      %s28 = sphi 0, %s25
      %s29 = sphi 0, %s28
      %s45 = sphi 0, %s29
      %s49 = sphi 0, %s49
      %s51 = sphi 0, %s49
      %s52 = sphi 0, %s51
      %s66 = sphi 0, %s52
      %s70 = sphi 0, %s70
      %s72 = sphi 0, %s70
      %s73 = sphi 0, %s72
      %s87 = sphi 0, %s73
      %s91 = sphi 0, %s91
      %s93 = sphi 0, %s91
      %s94 = sphi 0, %s93
      %s108 = sphi 0, %s94
      %s112 = sphi 0, %s112
      %s114 = sphi 0, %s112
      %s115 = sphi 0, %s114
      %s129 = sphi 0, %s115
      %s135 = sphi 0, %s137
      %s138 = sphi 0, %s135
      %s139 = sphi 0, %s138
      %s155 = sphi 0, %s139
    $region4: #{apn_forward.1} parent=1 // loop_header_branch
      %18 = sbr.rel (%p16) target = $region8
    $region5: #{apn_forward.1} parent=1 // loop_body
      %s20 = ssub.s32 %s15, 1
      %s21 = ssub.s32 %s15, 2
      %s22 = sadd.s32 %s15, 1
      %s23 = ssub.s32 %s15, %s22
      %p24 = scmp.eq.s32.totalorder %s23, 0
      %s26 = sadd.s32 %s25, 1
      %s27 = scalar_select %p24, %s25, %s26
      %p30 = pneg %p24
      %p31 = scmp.eq.s32.totalorder %s15, 1
      %p32 = por %p30, %p31
      %p33 = scmp.ne.s32.totalorder %s25, %s28
      %p34 = scmp.eq.s32.totalorder %s15, 0
      %p35 = por %p33, %p34
      %p36 = scmp.ne.s32.totalorder %s25, %s28
      %p37 = scmp.eq.s32.totalorder %s20, 1
      %p38 = por %p36, %p37
      %p39 = scmp.ne.s32.totalorder %s28, %s29
      %p40 = scmp.eq.s32.totalorder %s20, 0
      %p41 = por %p39, %p40
      %p42 = scmp.ne.s32.totalorder %s28, %s29
      %p43 = scmp.eq.s32.totalorder %s21, 1
      %p44 = por %p42, %p43
      %p46 = scmp.ne.s32.totalorder %s29, %s45
      %p47 = scmp.eq.s32.totalorder %s21, 0
      %p48 = por %p46, %p47
      %s50 = sadd.s32 %s49, 1
      %p53 = scmp.eq.s32.totalorder %s15, 1
      %p54 = scmp.ne.s32.totalorder %s49, %s51
      %p55 = scmp.eq.s32.totalorder %s15, 0
      %p56 = por %p54, %p55
      %p57 = scmp.ne.s32.totalorder %s49, %s51
      %p58 = scmp.eq.s32.totalorder %s20, 1
      %p59 = por %p57, %p58
      %p60 = scmp.ne.s32.totalorder %s51, %s52
      %p61 = scmp.eq.s32.totalorder %s20, 0
      %p62 = por %p60, %p61
      %p63 = scmp.ne.s32.totalorder %s51, %s52
      %p64 = scmp.eq.s32.totalorder %s21, 1
      %p65 = por %p63, %p64
      %p67 = scmp.ne.s32.totalorder %s52, %s66
      %p68 = scmp.eq.s32.totalorder %s21, 0
      %p69 = por %p67, %p68
      %s71 = sadd.s32 %s70, 1
      %p74 = scmp.eq.s32.totalorder %s15, 1
      %p75 = scmp.ne.s32.totalorder %s70, %s72
      %p76 = scmp.eq.s32.totalorder %s15, 0
      %p77 = por %p75, %p76
      %p78 = scmp.ne.s32.totalorder %s70, %s72
      %p79 = scmp.eq.s32.totalorder %s20, 1
      %p80 = por %p78, %p79
      %p81 = scmp.ne.s32.totalorder %s72, %s73
      %p82 = scmp.eq.s32.totalorder %s20, 0
      %p83 = por %p81, %p82
      %p84 = scmp.ne.s32.totalorder %s72, %s73
      %p85 = scmp.eq.s32.totalorder %s21, 1
      %p86 = por %p84, %p85
      %p88 = scmp.ne.s32.totalorder %s73, %s87
      %p89 = scmp.eq.s32.totalorder %s21, 0
      %p90 = por %p88, %p89
      %s92 = sadd.s32 %s91, 1
      %p95 = scmp.eq.s32.totalorder %s15, 1
      %p96 = scmp.ne.s32.totalorder %s91, %s93
      %p97 = scmp.eq.s32.totalorder %s15, 0
      %p98 = por %p96, %p97
      %p99 = scmp.ne.s32.totalorder %s91, %s93
      %p100 = scmp.eq.s32.totalorder %s20, 1
      %p101 = por %p99, %p100
      %p102 = scmp.ne.s32.totalorder %s93, %s94
      %p103 = scmp.eq.s32.totalorder %s20, 0
      %p104 = por %p102, %p103
      %p105 = scmp.ne.s32.totalorder %s93, %s94
      %p106 = scmp.eq.s32.totalorder %s21, 1
      %p107 = por %p105, %p106
      %p109 = scmp.ne.s32.totalorder %s94, %s108
      %p110 = scmp.eq.s32.totalorder %s21, 0
      %p111 = por %p109, %p110
      %s113 = sadd.s32 %s112, 1
      %p116 = scmp.eq.s32.totalorder %s15, 1
      %p117 = scmp.ne.s32.totalorder %s112, %s114
      %p118 = scmp.eq.s32.totalorder %s15, 0
      %p119 = por %p117, %p118
      %p120 = scmp.ne.s32.totalorder %s112, %s114
      %p121 = scmp.eq.s32.totalorder %s20, 1
      %p122 = por %p120, %p121
      %p123 = scmp.ne.s32.totalorder %s114, %s115
      %p124 = scmp.eq.s32.totalorder %s20, 0
      %p125 = por %p123, %p124
      %p126 = scmp.ne.s32.totalorder %s114, %s115
      %p127 = scmp.eq.s32.totalorder %s21, 1
      %p128 = por %p126, %p127
      %p130 = scmp.ne.s32.totalorder %s115, %s129
      %p131 = scmp.eq.s32.totalorder %s21, 0
      %p132 = por %p130, %p131
      %s133 = ssub.s32 %s15, %s22
      %p134 = scmp.eq.s32.totalorder %s133, 0
      %s136 = sadd.s32 %s135, 1
      %s137 = scalar_select %p134, %s135, %s136
      %p140 = pneg %p134
      %p141 = scmp.eq.s32.totalorder %s15, 1
      %p142 = por %p140, %p141
      %p143 = scmp.ne.s32.totalorder %s135, %s138
      %p144 = scmp.eq.s32.totalorder %s15, 0
      %p145 = por %p143, %p144
      %p146 = scmp.ne.s32.totalorder %s135, %s138
      %p147 = scmp.eq.s32.totalorder %s20, 1
      %p148 = por %p146, %p147
      %p149 = scmp.ne.s32.totalorder %s138, %s139
      %p150 = scmp.eq.s32.totalorder %s20, 0
      %p151 = por %p149, %p150
      %p152 = scmp.ne.s32.totalorder %s138, %s139
      %p153 = scmp.eq.s32.totalorder %s21, 1
      %p154 = por %p152, %p153
      %p156 = scmp.ne.s32.totalorder %s139, %s155
      %p157 = scmp.eq.s32.totalorder %s21, 0
      %p158 = por %p156, %p157
      %p159 = scmp.le.s32.totalorder 1, %s15
      %p160 = scmp.lt.s32.totalorder %s15, 3
      %p161 = pnand %p159, %p160
      %p162 = pneg %p161
      // Predicated region
      $region9: #{apn_forward.1} parent=5 // pred_check
        _
      $region10: #{apn_forward.1} parent=5 // pred_check_branch
        %164 = sbr.rel (%p161) target = $region12
      $region11: #{apn_forward.1} parent=5 // pred_region
        %s165 = ssub.s32 %s15, 1
        // Predicated region
        $region13: #{apn_forward.1} parent=11 // pred_check
          %p166 = pneg %p62
        $region14: #{apn_forward.1} parent=11 // pred_check_branch
          %168 = sbr.rel (%p166) target = $region16
        $region15: #{apn_forward.1} parent=11 // pred_region
          %s170 = ssub.s32 16, 16
          %171 = vsyncadd [#allocation4], %s170
          %s173 = sshll.u32 %s1, 4
          %s174 = int_to_ptr.vmem [resolvable:$true] %s173
          %176 = dma.vmem_to_smem %s174, 16, [#allocation2], [#allocation4]
        $region16: #{apn_forward.1} parent=11 // pred_fallthru
          _
        // Predicated region
        $region17: #{apn_forward.1} parent=11 // pred_check
          %p177 = pneg %p83
        $region18: #{apn_forward.1} parent=11 // pred_check_branch
          %179 = sbr.rel (%p177) target = $region20
        $region19: #{apn_forward.1} parent=11 // pred_region
          _
        $region20: #{apn_forward.1} parent=11 // pred_fallthru
          _
        // Predicated region
        $region21: #{apn_forward.1} parent=11 // pred_check
          %p180 = pneg %p104
        $region22: #{apn_forward.1} parent=11 // pred_check_branch
          %182 = sbr.rel (%p180) target = $region24
        $region23: #{apn_forward.1} parent=11 // pred_region
          _
        $region24: #{apn_forward.1} parent=11 // pred_fallthru
          _
        // Predicated region
        $region25: #{apn_forward.1} parent=11 // pred_check
          %p183 = pneg %p125
        $region26: #{apn_forward.1} parent=11 // pred_check_branch
          %185 = sbr.rel (%p183) target = $region28
        $region27: #{apn_forward.1} parent=11 // pred_region
          _
        $region28: #{apn_forward.1} parent=11 // pred_fallthru
          _
      $region12: #{apn_forward.1} parent=5 // pred_fallthru
        _
      %p186 = scmp.lt.s32.totalorder %s15, 2
      // Predicated region
      $region29: #{apn_forward.1} parent=5 // pred_check
        %p187 = pneg %p186
      $region30: #{apn_forward.1} parent=5 // pred_check_branch
        %189 = sbr.rel (%p187) target = $region32
      $region31: #{apn_forward.1} parent=5 // pred_region
        // Predicated region
        $region33: #{apn_forward.1} parent=31 // pred_check
          %p190 = pneg %p35
        $region34: #{apn_forward.1} parent=31 // pred_check_branch
          %192 = sbr.rel (%p190) target = $region36
        $region35: #{apn_forward.1} parent=31 // pred_region
          %p193 = scmp.lt.s32.totalorder %s15, 1
          %s194 = scalar_select %p193, %s15, 1
          %s195 = smul.addr %s194, 2
          %s196 = smul.addr %s195, 8
          %s197 = scalar_lea.vmem %s0, %s196
        $region36: #{apn_forward.1} parent=31 // pred_fallthru
          _
      $region32: #{apn_forward.1} parent=5 // pred_fallthru
        _
      %p198 = scmp.le.s32.totalorder 1, %s15
      %p199 = scmp.lt.s32.totalorder %s15, 3
      %p200 = pnand %p198, %p199
      %p201 = pneg %p200
      // Predicated region
      $region37: #{apn_forward.1} parent=5 // pred_check
        _
      $region38: #{apn_forward.1} parent=5 // pred_check_branch
        %203 = sbr.rel (%p200) target = $region40
      $region39: #{apn_forward.1} parent=5 // pred_region
        %s204 = ssub.s32 %s15, 1
        // Predicated region
        $region41: #{apn_forward.1} parent=39 // pred_check
          %p205 = pneg %p62
        $region42: #{apn_forward.1} parent=39 // pred_check_branch
          %207 = sbr.rel (%p205) target = $region44
        $region43: #{apn_forward.1} parent=39 // pred_region
          %208 = dma.done [#allocation4], 16
        $region44: #{apn_forward.1} parent=39 // pred_fallthru
          _
        %209 = sfence
        %p210 = scmp.lt.s32.totalorder %s20, 1
        %s211 = scalar_select %p210, %s20, 1
        %s212 = smul.addr %s211, 2
        %s213 = smul.addr %s212, 8
        %s214 = scalar_lea.vmem %s0, %s213
        %p215 = pneg %p41
        %p216 = pneg %p38
        %p217 = pneg %p62
        %p218 = pneg %p59
        %p219 = pneg %p83
        %p220 = pneg %p80
        %p221 = pneg %p104
        %p222 = pneg %p101
        %p223 = pneg %p125
        %p224 = pneg %p122
        %p225 = pneg %p151
        %p226 = pneg %p148
        %s227 = sand.u32 %s138, 1
        %s228 = scalar_lea.sflag [#allocation3], %s227
        %s229 = sand.u32 %s138, 1
        %s230 = smul.addr %s229, 16
        %s231 = scalar_lea.vmem [#allocation5], %s230
        %p232 = scmp.lt.s32.totalorder %s20, 1
        %s233 = scalar_select %p232, %s20, 1
        %s234 = smul.addr %s233, 2
        %s235 = smul.addr %s234, 8
        %s236 = scalar_lea.vmem %s0, %s235
        %v237 = vld [vmem:[%s236] sm:$0xff]
        %v238 = vld [vmem:[%s236 + $0x8] sm:$0xff]
        %s239 = scalar_lea.vmem %s3, 448
        %v240 = vld [vmem:[%s239] sm:$0xff]
        %v241 = vld [vmem:[%s239 + $0x8] sm:$0xff]
        %v242 = vld [vmem:[%s239 + $0x10] sm:$0xff]
        %v243 = vld [vmem:[%s239 + $0x18] sm:$0xff]
        %v244 = vld [vmem:[%s239 + $0x20] sm:$0xff]
        %v245 = vld [vmem:[%s239 + $0x28] sm:$0xff]
        %v246 = vld [vmem:[%s239 + $0x30] sm:$0xff]
        %v247 = vld [vmem:[%s239 + $0x38] sm:$0xff]
        %s248 = sld [smem:[#allocation2]]
        %v249 = vstv %s248
        %vm250 = vcmask 523264
        %v252 = vsel %vm250, %v237, 0
        %v255 = vsel %vm250, %v238, 0
        %257 = vmatprep.subr.mxu0 0.0
        %258 = vmatpush1.msra.mxu0 %v240
        %259 = vmatprep.subr.mxu0 0.0
        %260 = vmatpush1.msra.mxu0 %v241
        %261 = vmatprep.subr.mxu0 0.0
        %262 = vmatpush1.msra.mxu0 %v242
        %263 = vmatprep.subr.mxu0 0.0
        %264 = vmatpush1.msra.mxu0 %v243
        %265 = vmatprep.subr.mxu0 0.0
        %266 = vmatpush1.msra.mxu0 %v244
        %267 = vmatprep.subr.mxu0 0.0
        %268 = vmatpush1.msra.mxu0 %v245
        %269 = vmatprep.subr.mxu0 0.0
        %270 = vmatpush1.msra.mxu0 %v246
        %271 = vmatprep.subr.mxu0 0.0
        %272 = vmatpush1.msra.mxu0 %v247
        %273 = vmatprep.subr.mxu0 0.0
        %274 = vmatpush1.msra.mxu0 0.0
        %275 = vmatprep.subr.mxu0 0.0
        %276 = vmatpush1.msra.mxu0 0.0
        %277 = vmatprep.subr.mxu0 0.0
        %278 = vmatpush1.msra.mxu0 0.0
        %279 = vmatprep.subr.mxu0 0.0
        %280 = vmatpush1.msra.mxu0 0.0
        %281 = vmatprep.subr.mxu0 0.0
        %282 = vmatpush1.msra.mxu0 0.0
        %283 = vmatprep.subr.mxu0 0.0
        %284 = vmatpush1.msra.mxu0 0.0
        %285 = vmatprep.subr.mxu0 0.0
        %286 = vmatpush1.msra.mxu0 0.0
        %287 = vmatprep.subr.mxu0 0.0
        %288 = vmatpush1.msra.mxu0 0.0
        %289 = vmatprep.subr.mxu0 0.0
        %290 = vmatpush1.msra.mxu0 0.0
        %291 = vmatprep.subr.mxu0 0.0
        %292 = vmatpush1.msra.mxu0 0.0
        %293 = vmatprep.subr.mxu0 0.0
        %294 = vmatpush1.msra.mxu0 0.0
        %295 = vmatprep.subr.mxu0 0.0
        %296 = vmatpush1.msra.mxu0 0.0
        %297 = vmatprep.subr.mxu0 0.0
        %298 = vmatpush1.msra.mxu0 0.0
        %299 = vmatprep.subr.mxu0 0.0
        %300 = vmatpush1.msra.mxu0 0.0
        %301 = vmatprep.subr.mxu0 0.0
        %302 = vmatpush1.msra.mxu0 0.0
        %303 = vmatprep.subr.mxu0 0.0
        %304 = vmatpush1.msra.mxu0 0.0
        %305 = vmatprep.subr.mxu0 0.0
        %306 = vmatpush1.msra.mxu0 0.0
        %307 = vmatprep.subr.mxu0 0.0
        %308 = vmatpush1.msra.mxu0 0.0
        %309 = vmatprep.subr.mxu0 0.0
        %310 = vmatpush1.msra.mxu0 0.0
        %311 = vmatprep.subr.mxu0 0.0
        %312 = vmatpush1.msra.mxu0 0.0
        %313 = vmatprep.subr.mxu0 0.0
        %314 = vmatpush1.msra.mxu0 0.0
        %315 = vmatprep.subr.mxu0 0.0
        %316 = vmatpush1.msra.mxu0 0.0
        %317 = vmatprep.subr.mxu0 0.0
        %318 = vmatpush1.msra.mxu0 0.0
        %319 = vmatprep.subr.mxu0 0.0
        %320 = vmatpush1.msra.mxu0 0.0
        %321 = vmatprep.mubr.f32.mxu0 0.0
        %322 = vmatmul.mubr.f32.gmra.mrb[0].mxu0 %v252
        %v323 = vpop.f32.mrb[0].mxu0
        %v324 = vadd.f32 %v249, %v323
        %v325 = vpop.f32.mrb[0].mxu0
        %326 = vmatprep.mubr.f32.mxu0 0.0
        %327 = vmatmul.mubr.f32.gmra.mrb[0].mxu0 %v255
        %v328 = vpop.f32.mrb[0].mxu0
        %v329 = vadd.f32 %v249, %v328
        %v330 = vpop.f32.mrb[0].mxu0
        %331 = vdwg.mxu0
        %v332 = vmax.f32 %v324, 0.0
        %v333 = vmax.f32 %v329, 0.0
        %v334 = vld [vmem:[%s2] sm:$0xff]
        %v335 = vld [vmem:[%s3] sm:$0xff]
        %v336 = vld [vmem:[%s3 + $0x8] sm:$0xff]
        %v337 = vld [vmem:[%s3 + $0x10] sm:$0xff]
        %v338 = vld [vmem:[%s3 + $0x18] sm:$0xff]
        %v339 = vld [vmem:[%s3 + $0x20] sm:$0xff]
        %v340 = vld [vmem:[%s3 + $0x28] sm:$0xff]
        %v341 = vld [vmem:[%s3 + $0x30] sm:$0xff]
        %v342 = vld [vmem:[%s3 + $0x38] sm:$0xff]
        %343 = vmatprep.subr.mxu0 0.0
        %344 = vmatpush1.msra.mxu0 %v335
        %345 = vmatprep.subr.mxu0 0.0
        %346 = vmatpush1.msra.mxu0 %v336
        %347 = vmatprep.subr.mxu0 0.0
        %348 = vmatpush1.msra.mxu0 %v337
        %349 = vmatprep.subr.mxu0 0.0
        %350 = vmatpush1.msra.mxu0 %v338
        %351 = vmatprep.subr.mxu0 0.0
        %352 = vmatpush1.msra.mxu0 %v339
        %353 = vmatprep.subr.mxu0 0.0
        %354 = vmatpush1.msra.mxu0 %v340
        %355 = vmatprep.subr.mxu0 0.0
        %356 = vmatpush1.msra.mxu0 %v341
        %357 = vmatprep.subr.mxu0 0.0
        %358 = vmatpush1.msra.mxu0 %v342
        %359 = vmatprep.subr.mxu0 0.0
        %360 = vmatpush1.msra.mxu0 0.0
        %361 = vmatprep.subr.mxu0 0.0
        %362 = vmatpush1.msra.mxu0 0.0
        %363 = vmatprep.subr.mxu0 0.0
        %364 = vmatpush1.msra.mxu0 0.0
        %365 = vmatprep.subr.mxu0 0.0
        %366 = vmatpush1.msra.mxu0 0.0
        %367 = vmatprep.subr.mxu0 0.0
        %368 = vmatpush1.msra.mxu0 0.0
        %369 = vmatprep.subr.mxu0 0.0
        %370 = vmatpush1.msra.mxu0 0.0
        %371 = vmatprep.subr.mxu0 0.0
        %372 = vmatpush1.msra.mxu0 0.0
        %373 = vmatprep.subr.mxu0 0.0
        %374 = vmatpush1.msra.mxu0 0.0
        %375 = vmatprep.subr.mxu0 0.0
        %376 = vmatpush1.msra.mxu0 0.0
        %377 = vmatprep.subr.mxu0 0.0
        %378 = vmatpush1.msra.mxu0 0.0
        %379 = vmatprep.subr.mxu0 0.0
        %380 = vmatpush1.msra.mxu0 0.0
        %381 = vmatprep.subr.mxu0 0.0
        %382 = vmatpush1.msra.mxu0 0.0
        %383 = vmatprep.subr.mxu0 0.0
        %384 = vmatpush1.msra.mxu0 0.0
        %385 = vmatprep.subr.mxu0 0.0
        %386 = vmatpush1.msra.mxu0 0.0
        %387 = vmatprep.subr.mxu0 0.0
        %388 = vmatpush1.msra.mxu0 0.0
        %389 = vmatprep.subr.mxu0 0.0
        %390 = vmatpush1.msra.mxu0 0.0
        %391 = vmatprep.subr.mxu0 0.0
        %392 = vmatpush1.msra.mxu0 0.0
        %393 = vmatprep.subr.mxu0 0.0
        %394 = vmatpush1.msra.mxu0 0.0
        %395 = vmatprep.subr.mxu0 0.0
        %396 = vmatpush1.msra.mxu0 0.0
        %397 = vmatprep.subr.mxu0 0.0
        %398 = vmatpush1.msra.mxu0 0.0
        %399 = vmatprep.subr.mxu0 0.0
        %400 = vmatpush1.msra.mxu0 0.0
        %401 = vmatprep.subr.mxu0 0.0
        %402 = vmatpush1.msra.mxu0 0.0
        %403 = vmatprep.subr.mxu0 0.0
        %404 = vmatpush1.msra.mxu0 0.0
        %405 = vmatprep.subr.mxu0 0.0
        %406 = vmatpush1.msra.mxu0 0.0
        %407 = vmatprep.mubr.f32.mxu0 0.0
        %408 = vmatmul.mubr.f32.gmra.mrb[0].mxu0 %v252
        %v409 = vpop.f32.mrb[0].mxu0
        %v410 = vadd.f32 0.0, %v409
        %v411 = vpop.f32.mrb[0].mxu0
        %412 = vmatprep.mubr.f32.mxu0 0.0
        %413 = vmatmul.mubr.f32.gmra.mrb[0].mxu0 %v255
        %v414 = vpop.f32.mrb[0].mxu0
        %v415 = vadd.f32 0.0, %v414
        %v416 = vpop.f32.mrb[0].mxu0
        %417 = vdwg.mxu0
        %s418 = scalar_lea.vmem %s2, 16
        %v419 = vld [vmem:[%s418] sm:$0xff]
        %s420 = scalar_lea.vmem %s3, 64
        %v421 = vld [vmem:[%s420] sm:$0xff]
        %v422 = vld [vmem:[%s420 + $0x8] sm:$0xff]
        %v423 = vld [vmem:[%s420 + $0x10] sm:$0xff]
        %v424 = vld [vmem:[%s420 + $0x18] sm:$0xff]
        %v425 = vld [vmem:[%s420 + $0x20] sm:$0xff]
        %v426 = vld [vmem:[%s420 + $0x28] sm:$0xff]
        %v427 = vld [vmem:[%s420 + $0x30] sm:$0xff]
        %v428 = vld [vmem:[%s420 + $0x38] sm:$0xff]
        %429 = vmatprep.subr.mxu0 0.0
        %430 = vmatpush1.msra.mxu0 %v421
        %431 = vmatprep.subr.mxu0 0.0
        %432 = vmatpush1.msra.mxu0 %v422
        %433 = vmatprep.subr.mxu0 0.0
        %434 = vmatpush1.msra.mxu0 %v423
        %435 = vmatprep.subr.mxu0 0.0
        %436 = vmatpush1.msra.mxu0 %v424
        %437 = vmatprep.subr.mxu0 0.0
        %438 = vmatpush1.msra.mxu0 %v425
        %439 = vmatprep.subr.mxu0 0.0
        %440 = vmatpush1.msra.mxu0 %v426
        %441 = vmatprep.subr.mxu0 0.0
        %442 = vmatpush1.msra.mxu0 %v427
        %443 = vmatprep.subr.mxu0 0.0
        %444 = vmatpush1.msra.mxu0 %v428
        %445 = vmatprep.subr.mxu0 0.0
        %446 = vmatpush1.msra.mxu0 0.0
        %447 = vmatprep.subr.mxu0 0.0
        %448 = vmatpush1.msra.mxu0 0.0
        %449 = vmatprep.subr.mxu0 0.0
        %450 = vmatpush1.msra.mxu0 0.0
        %451 = vmatprep.subr.mxu0 0.0
        %452 = vmatpush1.msra.mxu0 0.0
        %453 = vmatprep.subr.mxu0 0.0
        %454 = vmatpush1.msra.mxu0 0.0
        %455 = vmatprep.subr.mxu0 0.0
        %456 = vmatpush1.msra.mxu0 0.0
        %457 = vmatprep.subr.mxu0 0.0
        %458 = vmatpush1.msra.mxu0 0.0
        %459 = vmatprep.subr.mxu0 0.0
        %460 = vmatpush1.msra.mxu0 0.0
        %461 = vmatprep.subr.mxu0 0.0
        %462 = vmatpush1.msra.mxu0 0.0
        %463 = vmatprep.subr.mxu0 0.0
        %464 = vmatpush1.msra.mxu0 0.0
        %465 = vmatprep.subr.mxu0 0.0
        %466 = vmatpush1.msra.mxu0 0.0
        %467 = vmatprep.subr.mxu0 0.0
        %468 = vmatpush1.msra.mxu0 0.0
        %469 = vmatprep.subr.mxu0 0.0
        %470 = vmatpush1.msra.mxu0 0.0
        %471 = vmatprep.subr.mxu0 0.0
        %472 = vmatpush1.msra.mxu0 0.0
        %473 = vmatprep.subr.mxu0 0.0
        %474 = vmatpush1.msra.mxu0 0.0
        %475 = vmatprep.subr.mxu0 0.0
        %476 = vmatpush1.msra.mxu0 0.0
        %477 = vmatprep.subr.mxu0 0.0
        %478 = vmatpush1.msra.mxu0 0.0
        %479 = vmatprep.subr.mxu0 0.0
        %480 = vmatpush1.msra.mxu0 0.0
        %481 = vmatprep.subr.mxu0 0.0
        %482 = vmatpush1.msra.mxu0 0.0
        %483 = vmatprep.subr.mxu0 0.0
        %484 = vmatpush1.msra.mxu0 0.0
        %485 = vmatprep.subr.mxu0 0.0
        %486 = vmatpush1.msra.mxu0 0.0
        %487 = vmatprep.subr.mxu0 0.0
        %488 = vmatpush1.msra.mxu0 0.0
        %489 = vmatprep.subr.mxu0 0.0
        %490 = vmatpush1.msra.mxu0 0.0
        %491 = vmatprep.subr.mxu0 0.0
        %492 = vmatpush1.msra.mxu0 0.0
        %493 = vmatprep.mubr.f32.mxu0 0.0
        %494 = vmatmul.mubr.f32.gmra.mrb[0].mxu0 %v252
        %v495 = vpop.f32.mrb[0].mxu0
        %v496 = vadd.f32 0.0, %v495
        %v497 = vpop.f32.mrb[0].mxu0
        %498 = vmatprep.mubr.f32.mxu0 0.0
        %499 = vmatmul.mubr.f32.gmra.mrb[0].mxu0 %v255
        %v500 = vpop.f32.mrb[0].mxu0
        %v501 = vadd.f32 0.0, %v500
        %v502 = vpop.f32.mrb[0].mxu0
        %503 = vdwg.mxu0
        %vm504 = vcmask 130048
        %v506 = vsel %vm504, %v419, 0
        %508 = vmatprep.subr.mxu0 0.0
        %509 = vmatpush1.msra.mxu0 %v496
        %510 = vmatprep.subr.mxu0 0.0
        %511 = vmatpush1.msra.mxu0 %v501
        %512 = vmatprep.subr.mxu0 0.0
        %513 = vmatpush1.msra.mxu0 0.0
        %514 = vmatprep.subr.mxu0 0.0
        %515 = vmatpush1.msra.mxu0 0.0
        %516 = vmatprep.subr.mxu0 0.0
        %517 = vmatpush1.msra.mxu0 0.0
        %518 = vmatprep.subr.mxu0 0.0
        %519 = vmatpush1.msra.mxu0 0.0
        %520 = vmatprep.subr.mxu0 0.0
        %521 = vmatpush1.msra.mxu0 0.0
        %522 = vmatprep.subr.mxu0 0.0
        %523 = vmatpush1.msra.mxu0 0.0
        %524 = vmatprep.subr.mxu0 0.0
        %525 = vmatpush1.msra.mxu0 0.0
        %526 = vmatprep.subr.mxu0 0.0
        %527 = vmatpush1.msra.mxu0 0.0
        %528 = vmatprep.subr.mxu0 0.0
        %529 = vmatpush1.msra.mxu0 0.0
        %530 = vmatprep.subr.mxu0 0.0
        %531 = vmatpush1.msra.mxu0 0.0
        %532 = vmatprep.subr.mxu0 0.0
        %533 = vmatpush1.msra.mxu0 0.0
        %534 = vmatprep.subr.mxu0 0.0
        %535 = vmatpush1.msra.mxu0 0.0
        %536 = vmatprep.subr.mxu0 0.0
        %537 = vmatpush1.msra.mxu0 0.0
        %538 = vmatprep.subr.mxu0 0.0
        %539 = vmatpush1.msra.mxu0 0.0
        %540 = vmatprep.subr.mxu0 0.0
        %541 = vmatpush1.msra.mxu0 0.0
        %542 = vmatprep.subr.mxu0 0.0
        %543 = vmatpush1.msra.mxu0 0.0
        %544 = vmatprep.subr.mxu0 0.0
        %545 = vmatpush1.msra.mxu0 0.0
        %546 = vmatprep.subr.mxu0 0.0
        %547 = vmatpush1.msra.mxu0 0.0
        %548 = vmatprep.subr.mxu0 0.0
        %549 = vmatpush1.msra.mxu0 0.0
        %550 = vmatprep.subr.mxu0 0.0
        %551 = vmatpush1.msra.mxu0 0.0
        %552 = vmatprep.subr.mxu0 0.0
        %553 = vmatpush1.msra.mxu0 0.0
        %554 = vmatprep.subr.mxu0 0.0
        %555 = vmatpush1.msra.mxu0 0.0
        %556 = vmatprep.subr.mxu0 0.0
        %557 = vmatpush1.msra.mxu0 0.0
        %558 = vmatprep.subr.mxu0 0.0
        %559 = vmatpush1.msra.mxu0 0.0
        %560 = vmatprep.subr.mxu0 0.0
        %561 = vmatpush1.msra.mxu0 0.0
        %562 = vmatprep.subr.mxu0 0.0
        %563 = vmatpush1.msra.mxu0 0.0
        %564 = vmatprep.subr.mxu0 0.0
        %565 = vmatpush1.msra.mxu0 0.0
        %566 = vmatprep.subr.mxu0 0.0
        %567 = vmatpush1.msra.mxu0 0.0
        %568 = vmatprep.subr.mxu0 0.0
        %569 = vmatpush1.msra.mxu0 0.0
        %570 = vmatprep.subr.mxu0 0.0
        %571 = vmatpush1.msra.mxu0 0.0
        %572 = vmatprep.mubr.f32.mxu0 0.0
        %573 = vmatmul.mubr.f32.gmra.mrb[0].mxu0 %v506
        %v574 = vpop.f32.mrb[0].mxu0
        %v575 = vadd.f32 0.0, %v574
        %v576 = vpop.f32.mrb[0].mxu0
        %577 = vdwg.mxu0
        %v579 = vsel %vm504, %v334, 0
        %581 = vmatprep.subr.mxu0 0.0
        %582 = vmatpush1.msra.mxu0 %v410
        %583 = vmatprep.subr.mxu0 0.0
        %584 = vmatpush1.msra.mxu0 %v415
        %585 = vmatprep.subr.mxu0 0.0
        %586 = vmatpush1.msra.mxu0 0.0
        %587 = vmatprep.subr.mxu0 0.0
        %588 = vmatpush1.msra.mxu0 0.0
        %589 = vmatprep.subr.mxu0 0.0
        %590 = vmatpush1.msra.mxu0 0.0
        %591 = vmatprep.subr.mxu0 0.0
        %592 = vmatpush1.msra.mxu0 0.0
        %593 = vmatprep.subr.mxu0 0.0
        %594 = vmatpush1.msra.mxu0 0.0
        %595 = vmatprep.subr.mxu0 0.0
        %596 = vmatpush1.msra.mxu0 0.0
        %597 = vmatprep.subr.mxu0 0.0
        %598 = vmatpush1.msra.mxu0 0.0
        %599 = vmatprep.subr.mxu0 0.0
        %600 = vmatpush1.msra.mxu0 0.0
        %601 = vmatprep.subr.mxu0 0.0
        %602 = vmatpush1.msra.mxu0 0.0
        %603 = vmatprep.subr.mxu0 0.0
        %604 = vmatpush1.msra.mxu0 0.0
        %605 = vmatprep.subr.mxu0 0.0
        %606 = vmatpush1.msra.mxu0 0.0
        %607 = vmatprep.subr.mxu0 0.0
        %608 = vmatpush1.msra.mxu0 0.0
        %609 = vmatprep.subr.mxu0 0.0
        %610 = vmatpush1.msra.mxu0 0.0
        %611 = vmatprep.subr.mxu0 0.0
        %612 = vmatpush1.msra.mxu0 0.0
        %613 = vmatprep.subr.mxu0 0.0
        %614 = vmatpush1.msra.mxu0 0.0
        %615 = vmatprep.subr.mxu0 0.0
        %616 = vmatpush1.msra.mxu0 0.0
        %617 = vmatprep.subr.mxu0 0.0
        %618 = vmatpush1.msra.mxu0 0.0
        %619 = vmatprep.subr.mxu0 0.0
        %620 = vmatpush1.msra.mxu0 0.0
        %621 = vmatprep.subr.mxu0 0.0
        %622 = vmatpush1.msra.mxu0 0.0
        %623 = vmatprep.subr.mxu0 0.0
        %624 = vmatpush1.msra.mxu0 0.0
        %625 = vmatprep.subr.mxu0 0.0
        %626 = vmatpush1.msra.mxu0 0.0
        %627 = vmatprep.subr.mxu0 0.0
        %628 = vmatpush1.msra.mxu0 0.0
        %629 = vmatprep.subr.mxu0 0.0
        %630 = vmatpush1.msra.mxu0 0.0
        %631 = vmatprep.subr.mxu0 0.0
        %632 = vmatpush1.msra.mxu0 0.0
        %633 = vmatprep.subr.mxu0 0.0
        %634 = vmatpush1.msra.mxu0 0.0
        %635 = vmatprep.subr.mxu0 0.0
        %636 = vmatpush1.msra.mxu0 0.0
        %637 = vmatprep.subr.mxu0 0.0
        %638 = vmatpush1.msra.mxu0 0.0
        %639 = vmatprep.subr.mxu0 0.0
        %640 = vmatpush1.msra.mxu0 0.0
        %641 = vmatprep.subr.mxu0 0.0
        %642 = vmatpush1.msra.mxu0 0.0
        %643 = vmatprep.subr.mxu0 0.0
        %644 = vmatpush1.msra.mxu0 0.0
        %645 = vmatprep.mubr.f32.mxu0 0.0
        %646 = vmatmul.mubr.f32.gmra.mrb[0].mxu0 %v579
        %v647 = vpop.f32.mrb[0].mxu0
        %v648 = vadd.f32 %v575, %v647
        %v649 = vpop.f32.mrb[0].mxu0
        %650 = vdwg.mxu0
        %s651 = scalar_lea.vmem %s2, 32
        %v652 = vld [vmem:[%s651] sm:$0xff]
        %s653 = scalar_lea.vmem %s3, 128
        %v654 = vld [vmem:[%s653] sm:$0xff]
        %v655 = vld [vmem:[%s653 + $0x8] sm:$0xff]
        %v656 = vld [vmem:[%s653 + $0x10] sm:$0xff]
        %v657 = vld [vmem:[%s653 + $0x18] sm:$0xff]
        %v658 = vld [vmem:[%s653 + $0x20] sm:$0xff]
        %v659 = vld [vmem:[%s653 + $0x28] sm:$0xff]
        %v660 = vld [vmem:[%s653 + $0x30] sm:$0xff]
        %v661 = vld [vmem:[%s653 + $0x38] sm:$0xff]
        %662 = vmatprep.subr.mxu0 0.0
        %663 = vmatpush1.msra.mxu0 %v654
        %664 = vmatprep.subr.mxu0 0.0
        %665 = vmatpush1.msra.mxu0 %v655
        %666 = vmatprep.subr.mxu0 0.0
        %667 = vmatpush1.msra.mxu0 %v656
        %668 = vmatprep.subr.mxu0 0.0
        %669 = vmatpush1.msra.mxu0 %v657
        %670 = vmatprep.subr.mxu0 0.0
        %671 = vmatpush1.msra.mxu0 %v658
        %672 = vmatprep.subr.mxu0 0.0
        %673 = vmatpush1.msra.mxu0 %v659
        %674 = vmatprep.subr.mxu0 0.0
        %675 = vmatpush1.msra.mxu0 %v660
        %676 = vmatprep.subr.mxu0 0.0
        %677 = vmatpush1.msra.mxu0 %v661
        %678 = vmatprep.subr.mxu0 0.0
        %679 = vmatpush1.msra.mxu0 0.0
        %680 = vmatprep.subr.mxu0 0.0
        %681 = vmatpush1.msra.mxu0 0.0
        %682 = vmatprep.subr.mxu0 0.0
        %683 = vmatpush1.msra.mxu0 0.0
        %684 = vmatprep.subr.mxu0 0.0
        %685 = vmatpush1.msra.mxu0 0.0
        %686 = vmatprep.subr.mxu0 0.0
        %687 = vmatpush1.msra.mxu0 0.0
        %688 = vmatprep.subr.mxu0 0.0
        %689 = vmatpush1.msra.mxu0 0.0
        %690 = vmatprep.subr.mxu0 0.0
        %691 = vmatpush1.msra.mxu0 0.0
        %692 = vmatprep.subr.mxu0 0.0
        %693 = vmatpush1.msra.mxu0 0.0
        %694 = vmatprep.subr.mxu0 0.0
        %695 = vmatpush1.msra.mxu0 0.0
        %696 = vmatprep.subr.mxu0 0.0
        %697 = vmatpush1.msra.mxu0 0.0
        %698 = vmatprep.subr.mxu0 0.0
        %699 = vmatpush1.msra.mxu0 0.0
        %700 = vmatprep.subr.mxu0 0.0
        %701 = vmatpush1.msra.mxu0 0.0
        %702 = vmatprep.subr.mxu0 0.0
        %703 = vmatpush1.msra.mxu0 0.0
        %704 = vmatprep.subr.mxu0 0.0
        %705 = vmatpush1.msra.mxu0 0.0
        %706 = vmatprep.subr.mxu0 0.0
        %707 = vmatpush1.msra.mxu0 0.0
        %708 = vmatprep.subr.mxu0 0.0
        %709 = vmatpush1.msra.mxu0 0.0
        %710 = vmatprep.subr.mxu0 0.0
        %711 = vmatpush1.msra.mxu0 0.0
        %712 = vmatprep.subr.mxu0 0.0
        %713 = vmatpush1.msra.mxu0 0.0
        %714 = vmatprep.subr.mxu0 0.0
        %715 = vmatpush1.msra.mxu0 0.0
        %716 = vmatprep.subr.mxu0 0.0
        %717 = vmatpush1.msra.mxu0 0.0
        %718 = vmatprep.subr.mxu0 0.0
        %719 = vmatpush1.msra.mxu0 0.0
        %720 = vmatprep.subr.mxu0 0.0
        %721 = vmatpush1.msra.mxu0 0.0
        %722 = vmatprep.subr.mxu0 0.0
        %723 = vmatpush1.msra.mxu0 0.0
        %724 = vmatprep.subr.mxu0 0.0
        %725 = vmatpush1.msra.mxu0 0.0
        %726 = vmatprep.mubr.f32.mxu0 0.0
        %727 = vmatmul.mubr.f32.gmra.mrb[0].mxu0 %v252
        %v728 = vpop.f32.mrb[0].mxu0
        %v729 = vadd.f32 0.0, %v728
        %v730 = vpop.f32.mrb[0].mxu0
        %731 = vmatprep.mubr.f32.mxu0 0.0
        %732 = vmatmul.mubr.f32.gmra.mrb[0].mxu0 %v255
        %v733 = vpop.f32.mrb[0].mxu0
        %v734 = vadd.f32 0.0, %v733
        %v735 = vpop.f32.mrb[0].mxu0
        %736 = vdwg.mxu0
        %v738 = vsel %vm504, %v652, 0
        %740 = vmatprep.subr.mxu0 0.0
        %741 = vmatpush1.msra.mxu0 %v729
        %742 = vmatprep.subr.mxu0 0.0
        %743 = vmatpush1.msra.mxu0 %v734
        %744 = vmatprep.subr.mxu0 0.0
        %745 = vmatpush1.msra.mxu0 0.0
        %746 = vmatprep.subr.mxu0 0.0
        %747 = vmatpush1.msra.mxu0 0.0
        %748 = vmatprep.subr.mxu0 0.0
        %749 = vmatpush1.msra.mxu0 0.0
        %750 = vmatprep.subr.mxu0 0.0
        %751 = vmatpush1.msra.mxu0 0.0
        %752 = vmatprep.subr.mxu0 0.0
        %753 = vmatpush1.msra.mxu0 0.0
        %754 = vmatprep.subr.mxu0 0.0
        %755 = vmatpush1.msra.mxu0 0.0
        %756 = vmatprep.subr.mxu0 0.0
        %757 = vmatpush1.msra.mxu0 0.0
        %758 = vmatprep.subr.mxu0 0.0
        %759 = vmatpush1.msra.mxu0 0.0
        %760 = vmatprep.subr.mxu0 0.0
        %761 = vmatpush1.msra.mxu0 0.0
        %762 = vmatprep.subr.mxu0 0.0
        %763 = vmatpush1.msra.mxu0 0.0
        %764 = vmatprep.subr.mxu0 0.0
        %765 = vmatpush1.msra.mxu0 0.0
        %766 = vmatprep.subr.mxu0 0.0
        %767 = vmatpush1.msra.mxu0 0.0
        %768 = vmatprep.subr.mxu0 0.0
        %769 = vmatpush1.msra.mxu0 0.0
        %770 = vmatprep.subr.mxu0 0.0
        %771 = vmatpush1.msra.mxu0 0.0
        %772 = vmatprep.subr.mxu0 0.0
        %773 = vmatpush1.msra.mxu0 0.0
        %774 = vmatprep.subr.mxu0 0.0
        %775 = vmatpush1.msra.mxu0 0.0
        %776 = vmatprep.subr.mxu0 0.0
        %777 = vmatpush1.msra.mxu0 0.0
        %778 = vmatprep.subr.mxu0 0.0
        %779 = vmatpush1.msra.mxu0 0.0
        %780 = vmatprep.subr.mxu0 0.0
        %781 = vmatpush1.msra.mxu0 0.0
        %782 = vmatprep.subr.mxu0 0.0
        %783 = vmatpush1.msra.mxu0 0.0
        %784 = vmatprep.subr.mxu0 0.0
        %785 = vmatpush1.msra.mxu0 0.0
        %786 = vmatprep.subr.mxu0 0.0
        %787 = vmatpush1.msra.mxu0 0.0
        %788 = vmatprep.subr.mxu0 0.0
        %789 = vmatpush1.msra.mxu0 0.0
        %790 = vmatprep.subr.mxu0 0.0
        %791 = vmatpush1.msra.mxu0 0.0
        %792 = vmatprep.subr.mxu0 0.0
        %793 = vmatpush1.msra.mxu0 0.0
        %794 = vmatprep.subr.mxu0 0.0
        %795 = vmatpush1.msra.mxu0 0.0
        %796 = vmatprep.subr.mxu0 0.0
        %797 = vmatpush1.msra.mxu0 0.0
        %798 = vmatprep.subr.mxu0 0.0
        %799 = vmatpush1.msra.mxu0 0.0
        %800 = vmatprep.subr.mxu0 0.0
        %801 = vmatpush1.msra.mxu0 0.0
        %802 = vmatprep.subr.mxu0 0.0
        %803 = vmatpush1.msra.mxu0 0.0
        %804 = vmatprep.mubr.f32.mxu0 0.0
        %805 = vmatmul.mubr.f32.gmra.mrb[0].mxu0 %v738
        %v806 = vpop.f32.mrb[0].mxu0
        %v807 = vadd.f32 0.0, %v806
        %v808 = vpop.f32.mrb[0].mxu0
        %809 = vdwg.mxu0
        %v810 = vadd.f32 %v648, %v807
        %s811 = scalar_lea.vmem %s2, 48
        %v812 = vld [vmem:[%s811] sm:$0xff]
        %s813 = scalar_lea.vmem %s3, 192
        %v814 = vld [vmem:[%s813] sm:$0xff]
        %v815 = vld [vmem:[%s813 + $0x8] sm:$0xff]
        %v816 = vld [vmem:[%s813 + $0x10] sm:$0xff]
        %v817 = vld [vmem:[%s813 + $0x18] sm:$0xff]
        %v818 = vld [vmem:[%s813 + $0x20] sm:$0xff]
        %v819 = vld [vmem:[%s813 + $0x28] sm:$0xff]
        %v820 = vld [vmem:[%s813 + $0x30] sm:$0xff]
        %v821 = vld [vmem:[%s813 + $0x38] sm:$0xff]
        %822 = vmatprep.subr.mxu0 0.0
        %823 = vmatpush1.msra.mxu0 %v814
        %824 = vmatprep.subr.mxu0 0.0
        %825 = vmatpush1.msra.mxu0 %v815
        %826 = vmatprep.subr.mxu0 0.0
        %827 = vmatpush1.msra.mxu0 %v816
        %828 = vmatprep.subr.mxu0 0.0
        %829 = vmatpush1.msra.mxu0 %v817
        %830 = vmatprep.subr.mxu0 0.0
        %831 = vmatpush1.msra.mxu0 %v818
        %832 = vmatprep.subr.mxu0 0.0
        %833 = vmatpush1.msra.mxu0 %v819
        %834 = vmatprep.subr.mxu0 0.0
        %835 = vmatpush1.msra.mxu0 %v820
        %836 = vmatprep.subr.mxu0 0.0
        %837 = vmatpush1.msra.mxu0 %v821
        %838 = vmatprep.subr.mxu0 0.0
        %839 = vmatpush1.msra.mxu0 0.0
        %840 = vmatprep.subr.mxu0 0.0
        %841 = vmatpush1.msra.mxu0 0.0
        %842 = vmatprep.subr.mxu0 0.0
        %843 = vmatpush1.msra.mxu0 0.0
        %844 = vmatprep.subr.mxu0 0.0
        %845 = vmatpush1.msra.mxu0 0.0
        %846 = vmatprep.subr.mxu0 0.0
        %847 = vmatpush1.msra.mxu0 0.0
        %848 = vmatprep.subr.mxu0 0.0
        %849 = vmatpush1.msra.mxu0 0.0
        %850 = vmatprep.subr.mxu0 0.0
        %851 = vmatpush1.msra.mxu0 0.0
        %852 = vmatprep.subr.mxu0 0.0
        %853 = vmatpush1.msra.mxu0 0.0
        %854 = vmatprep.subr.mxu0 0.0
        %855 = vmatpush1.msra.mxu0 0.0
        %856 = vmatprep.subr.mxu0 0.0
        %857 = vmatpush1.msra.mxu0 0.0
        %858 = vmatprep.subr.mxu0 0.0
        %859 = vmatpush1.msra.mxu0 0.0
        %860 = vmatprep.subr.mxu0 0.0
        %861 = vmatpush1.msra.mxu0 0.0
        %862 = vmatprep.subr.mxu0 0.0
        %863 = vmatpush1.msra.mxu0 0.0
        %864 = vmatprep.subr.mxu0 0.0
        %865 = vmatpush1.msra.mxu0 0.0
        %866 = vmatprep.subr.mxu0 0.0
        %867 = vmatpush1.msra.mxu0 0.0
        %868 = vmatprep.subr.mxu0 0.0
        %869 = vmatpush1.msra.mxu0 0.0
        %870 = vmatprep.subr.mxu0 0.0
        %871 = vmatpush1.msra.mxu0 0.0
        %872 = vmatprep.subr.mxu0 0.0
        %873 = vmatpush1.msra.mxu0 0.0
        %874 = vmatprep.subr.mxu0 0.0
        %875 = vmatpush1.msra.mxu0 0.0
        %876 = vmatprep.subr.mxu0 0.0
        %877 = vmatpush1.msra.mxu0 0.0
        %878 = vmatprep.subr.mxu0 0.0
        %879 = vmatpush1.msra.mxu0 0.0
        %880 = vmatprep.subr.mxu0 0.0
        %881 = vmatpush1.msra.mxu0 0.0
        %882 = vmatprep.subr.mxu0 0.0
        %883 = vmatpush1.msra.mxu0 0.0
        %884 = vmatprep.subr.mxu0 0.0
        %885 = vmatpush1.msra.mxu0 0.0
        %886 = vmatprep.mubr.f32.mxu0 0.0
        %887 = vmatmul.mubr.f32.gmra.mrb[0].mxu0 %v252
        %v888 = vpop.f32.mrb[0].mxu0
        %v889 = vadd.f32 0.0, %v888
        %v890 = vpop.f32.mrb[0].mxu0
        %891 = vmatprep.mubr.f32.mxu0 0.0
        %892 = vmatmul.mubr.f32.gmra.mrb[0].mxu0 %v255
        %v893 = vpop.f32.mrb[0].mxu0
        %v894 = vadd.f32 0.0, %v893
        %v895 = vpop.f32.mrb[0].mxu0
        %896 = vdwg.mxu0
        %v898 = vsel %vm504, %v812, 0
        %900 = vmatprep.subr.mxu0 0.0
        %901 = vmatpush1.msra.mxu0 %v889
        %902 = vmatprep.subr.mxu0 0.0
        %903 = vmatpush1.msra.mxu0 %v894
        %904 = vmatprep.subr.mxu0 0.0
        %905 = vmatpush1.msra.mxu0 0.0
        %906 = vmatprep.subr.mxu0 0.0
        %907 = vmatpush1.msra.mxu0 0.0
        %908 = vmatprep.subr.mxu0 0.0
        %909 = vmatpush1.msra.mxu0 0.0
        %910 = vmatprep.subr.mxu0 0.0
        %911 = vmatpush1.msra.mxu0 0.0
        %912 = vmatprep.subr.mxu0 0.0
        %913 = vmatpush1.msra.mxu0 0.0
        %914 = vmatprep.subr.mxu0 0.0
        %915 = vmatpush1.msra.mxu0 0.0
        %916 = vmatprep.subr.mxu0 0.0
        %917 = vmatpush1.msra.mxu0 0.0
        %918 = vmatprep.subr.mxu0 0.0
        %919 = vmatpush1.msra.mxu0 0.0
        %920 = vmatprep.subr.mxu0 0.0
        %921 = vmatpush1.msra.mxu0 0.0
        %922 = vmatprep.subr.mxu0 0.0
        %923 = vmatpush1.msra.mxu0 0.0
        %924 = vmatprep.subr.mxu0 0.0
        %925 = vmatpush1.msra.mxu0 0.0
        %926 = vmatprep.subr.mxu0 0.0
        %927 = vmatpush1.msra.mxu0 0.0
        %928 = vmatprep.subr.mxu0 0.0
        %929 = vmatpush1.msra.mxu0 0.0
        %930 = vmatprep.subr.mxu0 0.0
        %931 = vmatpush1.msra.mxu0 0.0
        %932 = vmatprep.subr.mxu0 0.0
        %933 = vmatpush1.msra.mxu0 0.0
        %934 = vmatprep.subr.mxu0 0.0
        %935 = vmatpush1.msra.mxu0 0.0
        %936 = vmatprep.subr.mxu0 0.0
        %937 = vmatpush1.msra.mxu0 0.0
        %938 = vmatprep.subr.mxu0 0.0
        %939 = vmatpush1.msra.mxu0 0.0
        %940 = vmatprep.subr.mxu0 0.0
        %941 = vmatpush1.msra.mxu0 0.0
        %942 = vmatprep.subr.mxu0 0.0
        %943 = vmatpush1.msra.mxu0 0.0
        %944 = vmatprep.subr.mxu0 0.0
        %945 = vmatpush1.msra.mxu0 0.0
        %946 = vmatprep.subr.mxu0 0.0
        %947 = vmatpush1.msra.mxu0 0.0
        %948 = vmatprep.subr.mxu0 0.0
        %949 = vmatpush1.msra.mxu0 0.0
        %950 = vmatprep.subr.mxu0 0.0
        %951 = vmatpush1.msra.mxu0 0.0
        %952 = vmatprep.subr.mxu0 0.0
        %953 = vmatpush1.msra.mxu0 0.0
        %954 = vmatprep.subr.mxu0 0.0
        %955 = vmatpush1.msra.mxu0 0.0
        %956 = vmatprep.subr.mxu0 0.0
        %957 = vmatpush1.msra.mxu0 0.0
        %958 = vmatprep.subr.mxu0 0.0
        %959 = vmatpush1.msra.mxu0 0.0
        %960 = vmatprep.subr.mxu0 0.0
        %961 = vmatpush1.msra.mxu0 0.0
        %962 = vmatprep.subr.mxu0 0.0
        %963 = vmatpush1.msra.mxu0 0.0
        %964 = vmatprep.mubr.f32.mxu0 0.0
        %965 = vmatmul.mubr.f32.gmra.mrb[0].mxu0 %v898
        %v966 = vpop.f32.mrb[0].mxu0
        %v967 = vadd.f32 0.0, %v966
        %v968 = vpop.f32.mrb[0].mxu0
        %969 = vdwg.mxu0
        %v970 = vadd.f32 %v810, %v967
        %s971 = scalar_lea.vmem %s2, 64
        %v972 = vld [vmem:[%s971] sm:$0xff]
        %s973 = scalar_lea.vmem %s3, 256
        %v974 = vld [vmem:[%s973] sm:$0xff]
        %v975 = vld [vmem:[%s973 + $0x8] sm:$0xff]
        %v976 = vld [vmem:[%s973 + $0x10] sm:$0xff]
        %v977 = vld [vmem:[%s973 + $0x18] sm:$0xff]
        %v978 = vld [vmem:[%s973 + $0x20] sm:$0xff]
        %v979 = vld [vmem:[%s973 + $0x28] sm:$0xff]
        %v980 = vld [vmem:[%s973 + $0x30] sm:$0xff]
        %v981 = vld [vmem:[%s973 + $0x38] sm:$0xff]
        %982 = vmatprep.subr.mxu0 0.0
        %983 = vmatpush1.msra.mxu0 %v974
        %984 = vmatprep.subr.mxu0 0.0
        %985 = vmatpush1.msra.mxu0 %v975
        %986 = vmatprep.subr.mxu0 0.0
        %987 = vmatpush1.msra.mxu0 %v976
        %988 = vmatprep.subr.mxu0 0.0
        %989 = vmatpush1.msra.mxu0 %v977
        %990 = vmatprep.subr.mxu0 0.0
        %991 = vmatpush1.msra.mxu0 %v978
        %992 = vmatprep.subr.mxu0 0.0
        %993 = vmatpush1.msra.mxu0 %v979
        %994 = vmatprep.subr.mxu0 0.0
        %995 = vmatpush1.msra.mxu0 %v980
        %996 = vmatprep.subr.mxu0 0.0
        %997 = vmatpush1.msra.mxu0 %v981
        %998 = vmatprep.subr.mxu0 0.0
        %999 = vmatpush1.msra.mxu0 0.0
        %1000 = vmatprep.subr.mxu0 0.0
        %1001 = vmatpush1.msra.mxu0 0.0
        %1002 = vmatprep.subr.mxu0 0.0
        %1003 = vmatpush1.msra.mxu0 0.0
        %1004 = vmatprep.subr.mxu0 0.0
        %1005 = vmatpush1.msra.mxu0 0.0
        %1006 = vmatprep.subr.mxu0 0.0
        %1007 = vmatpush1.msra.mxu0 0.0
        %1008 = vmatprep.subr.mxu0 0.0
        %1009 = vmatpush1.msra.mxu0 0.0
        %1010 = vmatprep.subr.mxu0 0.0
        %1011 = vmatpush1.msra.mxu0 0.0
        %1012 = vmatprep.subr.mxu0 0.0
        %1013 = vmatpush1.msra.mxu0 0.0
        %1014 = vmatprep.subr.mxu0 0.0
        %1015 = vmatpush1.msra.mxu0 0.0
        %1016 = vmatprep.subr.mxu0 0.0
        %1017 = vmatpush1.msra.mxu0 0.0
        %1018 = vmatprep.subr.mxu0 0.0
        %1019 = vmatpush1.msra.mxu0 0.0
        %1020 = vmatprep.subr.mxu0 0.0
        %1021 = vmatpush1.msra.mxu0 0.0
        %1022 = vmatprep.subr.mxu0 0.0
        %1023 = vmatpush1.msra.mxu0 0.0
        %1024 = vmatprep.subr.mxu0 0.0
        %1025 = vmatpush1.msra.mxu0 0.0
        %1026 = vmatprep.subr.mxu0 0.0
        %1027 = vmatpush1.msra.mxu0 0.0
        %1028 = vmatprep.subr.mxu0 0.0
        %1029 = vmatpush1.msra.mxu0 0.0
        %1030 = vmatprep.subr.mxu0 0.0
        %1031 = vmatpush1.msra.mxu0 0.0
        %1032 = vmatprep.subr.mxu0 0.0
        %1033 = vmatpush1.msra.mxu0 0.0
        %1034 = vmatprep.subr.mxu0 0.0
        %1035 = vmatpush1.msra.mxu0 0.0
        %1036 = vmatprep.subr.mxu0 0.0
        %1037 = vmatpush1.msra.mxu0 0.0
        %1038 = vmatprep.subr.mxu0 0.0
        %1039 = vmatpush1.msra.mxu0 0.0
        %1040 = vmatprep.subr.mxu0 0.0
        %1041 = vmatpush1.msra.mxu0 0.0
        %1042 = vmatprep.subr.mxu0 0.0
        %1043 = vmatpush1.msra.mxu0 0.0
        %1044 = vmatprep.subr.mxu0 0.0
        %1045 = vmatpush1.msra.mxu0 0.0
        %1046 = vmatprep.mubr.f32.mxu0 0.0
        %1047 = vmatmul.mubr.f32.gmra.mrb[0].mxu0 %v252
        %v1048 = vpop.f32.mrb[0].mxu0
        %v1049 = vadd.f32 0.0, %v1048
        %v1050 = vpop.f32.mrb[0].mxu0
        %1051 = vmatprep.mubr.f32.mxu0 0.0
        %1052 = vmatmul.mubr.f32.gmra.mrb[0].mxu0 %v255
        %v1053 = vpop.f32.mrb[0].mxu0
        %v1054 = vadd.f32 0.0, %v1053
        %v1055 = vpop.f32.mrb[0].mxu0
        %1056 = vdwg.mxu0
        %v1058 = vsel %vm504, %v972, 0
        %1060 = vmatprep.subr.mxu0 0.0
        %1061 = vmatpush1.msra.mxu0 %v1049
        %1062 = vmatprep.subr.mxu0 0.0
        %1063 = vmatpush1.msra.mxu0 %v1054
        %1064 = vmatprep.subr.mxu0 0.0
        %1065 = vmatpush1.msra.mxu0 0.0
        %1066 = vmatprep.subr.mxu0 0.0
        %1067 = vmatpush1.msra.mxu0 0.0
        %1068 = vmatprep.subr.mxu0 0.0
        %1069 = vmatpush1.msra.mxu0 0.0
        %1070 = vmatprep.subr.mxu0 0.0
        %1071 = vmatpush1.msra.mxu0 0.0
        %1072 = vmatprep.subr.mxu0 0.0
        %1073 = vmatpush1.msra.mxu0 0.0
        %1074 = vmatprep.subr.mxu0 0.0
        %1075 = vmatpush1.msra.mxu0 0.0
        %1076 = vmatprep.subr.mxu0 0.0
        %1077 = vmatpush1.msra.mxu0 0.0
        %1078 = vmatprep.subr.mxu0 0.0
        %1079 = vmatpush1.msra.mxu0 0.0
        %1080 = vmatprep.subr.mxu0 0.0
        %1081 = vmatpush1.msra.mxu0 0.0
        %1082 = vmatprep.subr.mxu0 0.0
        %1083 = vmatpush1.msra.mxu0 0.0
        %1084 = vmatprep.subr.mxu0 0.0
        %1085 = vmatpush1.msra.mxu0 0.0
        %1086 = vmatprep.subr.mxu0 0.0
        %1087 = vmatpush1.msra.mxu0 0.0
        %1088 = vmatprep.subr.mxu0 0.0
        %1089 = vmatpush1.msra.mxu0 0.0
        %1090 = vmatprep.subr.mxu0 0.0
        %1091 = vmatpush1.msra.mxu0 0.0
        %1092 = vmatprep.subr.mxu0 0.0
        %1093 = vmatpush1.msra.mxu0 0.0
        %1094 = vmatprep.subr.mxu0 0.0
        %1095 = vmatpush1.msra.mxu0 0.0
        %1096 = vmatprep.subr.mxu0 0.0
        %1097 = vmatpush1.msra.mxu0 0.0
        %1098 = vmatprep.subr.mxu0 0.0
        %1099 = vmatpush1.msra.mxu0 0.0
        %1100 = vmatprep.subr.mxu0 0.0
        %1101 = vmatpush1.msra.mxu0 0.0
        %1102 = vmatprep.subr.mxu0 0.0
        %1103 = vmatpush1.msra.mxu0 0.0
        %1104 = vmatprep.subr.mxu0 0.0
        %1105 = vmatpush1.msra.mxu0 0.0
        %1106 = vmatprep.subr.mxu0 0.0
        %1107 = vmatpush1.msra.mxu0 0.0
        %1108 = vmatprep.subr.mxu0 0.0
        %1109 = vmatpush1.msra.mxu0 0.0
        %1110 = vmatprep.subr.mxu0 0.0
        %1111 = vmatpush1.msra.mxu0 0.0
        %1112 = vmatprep.subr.mxu0 0.0
        %1113 = vmatpush1.msra.mxu0 0.0
        %1114 = vmatprep.subr.mxu0 0.0
        %1115 = vmatpush1.msra.mxu0 0.0
        %1116 = vmatprep.subr.mxu0 0.0
        %1117 = vmatpush1.msra.mxu0 0.0
        %1118 = vmatprep.subr.mxu0 0.0
        %1119 = vmatpush1.msra.mxu0 0.0
        %1120 = vmatprep.subr.mxu0 0.0
        %1121 = vmatpush1.msra.mxu0 0.0
        %1122 = vmatprep.subr.mxu0 0.0
        %1123 = vmatpush1.msra.mxu0 0.0
        %1124 = vmatprep.mubr.f32.mxu0 0.0
        %1125 = vmatmul.mubr.f32.gmra.mrb[0].mxu0 %v1058
        %v1126 = vpop.f32.mrb[0].mxu0
        %v1127 = vadd.f32 0.0, %v1126
        %v1128 = vpop.f32.mrb[0].mxu0
        %1129 = vdwg.mxu0
        %v1130 = vadd.f32 %v970, %v1127
        %s1131 = scalar_lea.vmem %s2, 80
        %v1132 = vld [vmem:[%s1131] sm:$0xff]
        %s1133 = scalar_lea.vmem %s3, 320
        %v1134 = vld [vmem:[%s1133] sm:$0xff]
        %v1135 = vld [vmem:[%s1133 + $0x8] sm:$0xff]
        %v1136 = vld [vmem:[%s1133 + $0x10] sm:$0xff]
        %v1137 = vld [vmem:[%s1133 + $0x18] sm:$0xff]
        %v1138 = vld [vmem:[%s1133 + $0x20] sm:$0xff]
        %v1139 = vld [vmem:[%s1133 + $0x28] sm:$0xff]
        %v1140 = vld [vmem:[%s1133 + $0x30] sm:$0xff]
        %v1141 = vld [vmem:[%s1133 + $0x38] sm:$0xff]
        %1142 = vmatprep.subr.mxu0 0.0
        %1143 = vmatpush1.msra.mxu0 %v1134
        %1144 = vmatprep.subr.mxu0 0.0
        %1145 = vmatpush1.msra.mxu0 %v1135
        %1146 = vmatprep.subr.mxu0 0.0
        %1147 = vmatpush1.msra.mxu0 %v1136
        %1148 = vmatprep.subr.mxu0 0.0
        %1149 = vmatpush1.msra.mxu0 %v1137
        %1150 = vmatprep.subr.mxu0 0.0
        %1151 = vmatpush1.msra.mxu0 %v1138
        %1152 = vmatprep.subr.mxu0 0.0
        %1153 = vmatpush1.msra.mxu0 %v1139
        %1154 = vmatprep.subr.mxu0 0.0
        %1155 = vmatpush1.msra.mxu0 %v1140
        %1156 = vmatprep.subr.mxu0 0.0
        %1157 = vmatpush1.msra.mxu0 %v1141
        %1158 = vmatprep.subr.mxu0 0.0
        %1159 = vmatpush1.msra.mxu0 0.0
        %1160 = vmatprep.subr.mxu0 0.0
        %1161 = vmatpush1.msra.mxu0 0.0
        %1162 = vmatprep.subr.mxu0 0.0
        %1163 = vmatpush1.msra.mxu0 0.0
        %1164 = vmatprep.subr.mxu0 0.0
        %1165 = vmatpush1.msra.mxu0 0.0
        %1166 = vmatprep.subr.mxu0 0.0
        %1167 = vmatpush1.msra.mxu0 0.0
        %1168 = vmatprep.subr.mxu0 0.0
        %1169 = vmatpush1.msra.mxu0 0.0
        %1170 = vmatprep.subr.mxu0 0.0
        %1171 = vmatpush1.msra.mxu0 0.0
        %1172 = vmatprep.subr.mxu0 0.0
        %1173 = vmatpush1.msra.mxu0 0.0
        %1174 = vmatprep.subr.mxu0 0.0
        %1175 = vmatpush1.msra.mxu0 0.0
        %1176 = vmatprep.subr.mxu0 0.0
        %1177 = vmatpush1.msra.mxu0 0.0
        %1178 = vmatprep.subr.mxu0 0.0
        %1179 = vmatpush1.msra.mxu0 0.0
        %1180 = vmatprep.subr.mxu0 0.0
        %1181 = vmatpush1.msra.mxu0 0.0
        %1182 = vmatprep.subr.mxu0 0.0
        %1183 = vmatpush1.msra.mxu0 0.0
        %1184 = vmatprep.subr.mxu0 0.0
        %1185 = vmatpush1.msra.mxu0 0.0
        %1186 = vmatprep.subr.mxu0 0.0
        %1187 = vmatpush1.msra.mxu0 0.0
        %1188 = vmatprep.subr.mxu0 0.0
        %1189 = vmatpush1.msra.mxu0 0.0
        %1190 = vmatprep.subr.mxu0 0.0
        %1191 = vmatpush1.msra.mxu0 0.0
        %1192 = vmatprep.subr.mxu0 0.0
        %1193 = vmatpush1.msra.mxu0 0.0
        %1194 = vmatprep.subr.mxu0 0.0
        %1195 = vmatpush1.msra.mxu0 0.0
        %1196 = vmatprep.subr.mxu0 0.0
        %1197 = vmatpush1.msra.mxu0 0.0
        %1198 = vmatprep.subr.mxu0 0.0
        %1199 = vmatpush1.msra.mxu0 0.0
        %1200 = vmatprep.subr.mxu0 0.0
        %1201 = vmatpush1.msra.mxu0 0.0
        %1202 = vmatprep.subr.mxu0 0.0
        %1203 = vmatpush1.msra.mxu0 0.0
        %1204 = vmatprep.subr.mxu0 0.0
        %1205 = vmatpush1.msra.mxu0 0.0
        %1206 = vmatprep.mubr.f32.mxu0 0.0
        %1207 = vmatmul.mubr.f32.gmra.mrb[0].mxu0 %v252
        %v1208 = vpop.f32.mrb[0].mxu0
        %v1209 = vadd.f32 0.0, %v1208
        %v1210 = vpop.f32.mrb[0].mxu0
        %1211 = vmatprep.mubr.f32.mxu0 0.0
        %1212 = vmatmul.mubr.f32.gmra.mrb[0].mxu0 %v255
        %v1213 = vpop.f32.mrb[0].mxu0
        %v1214 = vadd.f32 0.0, %v1213
        %v1215 = vpop.f32.mrb[0].mxu0
        %1216 = vdwg.mxu0
        %v1218 = vsel %vm504, %v1132, 0
        %1220 = vmatprep.subr.mxu0 0.0
        %1221 = vmatpush1.msra.mxu0 %v1209
        %1222 = vmatprep.subr.mxu0 0.0
        %1223 = vmatpush1.msra.mxu0 %v1214
        %1224 = vmatprep.subr.mxu0 0.0
        %1225 = vmatpush1.msra.mxu0 0.0
        %1226 = vmatprep.subr.mxu0 0.0
        %1227 = vmatpush1.msra.mxu0 0.0
        %1228 = vmatprep.subr.mxu0 0.0
        %1229 = vmatpush1.msra.mxu0 0.0
        %1230 = vmatprep.subr.mxu0 0.0
        %1231 = vmatpush1.msra.mxu0 0.0
        %1232 = vmatprep.subr.mxu0 0.0
        %1233 = vmatpush1.msra.mxu0 0.0
        %1234 = vmatprep.subr.mxu0 0.0
        %1235 = vmatpush1.msra.mxu0 0.0
        %1236 = vmatprep.subr.mxu0 0.0
        %1237 = vmatpush1.msra.mxu0 0.0
        %1238 = vmatprep.subr.mxu0 0.0
        %1239 = vmatpush1.msra.mxu0 0.0
        %1240 = vmatprep.subr.mxu0 0.0
        %1241 = vmatpush1.msra.mxu0 0.0
        %1242 = vmatprep.subr.mxu0 0.0
        %1243 = vmatpush1.msra.mxu0 0.0
        %1244 = vmatprep.subr.mxu0 0.0
        %1245 = vmatpush1.msra.mxu0 0.0
        %1246 = vmatprep.subr.mxu0 0.0
        %1247 = vmatpush1.msra.mxu0 0.0
        %1248 = vmatprep.subr.mxu0 0.0
        %1249 = vmatpush1.msra.mxu0 0.0
        %1250 = vmatprep.subr.mxu0 0.0
        %1251 = vmatpush1.msra.mxu0 0.0
        %1252 = vmatprep.subr.mxu0 0.0
        %1253 = vmatpush1.msra.mxu0 0.0
        %1254 = vmatprep.subr.mxu0 0.0
        %1255 = vmatpush1.msra.mxu0 0.0
        %1256 = vmatprep.subr.mxu0 0.0
        %1257 = vmatpush1.msra.mxu0 0.0
        %1258 = vmatprep.subr.mxu0 0.0
        %1259 = vmatpush1.msra.mxu0 0.0
        %1260 = vmatprep.subr.mxu0 0.0
        %1261 = vmatpush1.msra.mxu0 0.0
        %1262 = vmatprep.subr.mxu0 0.0
        %1263 = vmatpush1.msra.mxu0 0.0
        %1264 = vmatprep.subr.mxu0 0.0
        %1265 = vmatpush1.msra.mxu0 0.0
        %1266 = vmatprep.subr.mxu0 0.0
        %1267 = vmatpush1.msra.mxu0 0.0
        %1268 = vmatprep.subr.mxu0 0.0
        %1269 = vmatpush1.msra.mxu0 0.0
        %1270 = vmatprep.subr.mxu0 0.0
        %1271 = vmatpush1.msra.mxu0 0.0
        %1272 = vmatprep.subr.mxu0 0.0
        %1273 = vmatpush1.msra.mxu0 0.0
        %1274 = vmatprep.subr.mxu0 0.0
        %1275 = vmatpush1.msra.mxu0 0.0
        %1276 = vmatprep.subr.mxu0 0.0
        %1277 = vmatpush1.msra.mxu0 0.0
        %1278 = vmatprep.subr.mxu0 0.0
        %1279 = vmatpush1.msra.mxu0 0.0
        %1280 = vmatprep.subr.mxu0 0.0
        %1281 = vmatpush1.msra.mxu0 0.0
        %1282 = vmatprep.subr.mxu0 0.0
        %1283 = vmatpush1.msra.mxu0 0.0
        %1284 = vmatprep.mubr.f32.mxu0 0.0
        %1285 = vmatmul.mubr.f32.gmra.mrb[0].mxu0 %v1218
        %v1286 = vpop.f32.mrb[0].mxu0
        %v1287 = vadd.f32 0.0, %v1286
        %v1288 = vpop.f32.mrb[0].mxu0
        %1289 = vdwg.mxu0
        %v1290 = vadd.f32 %v1130, %v1287
        %s1291 = scalar_lea.vmem %s2, 96
        %v1292 = vld [vmem:[%s1291] sm:$0xff]
        %s1293 = scalar_lea.vmem %s3, 384
        %v1294 = vld [vmem:[%s1293] sm:$0xff]
        %v1295 = vld [vmem:[%s1293 + $0x8] sm:$0xff]
        %v1296 = vld [vmem:[%s1293 + $0x10] sm:$0xff]
        %v1297 = vld [vmem:[%s1293 + $0x18] sm:$0xff]
        %v1298 = vld [vmem:[%s1293 + $0x20] sm:$0xff]
        %v1299 = vld [vmem:[%s1293 + $0x28] sm:$0xff]
        %v1300 = vld [vmem:[%s1293 + $0x30] sm:$0xff]
        %v1301 = vld [vmem:[%s1293 + $0x38] sm:$0xff]
        %1302 = vmatprep.subr.mxu0 0.0
        %1303 = vmatpush1.msra.mxu0 %v1294
        %1304 = vmatprep.subr.mxu0 0.0
        %1305 = vmatpush1.msra.mxu0 %v1295
        %1306 = vmatprep.subr.mxu0 0.0
        %1307 = vmatpush1.msra.mxu0 %v1296
        %1308 = vmatprep.subr.mxu0 0.0
        %1309 = vmatpush1.msra.mxu0 %v1297
        %1310 = vmatprep.subr.mxu0 0.0
        %1311 = vmatpush1.msra.mxu0 %v1298
        %1312 = vmatprep.subr.mxu0 0.0
        %1313 = vmatpush1.msra.mxu0 %v1299
        %1314 = vmatprep.subr.mxu0 0.0
        %1315 = vmatpush1.msra.mxu0 %v1300
        %1316 = vmatprep.subr.mxu0 0.0
        %1317 = vmatpush1.msra.mxu0 %v1301
        %1318 = vmatprep.subr.mxu0 0.0
        %1319 = vmatpush1.msra.mxu0 0.0
        %1320 = vmatprep.subr.mxu0 0.0
        %1321 = vmatpush1.msra.mxu0 0.0
        %1322 = vmatprep.subr.mxu0 0.0
        %1323 = vmatpush1.msra.mxu0 0.0
        %1324 = vmatprep.subr.mxu0 0.0
        %1325 = vmatpush1.msra.mxu0 0.0
        %1326 = vmatprep.subr.mxu0 0.0
        %1327 = vmatpush1.msra.mxu0 0.0
        %1328 = vmatprep.subr.mxu0 0.0
        %1329 = vmatpush1.msra.mxu0 0.0
        %1330 = vmatprep.subr.mxu0 0.0
        %1331 = vmatpush1.msra.mxu0 0.0
        %1332 = vmatprep.subr.mxu0 0.0
        %1333 = vmatpush1.msra.mxu0 0.0
        %1334 = vmatprep.subr.mxu0 0.0
        %1335 = vmatpush1.msra.mxu0 0.0
        %1336 = vmatprep.subr.mxu0 0.0
        %1337 = vmatpush1.msra.mxu0 0.0
        %1338 = vmatprep.subr.mxu0 0.0
        %1339 = vmatpush1.msra.mxu0 0.0
        %1340 = vmatprep.subr.mxu0 0.0
        %1341 = vmatpush1.msra.mxu0 0.0
        %1342 = vmatprep.subr.mxu0 0.0
        %1343 = vmatpush1.msra.mxu0 0.0
        %1344 = vmatprep.subr.mxu0 0.0
        %1345 = vmatpush1.msra.mxu0 0.0
        %1346 = vmatprep.subr.mxu0 0.0
        %1347 = vmatpush1.msra.mxu0 0.0
        %1348 = vmatprep.subr.mxu0 0.0
        %1349 = vmatpush1.msra.mxu0 0.0
        %1350 = vmatprep.subr.mxu0 0.0
        %1351 = vmatpush1.msra.mxu0 0.0
        %1352 = vmatprep.subr.mxu0 0.0
        %1353 = vmatpush1.msra.mxu0 0.0
        %1354 = vmatprep.subr.mxu0 0.0
        %1355 = vmatpush1.msra.mxu0 0.0
        %1356 = vmatprep.subr.mxu0 0.0
        %1357 = vmatpush1.msra.mxu0 0.0
        %1358 = vmatprep.subr.mxu0 0.0
        %1359 = vmatpush1.msra.mxu0 0.0
        %1360 = vmatprep.subr.mxu0 0.0
        %1361 = vmatpush1.msra.mxu0 0.0
        %1362 = vmatprep.subr.mxu0 0.0
        %1363 = vmatpush1.msra.mxu0 0.0
        %1364 = vmatprep.subr.mxu0 0.0
        %1365 = vmatpush1.msra.mxu0 0.0
        %1366 = vmatprep.mubr.f32.mxu0 0.0
        %1367 = vmatmul.mubr.f32.gmra.mrb[0].mxu0 %v252
        %v1368 = vpop.f32.mrb[0].mxu0
        %v1369 = vadd.f32 0.0, %v1368
        %v1370 = vpop.f32.mrb[0].mxu0
        %1371 = vmatprep.mubr.f32.mxu0 0.0
        %1372 = vmatmul.mubr.f32.gmra.mrb[0].mxu0 %v255
        %v1373 = vpop.f32.mrb[0].mxu0
        %v1374 = vadd.f32 0.0, %v1373
        %v1375 = vpop.f32.mrb[0].mxu0
        %1376 = vdwg.mxu0
        %v1378 = vsel %vm504, %v1292, 0
        %1380 = vmatprep.subr.mxu0 0.0
        %1381 = vmatpush1.msra.mxu0 %v1369
        %1382 = vmatprep.subr.mxu0 0.0
        %1383 = vmatpush1.msra.mxu0 %v1374
        %1384 = vmatprep.subr.mxu0 0.0
        %1385 = vmatpush1.msra.mxu0 0.0
        %1386 = vmatprep.subr.mxu0 0.0
        %1387 = vmatpush1.msra.mxu0 0.0
        %1388 = vmatprep.subr.mxu0 0.0
        %1389 = vmatpush1.msra.mxu0 0.0
        %1390 = vmatprep.subr.mxu0 0.0
        %1391 = vmatpush1.msra.mxu0 0.0
        %1392 = vmatprep.subr.mxu0 0.0
        %1393 = vmatpush1.msra.mxu0 0.0
        %1394 = vmatprep.subr.mxu0 0.0
        %1395 = vmatpush1.msra.mxu0 0.0
        %1396 = vmatprep.subr.mxu0 0.0
        %1397 = vmatpush1.msra.mxu0 0.0
        %1398 = vmatprep.subr.mxu0 0.0
        %1399 = vmatpush1.msra.mxu0 0.0
        %1400 = vmatprep.subr.mxu0 0.0
        %1401 = vmatpush1.msra.mxu0 0.0
        %1402 = vmatprep.subr.mxu0 0.0
        %1403 = vmatpush1.msra.mxu0 0.0
        %1404 = vmatprep.subr.mxu0 0.0
        %1405 = vmatpush1.msra.mxu0 0.0
        %1406 = vmatprep.subr.mxu0 0.0
        %1407 = vmatpush1.msra.mxu0 0.0
        %1408 = vmatprep.subr.mxu0 0.0
        %1409 = vmatpush1.msra.mxu0 0.0
        %1410 = vmatprep.subr.mxu0 0.0
        %1411 = vmatpush1.msra.mxu0 0.0
        %1412 = vmatprep.subr.mxu0 0.0
        %1413 = vmatpush1.msra.mxu0 0.0
        %1414 = vmatprep.subr.mxu0 0.0
        %1415 = vmatpush1.msra.mxu0 0.0
        %1416 = vmatprep.subr.mxu0 0.0
        %1417 = vmatpush1.msra.mxu0 0.0
        %1418 = vmatprep.subr.mxu0 0.0
        %1419 = vmatpush1.msra.mxu0 0.0
        %1420 = vmatprep.subr.mxu0 0.0
        %1421 = vmatpush1.msra.mxu0 0.0
        %1422 = vmatprep.subr.mxu0 0.0
        %1423 = vmatpush1.msra.mxu0 0.0
        %1424 = vmatprep.subr.mxu0 0.0
        %1425 = vmatpush1.msra.mxu0 0.0
        %1426 = vmatprep.subr.mxu0 0.0
        %1427 = vmatpush1.msra.mxu0 0.0
        %1428 = vmatprep.subr.mxu0 0.0
        %1429 = vmatpush1.msra.mxu0 0.0
        %1430 = vmatprep.subr.mxu0 0.0
        %1431 = vmatpush1.msra.mxu0 0.0
        %1432 = vmatprep.subr.mxu0 0.0
        %1433 = vmatpush1.msra.mxu0 0.0
        %1434 = vmatprep.subr.mxu0 0.0
        %1435 = vmatpush1.msra.mxu0 0.0
        %1436 = vmatprep.subr.mxu0 0.0
        %1437 = vmatpush1.msra.mxu0 0.0
        %1438 = vmatprep.subr.mxu0 0.0
        %1439 = vmatpush1.msra.mxu0 0.0
        %1440 = vmatprep.subr.mxu0 0.0
        %1441 = vmatpush1.msra.mxu0 0.0
        %1442 = vmatprep.subr.mxu0 0.0
        %1443 = vmatpush1.msra.mxu0 0.0
        %1444 = vmatprep.mubr.f32.mxu0 0.0
        %1445 = vmatmul.mubr.f32.gmra.mrb[0].mxu0 %v1378
        %v1446 = vpop.f32.mrb[0].mxu0
        %v1447 = vadd.f32 0.0, %v1446
        %v1448 = vpop.f32.mrb[0].mxu0
        %1449 = vdwg.mxu0
        %v1450 = vadd.f32 %v1290, %v1447
        %s1451 = sld [smem:[#allocation2 + $0x1]]
        %v1452 = vstv %s1451
        %v1453 = vadd.f32 %v1450, %v1452
        %v1454 = vmax.f32 %v1453, 0.0
        %s1455 = scalar_lea.vmem %s2, 112
        %v1456 = vld [vmem:[%s1455] sm:$0xf]
        %v1457 = vld [vmem:[%s4] sm:$0xff]
        %vm1458 = vcmask 64512
        %v1460 = vsel %vm1458, %v1454, 0
        %1462 = vmatprep.subr.mxu0 0.0
        %1463 = vmatpush1.msra.mxu0 %v1457
        %1464 = vmatprep.subr.mxu0 0.0
        %1465 = vmatpush1.msra.mxu0 0.0
        %1466 = vmatprep.subr.mxu0 0.0
        %1467 = vmatpush1.msra.mxu0 0.0
        %1468 = vmatprep.subr.mxu0 0.0
        %1469 = vmatpush1.msra.mxu0 0.0
        %1470 = vmatprep.subr.mxu0 0.0
        %1471 = vmatpush1.msra.mxu0 0.0
        %1472 = vmatprep.subr.mxu0 0.0
        %1473 = vmatpush1.msra.mxu0 0.0
        %1474 = vmatprep.subr.mxu0 0.0
        %1475 = vmatpush1.msra.mxu0 0.0
        %1476 = vmatprep.subr.mxu0 0.0
        %1477 = vmatpush1.msra.mxu0 0.0
        %1478 = vmatprep.subr.mxu0 0.0
        %1479 = vmatpush1.msra.mxu0 0.0
        %1480 = vmatprep.subr.mxu0 0.0
        %1481 = vmatpush1.msra.mxu0 0.0
        %1482 = vmatprep.subr.mxu0 0.0
        %1483 = vmatpush1.msra.mxu0 0.0
        %1484 = vmatprep.subr.mxu0 0.0
        %1485 = vmatpush1.msra.mxu0 0.0
        %1486 = vmatprep.subr.mxu0 0.0
        %1487 = vmatpush1.msra.mxu0 0.0
        %1488 = vmatprep.subr.mxu0 0.0
        %1489 = vmatpush1.msra.mxu0 0.0
        %1490 = vmatprep.subr.mxu0 0.0
        %1491 = vmatpush1.msra.mxu0 0.0
        %1492 = vmatprep.subr.mxu0 0.0
        %1493 = vmatpush1.msra.mxu0 0.0
        %1494 = vmatprep.subr.mxu0 0.0
        %1495 = vmatpush1.msra.mxu0 0.0
        %1496 = vmatprep.subr.mxu0 0.0
        %1497 = vmatpush1.msra.mxu0 0.0
        %1498 = vmatprep.subr.mxu0 0.0
        %1499 = vmatpush1.msra.mxu0 0.0
        %1500 = vmatprep.subr.mxu0 0.0
        %1501 = vmatpush1.msra.mxu0 0.0
        %1502 = vmatprep.subr.mxu0 0.0
        %1503 = vmatpush1.msra.mxu0 0.0
        %1504 = vmatprep.subr.mxu0 0.0
        %1505 = vmatpush1.msra.mxu0 0.0
        %1506 = vmatprep.subr.mxu0 0.0
        %1507 = vmatpush1.msra.mxu0 0.0
        %1508 = vmatprep.subr.mxu0 0.0
        %1509 = vmatpush1.msra.mxu0 0.0
        %1510 = vmatprep.subr.mxu0 0.0
        %1511 = vmatpush1.msra.mxu0 0.0
        %1512 = vmatprep.subr.mxu0 0.0
        %1513 = vmatpush1.msra.mxu0 0.0
        %1514 = vmatprep.subr.mxu0 0.0
        %1515 = vmatpush1.msra.mxu0 0.0
        %1516 = vmatprep.subr.mxu0 0.0
        %1517 = vmatpush1.msra.mxu0 0.0
        %1518 = vmatprep.subr.mxu0 0.0
        %1519 = vmatpush1.msra.mxu0 0.0
        %1520 = vmatprep.subr.mxu0 0.0
        %1521 = vmatpush1.msra.mxu0 0.0
        %1522 = vmatprep.subr.mxu0 0.0
        %1523 = vmatpush1.msra.mxu0 0.0
        %1524 = vmatprep.subr.mxu0 0.0
        %1525 = vmatpush1.msra.mxu0 0.0
        %1526 = vmatprep.mubr.f32.mxu0 0.0
        %1527 = vmatmul.mubr.f32.gmra.mrb[0].mxu0 %v1460
        %v1528 = vpop.f32.mrb[0].mxu0
        %v1529 = vadd.f32 0.0, %v1528
        %v1530 = vpop.f32.mrb[0].mxu0
        %1531 = vdwg.mxu0
        %s1532 = scalar_lea.vmem %s2, 128
        %v1533 = vld [vmem:[%s1532] sm:$0xf]
        %s1534 = scalar_lea.vmem %s4, 8
        %v1535 = vld [vmem:[%s1534] sm:$0xff]
        %1536 = vmatprep.subr.mxu0 0.0
        %1537 = vmatpush1.msra.mxu0 %v1535
        %1538 = vmatprep.subr.mxu0 0.0
        %1539 = vmatpush1.msra.mxu0 0.0
        %1540 = vmatprep.subr.mxu0 0.0
        %1541 = vmatpush1.msra.mxu0 0.0
        %1542 = vmatprep.subr.mxu0 0.0
        %1543 = vmatpush1.msra.mxu0 0.0
        %1544 = vmatprep.subr.mxu0 0.0
        %1545 = vmatpush1.msra.mxu0 0.0
        %1546 = vmatprep.subr.mxu0 0.0
        %1547 = vmatpush1.msra.mxu0 0.0
        %1548 = vmatprep.subr.mxu0 0.0
        %1549 = vmatpush1.msra.mxu0 0.0
        %1550 = vmatprep.subr.mxu0 0.0
        %1551 = vmatpush1.msra.mxu0 0.0
        %1552 = vmatprep.subr.mxu0 0.0
        %1553 = vmatpush1.msra.mxu0 0.0
        %1554 = vmatprep.subr.mxu0 0.0
        %1555 = vmatpush1.msra.mxu0 0.0
        %1556 = vmatprep.subr.mxu0 0.0
        %1557 = vmatpush1.msra.mxu0 0.0
        %1558 = vmatprep.subr.mxu0 0.0
        %1559 = vmatpush1.msra.mxu0 0.0
        %1560 = vmatprep.subr.mxu0 0.0
        %1561 = vmatpush1.msra.mxu0 0.0
        %1562 = vmatprep.subr.mxu0 0.0
        %1563 = vmatpush1.msra.mxu0 0.0
        %1564 = vmatprep.subr.mxu0 0.0
        %1565 = vmatpush1.msra.mxu0 0.0
        %1566 = vmatprep.subr.mxu0 0.0
        %1567 = vmatpush1.msra.mxu0 0.0
        %1568 = vmatprep.subr.mxu0 0.0
        %1569 = vmatpush1.msra.mxu0 0.0
        %1570 = vmatprep.subr.mxu0 0.0
        %1571 = vmatpush1.msra.mxu0 0.0
        %1572 = vmatprep.subr.mxu0 0.0
        %1573 = vmatpush1.msra.mxu0 0.0
        %1574 = vmatprep.subr.mxu0 0.0
        %1575 = vmatpush1.msra.mxu0 0.0
        %1576 = vmatprep.subr.mxu0 0.0
        %1577 = vmatpush1.msra.mxu0 0.0
        %1578 = vmatprep.subr.mxu0 0.0
        %1579 = vmatpush1.msra.mxu0 0.0
        %1580 = vmatprep.subr.mxu0 0.0
        %1581 = vmatpush1.msra.mxu0 0.0
        %1582 = vmatprep.subr.mxu0 0.0
        %1583 = vmatpush1.msra.mxu0 0.0
        %1584 = vmatprep.subr.mxu0 0.0
        %1585 = vmatpush1.msra.mxu0 0.0
        %1586 = vmatprep.subr.mxu0 0.0
        %1587 = vmatpush1.msra.mxu0 0.0
        %1588 = vmatprep.subr.mxu0 0.0
        %1589 = vmatpush1.msra.mxu0 0.0
        %1590 = vmatprep.subr.mxu0 0.0
        %1591 = vmatpush1.msra.mxu0 0.0
        %1592 = vmatprep.subr.mxu0 0.0
        %1593 = vmatpush1.msra.mxu0 0.0
        %1594 = vmatprep.subr.mxu0 0.0
        %1595 = vmatpush1.msra.mxu0 0.0
        %1596 = vmatprep.subr.mxu0 0.0
        %1597 = vmatpush1.msra.mxu0 0.0
        %1598 = vmatprep.subr.mxu0 0.0
        %1599 = vmatpush1.msra.mxu0 0.0
        %1600 = vmatprep.mubr.f32.mxu0 0.0
        %1601 = vmatmul.mubr.f32.gmra.mrb[0].mxu0 %v1460
        %v1602 = vpop.f32.mrb[0].mxu0
        %v1603 = vadd.f32 0.0, %v1602
        %v1604 = vpop.f32.mrb[0].mxu0
        %1605 = vdwg.mxu0
        %v1607 = vsel %vm1458, %v1533, 0
        %1609 = vmatprep.subr.mxu0 0.0
        %1610 = vmatpush1.msra.mxu0 %v1603
        %1611 = vmatprep.subr.mxu0 0.0
        %1612 = vmatpush1.msra.mxu0 0.0
        %1613 = vmatprep.subr.mxu0 0.0
        %1614 = vmatpush1.msra.mxu0 0.0
        %1615 = vmatprep.subr.mxu0 0.0
        %1616 = vmatpush1.msra.mxu0 0.0
        %1617 = vmatprep.subr.mxu0 0.0
        %1618 = vmatpush1.msra.mxu0 0.0
        %1619 = vmatprep.subr.mxu0 0.0
        %1620 = vmatpush1.msra.mxu0 0.0
        %1621 = vmatprep.subr.mxu0 0.0
        %1622 = vmatpush1.msra.mxu0 0.0
        %1623 = vmatprep.subr.mxu0 0.0
        %1624 = vmatpush1.msra.mxu0 0.0
        %1625 = vmatprep.subr.mxu0 0.0
        %1626 = vmatpush1.msra.mxu0 0.0
        %1627 = vmatprep.subr.mxu0 0.0
        %1628 = vmatpush1.msra.mxu0 0.0
        %1629 = vmatprep.subr.mxu0 0.0
        %1630 = vmatpush1.msra.mxu0 0.0
        %1631 = vmatprep.subr.mxu0 0.0
        %1632 = vmatpush1.msra.mxu0 0.0
        %1633 = vmatprep.subr.mxu0 0.0
        %1634 = vmatpush1.msra.mxu0 0.0
        %1635 = vmatprep.subr.mxu0 0.0
        %1636 = vmatpush1.msra.mxu0 0.0
        %1637 = vmatprep.subr.mxu0 0.0
        %1638 = vmatpush1.msra.mxu0 0.0
        %1639 = vmatprep.subr.mxu0 0.0
        %1640 = vmatpush1.msra.mxu0 0.0
        %1641 = vmatprep.subr.mxu0 0.0
        %1642 = vmatpush1.msra.mxu0 0.0
        %1643 = vmatprep.subr.mxu0 0.0
        %1644 = vmatpush1.msra.mxu0 0.0
        %1645 = vmatprep.subr.mxu0 0.0
        %1646 = vmatpush1.msra.mxu0 0.0
        %1647 = vmatprep.subr.mxu0 0.0
        %1648 = vmatpush1.msra.mxu0 0.0
        %1649 = vmatprep.subr.mxu0 0.0
        %1650 = vmatpush1.msra.mxu0 0.0
        %1651 = vmatprep.subr.mxu0 0.0
        %1652 = vmatpush1.msra.mxu0 0.0
        %1653 = vmatprep.subr.mxu0 0.0
        %1654 = vmatpush1.msra.mxu0 0.0
        %1655 = vmatprep.subr.mxu0 0.0
        %1656 = vmatpush1.msra.mxu0 0.0
        %1657 = vmatprep.subr.mxu0 0.0
        %1658 = vmatpush1.msra.mxu0 0.0
        %1659 = vmatprep.subr.mxu0 0.0
        %1660 = vmatpush1.msra.mxu0 0.0
        %1661 = vmatprep.subr.mxu0 0.0
        %1662 = vmatpush1.msra.mxu0 0.0
        %1663 = vmatprep.subr.mxu0 0.0
        %1664 = vmatpush1.msra.mxu0 0.0
        %1665 = vmatprep.subr.mxu0 0.0
        %1666 = vmatpush1.msra.mxu0 0.0
        %1667 = vmatprep.subr.mxu0 0.0
        %1668 = vmatpush1.msra.mxu0 0.0
        %1669 = vmatprep.subr.mxu0 0.0
        %1670 = vmatpush1.msra.mxu0 0.0
        %1671 = vmatprep.subr.mxu0 0.0
        %1672 = vmatpush1.msra.mxu0 0.0
        %1673 = vmatprep.mubr.f32.mxu0 0.0
        %1674 = vmatmul.mubr.f32.gmra.mrb[0].mxu0 %v1607
        %v1675 = vpop.f32.mrb[0].mxu0
        %v1676 = vadd.f32 0.0, %v1675
        %v1677 = vpop.f32.mrb[0].mxu0
        %1678 = vdwg.mxu0
        %v1680 = vsel %vm1458, %v1456, 0
        %1682 = vmatprep.subr.mxu0 0.0
        %1683 = vmatpush1.msra.mxu0 %v1529
        %1684 = vmatprep.subr.mxu0 0.0
        %1685 = vmatpush1.msra.mxu0 0.0
        %1686 = vmatprep.subr.mxu0 0.0
        %1687 = vmatpush1.msra.mxu0 0.0
        %1688 = vmatprep.subr.mxu0 0.0
        %1689 = vmatpush1.msra.mxu0 0.0
        %1690 = vmatprep.subr.mxu0 0.0
        %1691 = vmatpush1.msra.mxu0 0.0
        %1692 = vmatprep.subr.mxu0 0.0
        %1693 = vmatpush1.msra.mxu0 0.0
        %1694 = vmatprep.subr.mxu0 0.0
        %1695 = vmatpush1.msra.mxu0 0.0
        %1696 = vmatprep.subr.mxu0 0.0
        %1697 = vmatpush1.msra.mxu0 0.0
        %1698 = vmatprep.subr.mxu0 0.0
        %1699 = vmatpush1.msra.mxu0 0.0
        %1700 = vmatprep.subr.mxu0 0.0
        %1701 = vmatpush1.msra.mxu0 0.0
        %1702 = vmatprep.subr.mxu0 0.0
        %1703 = vmatpush1.msra.mxu0 0.0
        %1704 = vmatprep.subr.mxu0 0.0
        %1705 = vmatpush1.msra.mxu0 0.0
        %1706 = vmatprep.subr.mxu0 0.0
        %1707 = vmatpush1.msra.mxu0 0.0
        %1708 = vmatprep.subr.mxu0 0.0
        %1709 = vmatpush1.msra.mxu0 0.0
        %1710 = vmatprep.subr.mxu0 0.0
        %1711 = vmatpush1.msra.mxu0 0.0
        %1712 = vmatprep.subr.mxu0 0.0
        %1713 = vmatpush1.msra.mxu0 0.0
        %1714 = vmatprep.subr.mxu0 0.0
        %1715 = vmatpush1.msra.mxu0 0.0
        %1716 = vmatprep.subr.mxu0 0.0
        %1717 = vmatpush1.msra.mxu0 0.0
        %1718 = vmatprep.subr.mxu0 0.0
        %1719 = vmatpush1.msra.mxu0 0.0
        %1720 = vmatprep.subr.mxu0 0.0
        %1721 = vmatpush1.msra.mxu0 0.0
        %1722 = vmatprep.subr.mxu0 0.0
        %1723 = vmatpush1.msra.mxu0 0.0
        %1724 = vmatprep.subr.mxu0 0.0
        %1725 = vmatpush1.msra.mxu0 0.0
        %1726 = vmatprep.subr.mxu0 0.0
        %1727 = vmatpush1.msra.mxu0 0.0
        %1728 = vmatprep.subr.mxu0 0.0
        %1729 = vmatpush1.msra.mxu0 0.0
        %1730 = vmatprep.subr.mxu0 0.0
        %1731 = vmatpush1.msra.mxu0 0.0
        %1732 = vmatprep.subr.mxu0 0.0
        %1733 = vmatpush1.msra.mxu0 0.0
        %1734 = vmatprep.subr.mxu0 0.0
        %1735 = vmatpush1.msra.mxu0 0.0
        %1736 = vmatprep.subr.mxu0 0.0
        %1737 = vmatpush1.msra.mxu0 0.0
        %1738 = vmatprep.subr.mxu0 0.0
        %1739 = vmatpush1.msra.mxu0 0.0
        %1740 = vmatprep.subr.mxu0 0.0
        %1741 = vmatpush1.msra.mxu0 0.0
        %1742 = vmatprep.subr.mxu0 0.0
        %1743 = vmatpush1.msra.mxu0 0.0
        %1744 = vmatprep.subr.mxu0 0.0
        %1745 = vmatpush1.msra.mxu0 0.0
        %1746 = vmatprep.mubr.f32.mxu0 0.0
        %1747 = vmatmul.mubr.f32.gmra.mrb[0].mxu0 %v1680
        %v1748 = vpop.f32.mrb[0].mxu0
        %v1749 = vadd.f32 %v1676, %v1748
        %v1750 = vpop.f32.mrb[0].mxu0
        %1751 = vdwg.mxu0
        %s1752 = scalar_lea.vmem %s2, 144
        %v1753 = vld [vmem:[%s1752] sm:$0xf]
        %s1754 = scalar_lea.vmem %s4, 16
        %v1755 = vld [vmem:[%s1754] sm:$0xff]
        %1756 = vmatprep.subr.mxu0 0.0
        %1757 = vmatpush1.msra.mxu0 %v1755
        %1758 = vmatprep.subr.mxu0 0.0
        %1759 = vmatpush1.msra.mxu0 0.0
        %1760 = vmatprep.subr.mxu0 0.0
        %1761 = vmatpush1.msra.mxu0 0.0
        %1762 = vmatprep.subr.mxu0 0.0
        %1763 = vmatpush1.msra.mxu0 0.0
        %1764 = vmatprep.subr.mxu0 0.0
        %1765 = vmatpush1.msra.mxu0 0.0
        %1766 = vmatprep.subr.mxu0 0.0
        %1767 = vmatpush1.msra.mxu0 0.0
        %1768 = vmatprep.subr.mxu0 0.0
        %1769 = vmatpush1.msra.mxu0 0.0
        %1770 = vmatprep.subr.mxu0 0.0
        %1771 = vmatpush1.msra.mxu0 0.0
        %1772 = vmatprep.subr.mxu0 0.0
        %1773 = vmatpush1.msra.mxu0 0.0
        %1774 = vmatprep.subr.mxu0 0.0
        %1775 = vmatpush1.msra.mxu0 0.0
        %1776 = vmatprep.subr.mxu0 0.0
        %1777 = vmatpush1.msra.mxu0 0.0
        %1778 = vmatprep.subr.mxu0 0.0
        %1779 = vmatpush1.msra.mxu0 0.0
        %1780 = vmatprep.subr.mxu0 0.0
        %1781 = vmatpush1.msra.mxu0 0.0
        %1782 = vmatprep.subr.mxu0 0.0
        %1783 = vmatpush1.msra.mxu0 0.0
        %1784 = vmatprep.subr.mxu0 0.0
        %1785 = vmatpush1.msra.mxu0 0.0
        %1786 = vmatprep.subr.mxu0 0.0
        %1787 = vmatpush1.msra.mxu0 0.0
        %1788 = vmatprep.subr.mxu0 0.0
        %1789 = vmatpush1.msra.mxu0 0.0
        %1790 = vmatprep.subr.mxu0 0.0
        %1791 = vmatpush1.msra.mxu0 0.0
        %1792 = vmatprep.subr.mxu0 0.0
        %1793 = vmatpush1.msra.mxu0 0.0
        %1794 = vmatprep.subr.mxu0 0.0
        %1795 = vmatpush1.msra.mxu0 0.0
        %1796 = vmatprep.subr.mxu0 0.0
        %1797 = vmatpush1.msra.mxu0 0.0
        %1798 = vmatprep.subr.mxu0 0.0
        %1799 = vmatpush1.msra.mxu0 0.0
        %1800 = vmatprep.subr.mxu0 0.0
        %1801 = vmatpush1.msra.mxu0 0.0
        %1802 = vmatprep.subr.mxu0 0.0
        %1803 = vmatpush1.msra.mxu0 0.0
        %1804 = vmatprep.subr.mxu0 0.0
        %1805 = vmatpush1.msra.mxu0 0.0
        %1806 = vmatprep.subr.mxu0 0.0
        %1807 = vmatpush1.msra.mxu0 0.0
        %1808 = vmatprep.subr.mxu0 0.0
        %1809 = vmatpush1.msra.mxu0 0.0
        %1810 = vmatprep.subr.mxu0 0.0
        %1811 = vmatpush1.msra.mxu0 0.0
        %1812 = vmatprep.subr.mxu0 0.0
        %1813 = vmatpush1.msra.mxu0 0.0
        %1814 = vmatprep.subr.mxu0 0.0
        %1815 = vmatpush1.msra.mxu0 0.0
        %1816 = vmatprep.subr.mxu0 0.0
        %1817 = vmatpush1.msra.mxu0 0.0
        %1818 = vmatprep.subr.mxu0 0.0
        %1819 = vmatpush1.msra.mxu0 0.0
        %1820 = vmatprep.mubr.f32.mxu0 0.0
        %1821 = vmatmul.mubr.f32.gmra.mrb[0].mxu0 %v1460
        %v1822 = vpop.f32.mrb[0].mxu0
        %v1823 = vadd.f32 0.0, %v1822
        %v1824 = vpop.f32.mrb[0].mxu0
        %1825 = vdwg.mxu0
        %v1827 = vsel %vm1458, %v1753, 0
        %1829 = vmatprep.subr.mxu0 0.0
        %1830 = vmatpush1.msra.mxu0 %v1823
        %1831 = vmatprep.subr.mxu0 0.0
        %1832 = vmatpush1.msra.mxu0 0.0
        %1833 = vmatprep.subr.mxu0 0.0
        %1834 = vmatpush1.msra.mxu0 0.0
        %1835 = vmatprep.subr.mxu0 0.0
        %1836 = vmatpush1.msra.mxu0 0.0
        %1837 = vmatprep.subr.mxu0 0.0
        %1838 = vmatpush1.msra.mxu0 0.0
        %1839 = vmatprep.subr.mxu0 0.0
        %1840 = vmatpush1.msra.mxu0 0.0
        %1841 = vmatprep.subr.mxu0 0.0
        %1842 = vmatpush1.msra.mxu0 0.0
        %1843 = vmatprep.subr.mxu0 0.0
        %1844 = vmatpush1.msra.mxu0 0.0
        %1845 = vmatprep.subr.mxu0 0.0
        %1846 = vmatpush1.msra.mxu0 0.0
        %1847 = vmatprep.subr.mxu0 0.0
        %1848 = vmatpush1.msra.mxu0 0.0
        %1849 = vmatprep.subr.mxu0 0.0
        %1850 = vmatpush1.msra.mxu0 0.0
        %1851 = vmatprep.subr.mxu0 0.0
        %1852 = vmatpush1.msra.mxu0 0.0
        %1853 = vmatprep.subr.mxu0 0.0
        %1854 = vmatpush1.msra.mxu0 0.0
        %1855 = vmatprep.subr.mxu0 0.0
        %1856 = vmatpush1.msra.mxu0 0.0
        %1857 = vmatprep.subr.mxu0 0.0
        %1858 = vmatpush1.msra.mxu0 0.0
        %1859 = vmatprep.subr.mxu0 0.0
        %1860 = vmatpush1.msra.mxu0 0.0
        %1861 = vmatprep.subr.mxu0 0.0
        %1862 = vmatpush1.msra.mxu0 0.0
        %1863 = vmatprep.subr.mxu0 0.0
        %1864 = vmatpush1.msra.mxu0 0.0
        %1865 = vmatprep.subr.mxu0 0.0
        %1866 = vmatpush1.msra.mxu0 0.0
        %1867 = vmatprep.subr.mxu0 0.0
        %1868 = vmatpush1.msra.mxu0 0.0
        %1869 = vmatprep.subr.mxu0 0.0
        %1870 = vmatpush1.msra.mxu0 0.0
        %1871 = vmatprep.subr.mxu0 0.0
        %1872 = vmatpush1.msra.mxu0 0.0
        %1873 = vmatprep.subr.mxu0 0.0
        %1874 = vmatpush1.msra.mxu0 0.0
        %1875 = vmatprep.subr.mxu0 0.0
        %1876 = vmatpush1.msra.mxu0 0.0
        %1877 = vmatprep.subr.mxu0 0.0
        %1878 = vmatpush1.msra.mxu0 0.0
        %1879 = vmatprep.subr.mxu0 0.0
        %1880 = vmatpush1.msra.mxu0 0.0
        %1881 = vmatprep.subr.mxu0 0.0
        %1882 = vmatpush1.msra.mxu0 0.0
        %1883 = vmatprep.subr.mxu0 0.0
        %1884 = vmatpush1.msra.mxu0 0.0
        %1885 = vmatprep.subr.mxu0 0.0
        %1886 = vmatpush1.msra.mxu0 0.0
        %1887 = vmatprep.subr.mxu0 0.0
        %1888 = vmatpush1.msra.mxu0 0.0
        %1889 = vmatprep.subr.mxu0 0.0
        %1890 = vmatpush1.msra.mxu0 0.0
        %1891 = vmatprep.subr.mxu0 0.0
        %1892 = vmatpush1.msra.mxu0 0.0
        %1893 = vmatprep.mubr.f32.mxu0 0.0
        %1894 = vmatmul.mubr.f32.gmra.mrb[0].mxu0 %v1827
        %v1895 = vpop.f32.mrb[0].mxu0
        %v1896 = vadd.f32 0.0, %v1895
        %v1897 = vpop.f32.mrb[0].mxu0
        %1898 = vdwg.mxu0
        %v1899 = vadd.f32 %v1749, %v1896
        %s1900 = scalar_lea.vmem %s2, 160
        %v1901 = vld [vmem:[%s1900] sm:$0xf]
        %s1902 = scalar_lea.vmem %s4, 24
        %v1903 = vld [vmem:[%s1902] sm:$0xff]
        %1904 = vmatprep.subr.mxu0 0.0
        %1905 = vmatpush1.msra.mxu0 %v1903
        %1906 = vmatprep.subr.mxu0 0.0
        %1907 = vmatpush1.msra.mxu0 0.0
        %1908 = vmatprep.subr.mxu0 0.0
        %1909 = vmatpush1.msra.mxu0 0.0
        %1910 = vmatprep.subr.mxu0 0.0
        %1911 = vmatpush1.msra.mxu0 0.0
        %1912 = vmatprep.subr.mxu0 0.0
        %1913 = vmatpush1.msra.mxu0 0.0
        %1914 = vmatprep.subr.mxu0 0.0
        %1915 = vmatpush1.msra.mxu0 0.0
        %1916 = vmatprep.subr.mxu0 0.0
        %1917 = vmatpush1.msra.mxu0 0.0
        %1918 = vmatprep.subr.mxu0 0.0
        %1919 = vmatpush1.msra.mxu0 0.0
        %1920 = vmatprep.subr.mxu0 0.0
        %1921 = vmatpush1.msra.mxu0 0.0
        %1922 = vmatprep.subr.mxu0 0.0
        %1923 = vmatpush1.msra.mxu0 0.0
        %1924 = vmatprep.subr.mxu0 0.0
        %1925 = vmatpush1.msra.mxu0 0.0
        %1926 = vmatprep.subr.mxu0 0.0
        %1927 = vmatpush1.msra.mxu0 0.0
        %1928 = vmatprep.subr.mxu0 0.0
        %1929 = vmatpush1.msra.mxu0 0.0
        %1930 = vmatprep.subr.mxu0 0.0
        %1931 = vmatpush1.msra.mxu0 0.0
        %1932 = vmatprep.subr.mxu0 0.0
        %1933 = vmatpush1.msra.mxu0 0.0
        %1934 = vmatprep.subr.mxu0 0.0
        %1935 = vmatpush1.msra.mxu0 0.0
        %1936 = vmatprep.subr.mxu0 0.0
        %1937 = vmatpush1.msra.mxu0 0.0
        %1938 = vmatprep.subr.mxu0 0.0
        %1939 = vmatpush1.msra.mxu0 0.0
        %1940 = vmatprep.subr.mxu0 0.0
        %1941 = vmatpush1.msra.mxu0 0.0
        %1942 = vmatprep.subr.mxu0 0.0
        %1943 = vmatpush1.msra.mxu0 0.0
        %1944 = vmatprep.subr.mxu0 0.0
        %1945 = vmatpush1.msra.mxu0 0.0
        %1946 = vmatprep.subr.mxu0 0.0
        %1947 = vmatpush1.msra.mxu0 0.0
        %1948 = vmatprep.subr.mxu0 0.0
        %1949 = vmatpush1.msra.mxu0 0.0
        %1950 = vmatprep.subr.mxu0 0.0
        %1951 = vmatpush1.msra.mxu0 0.0
        %1952 = vmatprep.subr.mxu0 0.0
        %1953 = vmatpush1.msra.mxu0 0.0
        %1954 = vmatprep.subr.mxu0 0.0
        %1955 = vmatpush1.msra.mxu0 0.0
        %1956 = vmatprep.subr.mxu0 0.0
        %1957 = vmatpush1.msra.mxu0 0.0
        %1958 = vmatprep.subr.mxu0 0.0
        %1959 = vmatpush1.msra.mxu0 0.0
        %1960 = vmatprep.subr.mxu0 0.0
        %1961 = vmatpush1.msra.mxu0 0.0
        %1962 = vmatprep.subr.mxu0 0.0
        %1963 = vmatpush1.msra.mxu0 0.0
        %1964 = vmatprep.subr.mxu0 0.0
        %1965 = vmatpush1.msra.mxu0 0.0
        %1966 = vmatprep.subr.mxu0 0.0
        %1967 = vmatpush1.msra.mxu0 0.0
        %1968 = vmatprep.mubr.f32.mxu0 0.0
        %1969 = vmatmul.mubr.f32.gmra.mrb[0].mxu0 %v1460
        %v1970 = vpop.f32.mrb[0].mxu0
        %v1971 = vadd.f32 0.0, %v1970
        %v1972 = vpop.f32.mrb[0].mxu0
        %1973 = vdwg.mxu0
        %v1975 = vsel %vm1458, %v1901, 0
        %1977 = vmatprep.subr.mxu0 0.0
        %1978 = vmatpush1.msra.mxu0 %v1971
        %1979 = vmatprep.subr.mxu0 0.0
        %1980 = vmatpush1.msra.mxu0 0.0
        %1981 = vmatprep.subr.mxu0 0.0
        %1982 = vmatpush1.msra.mxu0 0.0
        %1983 = vmatprep.subr.mxu0 0.0
        %1984 = vmatpush1.msra.mxu0 0.0
        %1985 = vmatprep.subr.mxu0 0.0
        %1986 = vmatpush1.msra.mxu0 0.0
        %1987 = vmatprep.subr.mxu0 0.0
        %1988 = vmatpush1.msra.mxu0 0.0
        %1989 = vmatprep.subr.mxu0 0.0
        %1990 = vmatpush1.msra.mxu0 0.0
        %1991 = vmatprep.subr.mxu0 0.0
        %1992 = vmatpush1.msra.mxu0 0.0
        %1993 = vmatprep.subr.mxu0 0.0
        %1994 = vmatpush1.msra.mxu0 0.0
        %1995 = vmatprep.subr.mxu0 0.0
        %1996 = vmatpush1.msra.mxu0 0.0
        %1997 = vmatprep.subr.mxu0 0.0
        %1998 = vmatpush1.msra.mxu0 0.0
        %1999 = vmatprep.subr.mxu0 0.0
        %2000 = vmatpush1.msra.mxu0 0.0
        %2001 = vmatprep.subr.mxu0 0.0
        %2002 = vmatpush1.msra.mxu0 0.0
        %2003 = vmatprep.subr.mxu0 0.0
        %2004 = vmatpush1.msra.mxu0 0.0
        %2005 = vmatprep.subr.mxu0 0.0
        %2006 = vmatpush1.msra.mxu0 0.0
        %2007 = vmatprep.subr.mxu0 0.0
        %2008 = vmatpush1.msra.mxu0 0.0
        %2009 = vmatprep.subr.mxu0 0.0
        %2010 = vmatpush1.msra.mxu0 0.0
        %2011 = vmatprep.subr.mxu0 0.0
        %2012 = vmatpush1.msra.mxu0 0.0
        %2013 = vmatprep.subr.mxu0 0.0
        %2014 = vmatpush1.msra.mxu0 0.0
        %2015 = vmatprep.subr.mxu0 0.0
        %2016 = vmatpush1.msra.mxu0 0.0
        %2017 = vmatprep.subr.mxu0 0.0
        %2018 = vmatpush1.msra.mxu0 0.0
        %2019 = vmatprep.subr.mxu0 0.0
        %2020 = vmatpush1.msra.mxu0 0.0
        %2021 = vmatprep.subr.mxu0 0.0
        %2022 = vmatpush1.msra.mxu0 0.0
        %2023 = vmatprep.subr.mxu0 0.0
        %2024 = vmatpush1.msra.mxu0 0.0
        %2025 = vmatprep.subr.mxu0 0.0
        %2026 = vmatpush1.msra.mxu0 0.0
        %2027 = vmatprep.subr.mxu0 0.0
        %2028 = vmatpush1.msra.mxu0 0.0
        %2029 = vmatprep.subr.mxu0 0.0
        %2030 = vmatpush1.msra.mxu0 0.0
        %2031 = vmatprep.subr.mxu0 0.0
        %2032 = vmatpush1.msra.mxu0 0.0
        %2033 = vmatprep.subr.mxu0 0.0
        %2034 = vmatpush1.msra.mxu0 0.0
        %2035 = vmatprep.subr.mxu0 0.0
        %2036 = vmatpush1.msra.mxu0 0.0
        %2037 = vmatprep.subr.mxu0 0.0
        %2038 = vmatpush1.msra.mxu0 0.0
        %2039 = vmatprep.subr.mxu0 0.0
        %2040 = vmatpush1.msra.mxu0 0.0
        %2041 = vmatprep.mubr.f32.mxu0 0.0
        %2042 = vmatmul.mubr.f32.gmra.mrb[0].mxu0 %v1975
        %v2043 = vpop.f32.mrb[0].mxu0
        %v2044 = vadd.f32 0.0, %v2043
        %v2045 = vpop.f32.mrb[0].mxu0
        %2046 = vdwg.mxu0
        %v2047 = vadd.f32 %v1899, %v2044
        %s2048 = scalar_lea.vmem %s2, 176
        %v2049 = vld [vmem:[%s2048] sm:$0xf]
        %s2050 = scalar_lea.vmem %s4, 32
        %v2051 = vld [vmem:[%s2050] sm:$0xff]
        %2052 = vmatprep.subr.mxu0 0.0
        %2053 = vmatpush1.msra.mxu0 %v2051
        %2054 = vmatprep.subr.mxu0 0.0
        %2055 = vmatpush1.msra.mxu0 0.0
        %2056 = vmatprep.subr.mxu0 0.0
        %2057 = vmatpush1.msra.mxu0 0.0
        %2058 = vmatprep.subr.mxu0 0.0
        %2059 = vmatpush1.msra.mxu0 0.0
        %2060 = vmatprep.subr.mxu0 0.0
        %2061 = vmatpush1.msra.mxu0 0.0
        %2062 = vmatprep.subr.mxu0 0.0
        %2063 = vmatpush1.msra.mxu0 0.0
        %2064 = vmatprep.subr.mxu0 0.0
        %2065 = vmatpush1.msra.mxu0 0.0
        %2066 = vmatprep.subr.mxu0 0.0
        %2067 = vmatpush1.msra.mxu0 0.0
        %2068 = vmatprep.subr.mxu0 0.0
        %2069 = vmatpush1.msra.mxu0 0.0
        %2070 = vmatprep.subr.mxu0 0.0
        %2071 = vmatpush1.msra.mxu0 0.0
        %2072 = vmatprep.subr.mxu0 0.0
        %2073 = vmatpush1.msra.mxu0 0.0
        %2074 = vmatprep.subr.mxu0 0.0
        %2075 = vmatpush1.msra.mxu0 0.0
        %2076 = vmatprep.subr.mxu0 0.0
        %2077 = vmatpush1.msra.mxu0 0.0
        %2078 = vmatprep.subr.mxu0 0.0
        %2079 = vmatpush1.msra.mxu0 0.0
        %2080 = vmatprep.subr.mxu0 0.0
        %2081 = vmatpush1.msra.mxu0 0.0
        %2082 = vmatprep.subr.mxu0 0.0
        %2083 = vmatpush1.msra.mxu0 0.0
        %2084 = vmatprep.subr.mxu0 0.0
        %2085 = vmatpush1.msra.mxu0 0.0
        %2086 = vmatprep.subr.mxu0 0.0
        %2087 = vmatpush1.msra.mxu0 0.0
        %2088 = vmatprep.subr.mxu0 0.0
        %2089 = vmatpush1.msra.mxu0 0.0
        %2090 = vmatprep.subr.mxu0 0.0
        %2091 = vmatpush1.msra.mxu0 0.0
        %2092 = vmatprep.subr.mxu0 0.0
        %2093 = vmatpush1.msra.mxu0 0.0
        %2094 = vmatprep.subr.mxu0 0.0
        %2095 = vmatpush1.msra.mxu0 0.0
        %2096 = vmatprep.subr.mxu0 0.0
        %2097 = vmatpush1.msra.mxu0 0.0
        %2098 = vmatprep.subr.mxu0 0.0
        %2099 = vmatpush1.msra.mxu0 0.0
        %2100 = vmatprep.subr.mxu0 0.0
        %2101 = vmatpush1.msra.mxu0 0.0
        %2102 = vmatprep.subr.mxu0 0.0
        %2103 = vmatpush1.msra.mxu0 0.0
        %2104 = vmatprep.subr.mxu0 0.0
        %2105 = vmatpush1.msra.mxu0 0.0
        %2106 = vmatprep.subr.mxu0 0.0
        %2107 = vmatpush1.msra.mxu0 0.0
        %2108 = vmatprep.subr.mxu0 0.0
        %2109 = vmatpush1.msra.mxu0 0.0
        %2110 = vmatprep.subr.mxu0 0.0
        %2111 = vmatpush1.msra.mxu0 0.0
        %2112 = vmatprep.subr.mxu0 0.0
        %2113 = vmatpush1.msra.mxu0 0.0
        %2114 = vmatprep.subr.mxu0 0.0
        %2115 = vmatpush1.msra.mxu0 0.0
        %2116 = vmatprep.mubr.f32.mxu0 0.0
        %2117 = vmatmul.mubr.f32.gmra.mrb[0].mxu0 %v1460
        %v2118 = vpop.f32.mrb[0].mxu0
        %v2119 = vadd.f32 0.0, %v2118
        %v2120 = vpop.f32.mrb[0].mxu0
        %2121 = vdwg.mxu0
        %v2123 = vsel %vm1458, %v2049, 0
        %2125 = vmatprep.subr.mxu0 0.0
        %2126 = vmatpush1.msra.mxu0 %v2119
        %2127 = vmatprep.subr.mxu0 0.0
        %2128 = vmatpush1.msra.mxu0 0.0
        %2129 = vmatprep.subr.mxu0 0.0
        %2130 = vmatpush1.msra.mxu0 0.0
        %2131 = vmatprep.subr.mxu0 0.0
        %2132 = vmatpush1.msra.mxu0 0.0
        %2133 = vmatprep.subr.mxu0 0.0
        %2134 = vmatpush1.msra.mxu0 0.0
        %2135 = vmatprep.subr.mxu0 0.0
        %2136 = vmatpush1.msra.mxu0 0.0
        %2137 = vmatprep.subr.mxu0 0.0
        %2138 = vmatpush1.msra.mxu0 0.0
        %2139 = vmatprep.subr.mxu0 0.0
        %2140 = vmatpush1.msra.mxu0 0.0
        %2141 = vmatprep.subr.mxu0 0.0
        %2142 = vmatpush1.msra.mxu0 0.0
        %2143 = vmatprep.subr.mxu0 0.0
        %2144 = vmatpush1.msra.mxu0 0.0
        %2145 = vmatprep.subr.mxu0 0.0
        %2146 = vmatpush1.msra.mxu0 0.0
        %2147 = vmatprep.subr.mxu0 0.0
        %2148 = vmatpush1.msra.mxu0 0.0
        %2149 = vmatprep.subr.mxu0 0.0
        %2150 = vmatpush1.msra.mxu0 0.0
        %2151 = vmatprep.subr.mxu0 0.0
        %2152 = vmatpush1.msra.mxu0 0.0
        %2153 = vmatprep.subr.mxu0 0.0
        %2154 = vmatpush1.msra.mxu0 0.0
        %2155 = vmatprep.subr.mxu0 0.0
        %2156 = vmatpush1.msra.mxu0 0.0
        %2157 = vmatprep.subr.mxu0 0.0
        %2158 = vmatpush1.msra.mxu0 0.0
        %2159 = vmatprep.subr.mxu0 0.0
        %2160 = vmatpush1.msra.mxu0 0.0
        %2161 = vmatprep.subr.mxu0 0.0
        %2162 = vmatpush1.msra.mxu0 0.0
        %2163 = vmatprep.subr.mxu0 0.0
        %2164 = vmatpush1.msra.mxu0 0.0
        %2165 = vmatprep.subr.mxu0 0.0
        %2166 = vmatpush1.msra.mxu0 0.0
        %2167 = vmatprep.subr.mxu0 0.0
        %2168 = vmatpush1.msra.mxu0 0.0
        %2169 = vmatprep.subr.mxu0 0.0
        %2170 = vmatpush1.msra.mxu0 0.0
        %2171 = vmatprep.subr.mxu0 0.0
        %2172 = vmatpush1.msra.mxu0 0.0
        %2173 = vmatprep.subr.mxu0 0.0
        %2174 = vmatpush1.msra.mxu0 0.0
        %2175 = vmatprep.subr.mxu0 0.0
        %2176 = vmatpush1.msra.mxu0 0.0
        %2177 = vmatprep.subr.mxu0 0.0
        %2178 = vmatpush1.msra.mxu0 0.0
        %2179 = vmatprep.subr.mxu0 0.0
        %2180 = vmatpush1.msra.mxu0 0.0
        %2181 = vmatprep.subr.mxu0 0.0
        %2182 = vmatpush1.msra.mxu0 0.0
        %2183 = vmatprep.subr.mxu0 0.0
        %2184 = vmatpush1.msra.mxu0 0.0
        %2185 = vmatprep.subr.mxu0 0.0
        %2186 = vmatpush1.msra.mxu0 0.0
        %2187 = vmatprep.subr.mxu0 0.0
        %2188 = vmatpush1.msra.mxu0 0.0
        %2189 = vmatprep.mubr.f32.mxu0 0.0
        %2190 = vmatmul.mubr.f32.gmra.mrb[0].mxu0 %v2123
        %v2191 = vpop.f32.mrb[0].mxu0
        %v2192 = vadd.f32 0.0, %v2191
        %v2193 = vpop.f32.mrb[0].mxu0
        %2194 = vdwg.mxu0
        %v2195 = vadd.f32 %v2047, %v2192
        %s2196 = sld [smem:[#allocation2 + $0x2]]
        %v2197 = vstv %s2196
        %v2198 = vadd.f32 %v2195, %v2197
        %v2199 = vmax.f32 %v2198, 0.0
        %s2200 = scalar_lea.vmem %s2, 192
        %v2201 = vld [vmem:[%s2200] sm:$0x3]
        %s2202 = scalar_lea.vmem %s4, 40
        %v2203 = vld [vmem:[%s2202] sm:$0xf]
        %vm2204 = vcmask 31744
        %v2206 = vsel %vm2204, %v2199, 0
        %vm2208 = vcmask 1043456
        %v2210 = vsel %vm2208, %v2203, 0
        %2212 = vmatprep.subr.mxu0 0.0
        %2213 = vmatpush1.msra.mxu0 %v2210
        %2214 = vmatprep.subr.mxu0 0.0
        %2215 = vmatpush1.msra.mxu0 0.0
        %2216 = vmatprep.subr.mxu0 0.0
        %2217 = vmatpush1.msra.mxu0 0.0
        %2218 = vmatprep.subr.mxu0 0.0
        %2219 = vmatpush1.msra.mxu0 0.0
        %2220 = vmatprep.subr.mxu0 0.0
        %2221 = vmatpush1.msra.mxu0 0.0
        %2222 = vmatprep.subr.mxu0 0.0
        %2223 = vmatpush1.msra.mxu0 0.0
        %2224 = vmatprep.subr.mxu0 0.0
        %2225 = vmatpush1.msra.mxu0 0.0
        %2226 = vmatprep.subr.mxu0 0.0
        %2227 = vmatpush1.msra.mxu0 0.0
        %2228 = vmatprep.subr.mxu0 0.0
        %2229 = vmatpush1.msra.mxu0 0.0
        %2230 = vmatprep.subr.mxu0 0.0
        %2231 = vmatpush1.msra.mxu0 0.0
        %2232 = vmatprep.subr.mxu0 0.0
        %2233 = vmatpush1.msra.mxu0 0.0
        %2234 = vmatprep.subr.mxu0 0.0
        %2235 = vmatpush1.msra.mxu0 0.0
        %2236 = vmatprep.subr.mxu0 0.0
        %2237 = vmatpush1.msra.mxu0 0.0
        %2238 = vmatprep.subr.mxu0 0.0
        %2239 = vmatpush1.msra.mxu0 0.0
        %2240 = vmatprep.subr.mxu0 0.0
        %2241 = vmatpush1.msra.mxu0 0.0
        %2242 = vmatprep.subr.mxu0 0.0
        %2243 = vmatpush1.msra.mxu0 0.0
        %2244 = vmatprep.subr.mxu0 0.0
        %2245 = vmatpush1.msra.mxu0 0.0
        %2246 = vmatprep.subr.mxu0 0.0
        %2247 = vmatpush1.msra.mxu0 0.0
        %2248 = vmatprep.subr.mxu0 0.0
        %2249 = vmatpush1.msra.mxu0 0.0
        %2250 = vmatprep.subr.mxu0 0.0
        %2251 = vmatpush1.msra.mxu0 0.0
        %2252 = vmatprep.subr.mxu0 0.0
        %2253 = vmatpush1.msra.mxu0 0.0
        %2254 = vmatprep.subr.mxu0 0.0
        %2255 = vmatpush1.msra.mxu0 0.0
        %2256 = vmatprep.subr.mxu0 0.0
        %2257 = vmatpush1.msra.mxu0 0.0
        %2258 = vmatprep.subr.mxu0 0.0
        %2259 = vmatpush1.msra.mxu0 0.0
        %2260 = vmatprep.subr.mxu0 0.0
        %2261 = vmatpush1.msra.mxu0 0.0
        %2262 = vmatprep.subr.mxu0 0.0
        %2263 = vmatpush1.msra.mxu0 0.0
        %2264 = vmatprep.subr.mxu0 0.0
        %2265 = vmatpush1.msra.mxu0 0.0
        %2266 = vmatprep.subr.mxu0 0.0
        %2267 = vmatpush1.msra.mxu0 0.0
        %2268 = vmatprep.subr.mxu0 0.0
        %2269 = vmatpush1.msra.mxu0 0.0
        %2270 = vmatprep.subr.mxu0 0.0
        %2271 = vmatpush1.msra.mxu0 0.0
        %2272 = vmatprep.subr.mxu0 0.0
        %2273 = vmatpush1.msra.mxu0 0.0
        %2274 = vmatprep.subr.mxu0 0.0
        %2275 = vmatpush1.msra.mxu0 0.0
        %2276 = vmatprep.mubr.f32.mxu0 0.0
        %2277 = vmatmul.mubr.f32.gmra.mrb[0].mxu0 %v2206
        %v2278 = vpop.f32.mrb[0].mxu0
        %v2279 = vadd.f32 0.0, %v2278
        %v2280 = vpop.f32.mrb[0].mxu0
        %2281 = vdwg.mxu0
        %s2282 = scalar_lea.vmem %s2, 208
        %v2283 = vld [vmem:[%s2282] sm:$0x3]
        %s2284 = scalar_lea.vmem %s4, 48
        %v2285 = vld [vmem:[%s2284] sm:$0xf]
        %v2287 = vsel %vm2208, %v2285, 0
        %2289 = vmatprep.subr.mxu0 0.0
        %2290 = vmatpush1.msra.mxu0 %v2287
        %2291 = vmatprep.subr.mxu0 0.0
        %2292 = vmatpush1.msra.mxu0 0.0
        %2293 = vmatprep.subr.mxu0 0.0
        %2294 = vmatpush1.msra.mxu0 0.0
        %2295 = vmatprep.subr.mxu0 0.0
        %2296 = vmatpush1.msra.mxu0 0.0
        %2297 = vmatprep.subr.mxu0 0.0
        %2298 = vmatpush1.msra.mxu0 0.0
        %2299 = vmatprep.subr.mxu0 0.0
        %2300 = vmatpush1.msra.mxu0 0.0
        %2301 = vmatprep.subr.mxu0 0.0
        %2302 = vmatpush1.msra.mxu0 0.0
        %2303 = vmatprep.subr.mxu0 0.0
        %2304 = vmatpush1.msra.mxu0 0.0
        %2305 = vmatprep.subr.mxu0 0.0
        %2306 = vmatpush1.msra.mxu0 0.0
        %2307 = vmatprep.subr.mxu0 0.0
        %2308 = vmatpush1.msra.mxu0 0.0
        %2309 = vmatprep.subr.mxu0 0.0
        %2310 = vmatpush1.msra.mxu0 0.0
        %2311 = vmatprep.subr.mxu0 0.0
        %2312 = vmatpush1.msra.mxu0 0.0
        %2313 = vmatprep.subr.mxu0 0.0
        %2314 = vmatpush1.msra.mxu0 0.0
        %2315 = vmatprep.subr.mxu0 0.0
        %2316 = vmatpush1.msra.mxu0 0.0
        %2317 = vmatprep.subr.mxu0 0.0
        %2318 = vmatpush1.msra.mxu0 0.0
        %2319 = vmatprep.subr.mxu0 0.0
        %2320 = vmatpush1.msra.mxu0 0.0
        %2321 = vmatprep.subr.mxu0 0.0
        %2322 = vmatpush1.msra.mxu0 0.0
        %2323 = vmatprep.subr.mxu0 0.0
        %2324 = vmatpush1.msra.mxu0 0.0
        %2325 = vmatprep.subr.mxu0 0.0
        %2326 = vmatpush1.msra.mxu0 0.0
        %2327 = vmatprep.subr.mxu0 0.0
        %2328 = vmatpush1.msra.mxu0 0.0
        %2329 = vmatprep.subr.mxu0 0.0
        %2330 = vmatpush1.msra.mxu0 0.0
        %2331 = vmatprep.subr.mxu0 0.0
        %2332 = vmatpush1.msra.mxu0 0.0
        %2333 = vmatprep.subr.mxu0 0.0
        %2334 = vmatpush1.msra.mxu0 0.0
        %2335 = vmatprep.subr.mxu0 0.0
        %2336 = vmatpush1.msra.mxu0 0.0
        %2337 = vmatprep.subr.mxu0 0.0
        %2338 = vmatpush1.msra.mxu0 0.0
        %2339 = vmatprep.subr.mxu0 0.0
        %2340 = vmatpush1.msra.mxu0 0.0
        %2341 = vmatprep.subr.mxu0 0.0
        %2342 = vmatpush1.msra.mxu0 0.0
        %2343 = vmatprep.subr.mxu0 0.0
        %2344 = vmatpush1.msra.mxu0 0.0
        %2345 = vmatprep.subr.mxu0 0.0
        %2346 = vmatpush1.msra.mxu0 0.0
        %2347 = vmatprep.subr.mxu0 0.0
        %2348 = vmatpush1.msra.mxu0 0.0
        %2349 = vmatprep.subr.mxu0 0.0
        %2350 = vmatpush1.msra.mxu0 0.0
        %2351 = vmatprep.subr.mxu0 0.0
        %2352 = vmatpush1.msra.mxu0 0.0
        %2353 = vmatprep.mubr.f32.mxu0 0.0
        %2354 = vmatmul.mubr.f32.gmra.mrb[0].mxu0 %v2206
        %v2355 = vpop.f32.mrb[0].mxu0
        %v2356 = vadd.f32 0.0, %v2355
        %v2357 = vpop.f32.mrb[0].mxu0
        %2358 = vdwg.mxu0
        %v2360 = vsel %vm2204, %v2283, 0
        %v2363 = vsel %vm2208, %v2356, 0
        %2365 = vmatprep.subr.mxu0 0.0
        %2366 = vmatpush1.msra.mxu0 %v2363
        %2367 = vmatprep.subr.mxu0 0.0
        %2368 = vmatpush1.msra.mxu0 0.0
        %2369 = vmatprep.subr.mxu0 0.0
        %2370 = vmatpush1.msra.mxu0 0.0
        %2371 = vmatprep.subr.mxu0 0.0
        %2372 = vmatpush1.msra.mxu0 0.0
        %2373 = vmatprep.subr.mxu0 0.0
        %2374 = vmatpush1.msra.mxu0 0.0
        %2375 = vmatprep.subr.mxu0 0.0
        %2376 = vmatpush1.msra.mxu0 0.0
        %2377 = vmatprep.subr.mxu0 0.0
        %2378 = vmatpush1.msra.mxu0 0.0
        %2379 = vmatprep.subr.mxu0 0.0
        %2380 = vmatpush1.msra.mxu0 0.0
        %2381 = vmatprep.subr.mxu0 0.0
        %2382 = vmatpush1.msra.mxu0 0.0
        %2383 = vmatprep.subr.mxu0 0.0
        %2384 = vmatpush1.msra.mxu0 0.0
        %2385 = vmatprep.subr.mxu0 0.0
        %2386 = vmatpush1.msra.mxu0 0.0
        %2387 = vmatprep.subr.mxu0 0.0
        %2388 = vmatpush1.msra.mxu0 0.0
        %2389 = vmatprep.subr.mxu0 0.0
        %2390 = vmatpush1.msra.mxu0 0.0
        %2391 = vmatprep.subr.mxu0 0.0
        %2392 = vmatpush1.msra.mxu0 0.0
        %2393 = vmatprep.subr.mxu0 0.0
        %2394 = vmatpush1.msra.mxu0 0.0
        %2395 = vmatprep.subr.mxu0 0.0
        %2396 = vmatpush1.msra.mxu0 0.0
        %2397 = vmatprep.subr.mxu0 0.0
        %2398 = vmatpush1.msra.mxu0 0.0
        %2399 = vmatprep.subr.mxu0 0.0
        %2400 = vmatpush1.msra.mxu0 0.0
        %2401 = vmatprep.subr.mxu0 0.0
        %2402 = vmatpush1.msra.mxu0 0.0
        %2403 = vmatprep.subr.mxu0 0.0
        %2404 = vmatpush1.msra.mxu0 0.0
        %2405 = vmatprep.subr.mxu0 0.0
        %2406 = vmatpush1.msra.mxu0 0.0
        %2407 = vmatprep.subr.mxu0 0.0
        %2408 = vmatpush1.msra.mxu0 0.0
        %2409 = vmatprep.subr.mxu0 0.0
        %2410 = vmatpush1.msra.mxu0 0.0
        %2411 = vmatprep.subr.mxu0 0.0
        %2412 = vmatpush1.msra.mxu0 0.0
        %2413 = vmatprep.subr.mxu0 0.0
        %2414 = vmatpush1.msra.mxu0 0.0
        %2415 = vmatprep.subr.mxu0 0.0
        %2416 = vmatpush1.msra.mxu0 0.0
        %2417 = vmatprep.subr.mxu0 0.0
        %2418 = vmatpush1.msra.mxu0 0.0
        %2419 = vmatprep.subr.mxu0 0.0
        %2420 = vmatpush1.msra.mxu0 0.0
        %2421 = vmatprep.subr.mxu0 0.0
        %2422 = vmatpush1.msra.mxu0 0.0
        %2423 = vmatprep.subr.mxu0 0.0
        %2424 = vmatpush1.msra.mxu0 0.0
        %2425 = vmatprep.subr.mxu0 0.0
        %2426 = vmatpush1.msra.mxu0 0.0
        %2427 = vmatprep.subr.mxu0 0.0
        %2428 = vmatpush1.msra.mxu0 0.0
        %2429 = vmatprep.mubr.f32.mxu0 0.0
        %2430 = vmatmul.mubr.f32.gmra.mrb[0].mxu0 %v2360
        %v2431 = vpop.f32.mrb[0].mxu0
        %v2432 = vadd.f32 0.0, %v2431
        %v2433 = vpop.f32.mrb[0].mxu0
        %2434 = vdwg.mxu0
        %v2436 = vsel %vm2204, %v2201, 0
        %v2439 = vsel %vm2208, %v2279, 0
        %2441 = vmatprep.subr.mxu0 0.0
        %2442 = vmatpush1.msra.mxu0 %v2439
        %2443 = vmatprep.subr.mxu0 0.0
        %2444 = vmatpush1.msra.mxu0 0.0
        %2445 = vmatprep.subr.mxu0 0.0
        %2446 = vmatpush1.msra.mxu0 0.0
        %2447 = vmatprep.subr.mxu0 0.0
        %2448 = vmatpush1.msra.mxu0 0.0
        %2449 = vmatprep.subr.mxu0 0.0
        %2450 = vmatpush1.msra.mxu0 0.0
        %2451 = vmatprep.subr.mxu0 0.0
        %2452 = vmatpush1.msra.mxu0 0.0
        %2453 = vmatprep.subr.mxu0 0.0
        %2454 = vmatpush1.msra.mxu0 0.0
        %2455 = vmatprep.subr.mxu0 0.0
        %2456 = vmatpush1.msra.mxu0 0.0
        %2457 = vmatprep.subr.mxu0 0.0
        %2458 = vmatpush1.msra.mxu0 0.0
        %2459 = vmatprep.subr.mxu0 0.0
        %2460 = vmatpush1.msra.mxu0 0.0
        %2461 = vmatprep.subr.mxu0 0.0
        %2462 = vmatpush1.msra.mxu0 0.0
        %2463 = vmatprep.subr.mxu0 0.0
        %2464 = vmatpush1.msra.mxu0 0.0
        %2465 = vmatprep.subr.mxu0 0.0
        %2466 = vmatpush1.msra.mxu0 0.0
        %2467 = vmatprep.subr.mxu0 0.0
        %2468 = vmatpush1.msra.mxu0 0.0
        %2469 = vmatprep.subr.mxu0 0.0
        %2470 = vmatpush1.msra.mxu0 0.0
        %2471 = vmatprep.subr.mxu0 0.0
        %2472 = vmatpush1.msra.mxu0 0.0
        %2473 = vmatprep.subr.mxu0 0.0
        %2474 = vmatpush1.msra.mxu0 0.0
        %2475 = vmatprep.subr.mxu0 0.0
        %2476 = vmatpush1.msra.mxu0 0.0
        %2477 = vmatprep.subr.mxu0 0.0
        %2478 = vmatpush1.msra.mxu0 0.0
        %2479 = vmatprep.subr.mxu0 0.0
        %2480 = vmatpush1.msra.mxu0 0.0
        %2481 = vmatprep.subr.mxu0 0.0
        %2482 = vmatpush1.msra.mxu0 0.0
        %2483 = vmatprep.subr.mxu0 0.0
        %2484 = vmatpush1.msra.mxu0 0.0
        %2485 = vmatprep.subr.mxu0 0.0
        %2486 = vmatpush1.msra.mxu0 0.0
        %2487 = vmatprep.subr.mxu0 0.0
        %2488 = vmatpush1.msra.mxu0 0.0
        %2489 = vmatprep.subr.mxu0 0.0
        %2490 = vmatpush1.msra.mxu0 0.0
        %2491 = vmatprep.subr.mxu0 0.0
        %2492 = vmatpush1.msra.mxu0 0.0
        %2493 = vmatprep.subr.mxu0 0.0
        %2494 = vmatpush1.msra.mxu0 0.0
        %2495 = vmatprep.subr.mxu0 0.0
        %2496 = vmatpush1.msra.mxu0 0.0
        %2497 = vmatprep.subr.mxu0 0.0
        %2498 = vmatpush1.msra.mxu0 0.0
        %2499 = vmatprep.subr.mxu0 0.0
        %2500 = vmatpush1.msra.mxu0 0.0
        %2501 = vmatprep.subr.mxu0 0.0
        %2502 = vmatpush1.msra.mxu0 0.0
        %2503 = vmatprep.subr.mxu0 0.0
        %2504 = vmatpush1.msra.mxu0 0.0
        %2505 = vmatprep.mubr.f32.mxu0 0.0
        %2506 = vmatmul.mubr.f32.gmra.mrb[0].mxu0 %v2436
        %v2507 = vpop.f32.mrb[0].mxu0
        %v2508 = vadd.f32 %v2432, %v2507
        %v2509 = vpop.f32.mrb[0].mxu0
        %2510 = vdwg.mxu0
        %s2511 = scalar_lea.vmem %s2, 224
        %v2512 = vld [vmem:[%s2511] sm:$0x3]
        %s2513 = scalar_lea.vmem %s4, 56
        %v2514 = vld [vmem:[%s2513] sm:$0xf]
        %v2516 = vsel %vm2208, %v2514, 0
        %2518 = vmatprep.subr.mxu0 0.0
        %2519 = vmatpush1.msra.mxu0 %v2516
        %2520 = vmatprep.subr.mxu0 0.0
        %2521 = vmatpush1.msra.mxu0 0.0
        %2522 = vmatprep.subr.mxu0 0.0
        %2523 = vmatpush1.msra.mxu0 0.0
        %2524 = vmatprep.subr.mxu0 0.0
        %2525 = vmatpush1.msra.mxu0 0.0
        %2526 = vmatprep.subr.mxu0 0.0
        %2527 = vmatpush1.msra.mxu0 0.0
        %2528 = vmatprep.subr.mxu0 0.0
        %2529 = vmatpush1.msra.mxu0 0.0
        %2530 = vmatprep.subr.mxu0 0.0
        %2531 = vmatpush1.msra.mxu0 0.0
        %2532 = vmatprep.subr.mxu0 0.0
        %2533 = vmatpush1.msra.mxu0 0.0
        %2534 = vmatprep.subr.mxu0 0.0
        %2535 = vmatpush1.msra.mxu0 0.0
        %2536 = vmatprep.subr.mxu0 0.0
        %2537 = vmatpush1.msra.mxu0 0.0
        %2538 = vmatprep.subr.mxu0 0.0
        %2539 = vmatpush1.msra.mxu0 0.0
        %2540 = vmatprep.subr.mxu0 0.0
        %2541 = vmatpush1.msra.mxu0 0.0
        %2542 = vmatprep.subr.mxu0 0.0
        %2543 = vmatpush1.msra.mxu0 0.0
        %2544 = vmatprep.subr.mxu0 0.0
        %2545 = vmatpush1.msra.mxu0 0.0
        %2546 = vmatprep.subr.mxu0 0.0
        %2547 = vmatpush1.msra.mxu0 0.0
        %2548 = vmatprep.subr.mxu0 0.0
        %2549 = vmatpush1.msra.mxu0 0.0
        %2550 = vmatprep.subr.mxu0 0.0
        %2551 = vmatpush1.msra.mxu0 0.0
        %2552 = vmatprep.subr.mxu0 0.0
        %2553 = vmatpush1.msra.mxu0 0.0
        %2554 = vmatprep.subr.mxu0 0.0
        %2555 = vmatpush1.msra.mxu0 0.0
        %2556 = vmatprep.subr.mxu0 0.0
        %2557 = vmatpush1.msra.mxu0 0.0
        %2558 = vmatprep.subr.mxu0 0.0
        %2559 = vmatpush1.msra.mxu0 0.0
        %2560 = vmatprep.subr.mxu0 0.0
        %2561 = vmatpush1.msra.mxu0 0.0
        %2562 = vmatprep.subr.mxu0 0.0
        %2563 = vmatpush1.msra.mxu0 0.0
        %2564 = vmatprep.subr.mxu0 0.0
        %2565 = vmatpush1.msra.mxu0 0.0
        %2566 = vmatprep.subr.mxu0 0.0
        %2567 = vmatpush1.msra.mxu0 0.0
        %2568 = vmatprep.subr.mxu0 0.0
        %2569 = vmatpush1.msra.mxu0 0.0
        %2570 = vmatprep.subr.mxu0 0.0
        %2571 = vmatpush1.msra.mxu0 0.0
        %2572 = vmatprep.subr.mxu0 0.0
        %2573 = vmatpush1.msra.mxu0 0.0
        %2574 = vmatprep.subr.mxu0 0.0
        %2575 = vmatpush1.msra.mxu0 0.0
        %2576 = vmatprep.subr.mxu0 0.0
        %2577 = vmatpush1.msra.mxu0 0.0
        %2578 = vmatprep.subr.mxu0 0.0
        %2579 = vmatpush1.msra.mxu0 0.0
        %2580 = vmatprep.subr.mxu0 0.0
        %2581 = vmatpush1.msra.mxu0 0.0
        %2582 = vmatprep.mubr.f32.mxu0 0.0
        %2583 = vmatmul.mubr.f32.gmra.mrb[0].mxu0 %v2206
        %v2584 = vpop.f32.mrb[0].mxu0
        %v2585 = vadd.f32 0.0, %v2584
        %v2586 = vpop.f32.mrb[0].mxu0
        %2587 = vdwg.mxu0
        %v2589 = vsel %vm2204, %v2512, 0
        %v2592 = vsel %vm2208, %v2585, 0
        %2594 = vmatprep.subr.mxu0 0.0
        %2595 = vmatpush1.msra.mxu0 %v2592
        %2596 = vmatprep.subr.mxu0 0.0
        %2597 = vmatpush1.msra.mxu0 0.0
        %2598 = vmatprep.subr.mxu0 0.0
        %2599 = vmatpush1.msra.mxu0 0.0
        %2600 = vmatprep.subr.mxu0 0.0
        %2601 = vmatpush1.msra.mxu0 0.0
        %2602 = vmatprep.subr.mxu0 0.0
        %2603 = vmatpush1.msra.mxu0 0.0
        %2604 = vmatprep.subr.mxu0 0.0
        %2605 = vmatpush1.msra.mxu0 0.0
        %2606 = vmatprep.subr.mxu0 0.0
        %2607 = vmatpush1.msra.mxu0 0.0
        %2608 = vmatprep.subr.mxu0 0.0
        %2609 = vmatpush1.msra.mxu0 0.0
        %2610 = vmatprep.subr.mxu0 0.0
        %2611 = vmatpush1.msra.mxu0 0.0
        %2612 = vmatprep.subr.mxu0 0.0
        %2613 = vmatpush1.msra.mxu0 0.0
        %2614 = vmatprep.subr.mxu0 0.0
        %2615 = vmatpush1.msra.mxu0 0.0
        %2616 = vmatprep.subr.mxu0 0.0
        %2617 = vmatpush1.msra.mxu0 0.0
        %2618 = vmatprep.subr.mxu0 0.0
        %2619 = vmatpush1.msra.mxu0 0.0
        %2620 = vmatprep.subr.mxu0 0.0
        %2621 = vmatpush1.msra.mxu0 0.0
        %2622 = vmatprep.subr.mxu0 0.0
        %2623 = vmatpush1.msra.mxu0 0.0
        %2624 = vmatprep.subr.mxu0 0.0
        %2625 = vmatpush1.msra.mxu0 0.0
        %2626 = vmatprep.subr.mxu0 0.0
        %2627 = vmatpush1.msra.mxu0 0.0
        %2628 = vmatprep.subr.mxu0 0.0
        %2629 = vmatpush1.msra.mxu0 0.0
        %2630 = vmatprep.subr.mxu0 0.0
        %2631 = vmatpush1.msra.mxu0 0.0
        %2632 = vmatprep.subr.mxu0 0.0
        %2633 = vmatpush1.msra.mxu0 0.0
        %2634 = vmatprep.subr.mxu0 0.0
        %2635 = vmatpush1.msra.mxu0 0.0
        %2636 = vmatprep.subr.mxu0 0.0
        %2637 = vmatpush1.msra.mxu0 0.0
        %2638 = vmatprep.subr.mxu0 0.0
        %2639 = vmatpush1.msra.mxu0 0.0
        %2640 = vmatprep.subr.mxu0 0.0
        %2641 = vmatpush1.msra.mxu0 0.0
        %2642 = vmatprep.subr.mxu0 0.0
        %2643 = vmatpush1.msra.mxu0 0.0
        %2644 = vmatprep.subr.mxu0 0.0
        %2645 = vmatpush1.msra.mxu0 0.0
        %2646 = vmatprep.subr.mxu0 0.0
        %2647 = vmatpush1.msra.mxu0 0.0
        %2648 = vmatprep.subr.mxu0 0.0
        %2649 = vmatpush1.msra.mxu0 0.0
        %2650 = vmatprep.subr.mxu0 0.0
        %2651 = vmatpush1.msra.mxu0 0.0
        %2652 = vmatprep.subr.mxu0 0.0
        %2653 = vmatpush1.msra.mxu0 0.0
        %2654 = vmatprep.subr.mxu0 0.0
        %2655 = vmatpush1.msra.mxu0 0.0
        %2656 = vmatprep.subr.mxu0 0.0
        %2657 = vmatpush1.msra.mxu0 0.0
        %2658 = vmatprep.mubr.f32.mxu0 0.0
        %2659 = vmatmul.mubr.f32.gmra.mrb[0].mxu0 %v2589
        %v2660 = vpop.f32.mrb[0].mxu0
        %v2661 = vadd.f32 0.0, %v2660
        %v2662 = vpop.f32.mrb[0].mxu0
        %2663 = vdwg.mxu0
        %v2664 = vadd.f32 %v2508, %v2661
        %s2665 = sld [smem:[#allocation2 + $0x3]]
        %v2666 = vstv %s2665
        %v2667 = vadd.f32 %v2664, %v2666
        %v2668 = vmax.f32 %v2667, 0.0
        %s2669 = scalar_lea.vmem %s2, 240
        %v2670 = vld [vmem:[%s2669] sm:$0x3]
        %s2671 = scalar_lea.vmem %s4, 64
        %v2672 = vld [vmem:[%s2671] sm:$0x3]
        %vm2673 = vcmask 15360
        %v2675 = vsel %vm2673, %v2668, 0
        %vm2677 = vcmask 1041408
        %v2679 = vsel %vm2677, %v2672, 0
        %2681 = vmatprep.subr.mxu0 0.0
        %2682 = vmatpush1.msra.mxu0 %v2679
        %2683 = vmatprep.subr.mxu0 0.0
        %2684 = vmatpush1.msra.mxu0 0.0
        %2685 = vmatprep.subr.mxu0 0.0
        %2686 = vmatpush1.msra.mxu0 0.0
        %2687 = vmatprep.subr.mxu0 0.0
        %2688 = vmatpush1.msra.mxu0 0.0
        %2689 = vmatprep.subr.mxu0 0.0
        %2690 = vmatpush1.msra.mxu0 0.0
        %2691 = vmatprep.subr.mxu0 0.0
        %2692 = vmatpush1.msra.mxu0 0.0
        %2693 = vmatprep.subr.mxu0 0.0
        %2694 = vmatpush1.msra.mxu0 0.0
        %2695 = vmatprep.subr.mxu0 0.0
        %2696 = vmatpush1.msra.mxu0 0.0
        %2697 = vmatprep.subr.mxu0 0.0
        %2698 = vmatpush1.msra.mxu0 0.0
        %2699 = vmatprep.subr.mxu0 0.0
        %2700 = vmatpush1.msra.mxu0 0.0
        %2701 = vmatprep.subr.mxu0 0.0
        %2702 = vmatpush1.msra.mxu0 0.0
        %2703 = vmatprep.subr.mxu0 0.0
        %2704 = vmatpush1.msra.mxu0 0.0
        %2705 = vmatprep.subr.mxu0 0.0
        %2706 = vmatpush1.msra.mxu0 0.0
        %2707 = vmatprep.subr.mxu0 0.0
        %2708 = vmatpush1.msra.mxu0 0.0
        %2709 = vmatprep.subr.mxu0 0.0
        %2710 = vmatpush1.msra.mxu0 0.0
        %2711 = vmatprep.subr.mxu0 0.0
        %2712 = vmatpush1.msra.mxu0 0.0
        %2713 = vmatprep.subr.mxu0 0.0
        %2714 = vmatpush1.msra.mxu0 0.0
        %2715 = vmatprep.subr.mxu0 0.0
        %2716 = vmatpush1.msra.mxu0 0.0
        %2717 = vmatprep.subr.mxu0 0.0
        %2718 = vmatpush1.msra.mxu0 0.0
        %2719 = vmatprep.subr.mxu0 0.0
        %2720 = vmatpush1.msra.mxu0 0.0
        %2721 = vmatprep.subr.mxu0 0.0
        %2722 = vmatpush1.msra.mxu0 0.0
        %2723 = vmatprep.subr.mxu0 0.0
        %2724 = vmatpush1.msra.mxu0 0.0
        %2725 = vmatprep.subr.mxu0 0.0
        %2726 = vmatpush1.msra.mxu0 0.0
        %2727 = vmatprep.subr.mxu0 0.0
        %2728 = vmatpush1.msra.mxu0 0.0
        %2729 = vmatprep.subr.mxu0 0.0
        %2730 = vmatpush1.msra.mxu0 0.0
        %2731 = vmatprep.subr.mxu0 0.0
        %2732 = vmatpush1.msra.mxu0 0.0
        %2733 = vmatprep.subr.mxu0 0.0
        %2734 = vmatpush1.msra.mxu0 0.0
        %2735 = vmatprep.subr.mxu0 0.0
        %2736 = vmatpush1.msra.mxu0 0.0
        %2737 = vmatprep.subr.mxu0 0.0
        %2738 = vmatpush1.msra.mxu0 0.0
        %2739 = vmatprep.subr.mxu0 0.0
        %2740 = vmatpush1.msra.mxu0 0.0
        %2741 = vmatprep.subr.mxu0 0.0
        %2742 = vmatpush1.msra.mxu0 0.0
        %2743 = vmatprep.subr.mxu0 0.0
        %2744 = vmatpush1.msra.mxu0 0.0
        %2745 = vmatprep.mubr.f32.mxu0 0.0
        %2746 = vmatmul.mubr.f32.gmra.mrb[0].mxu0 %v2675
        %v2747 = vpop.f32.mrb[0].mxu0
        %v2748 = vadd.f32 0.0, %v2747
        %v2749 = vpop.f32.mrb[0].mxu0
        %2750 = vdwg.mxu0
        %s2751 = scalar_lea.vmem %s2, 256
        %v2752 = vld [vmem:[%s2751] sm:$0x3]
        %s2753 = scalar_lea.vmem %s4, 72
        %v2754 = vld [vmem:[%s2753] sm:$0x3]
        %v2756 = vsel %vm2677, %v2754, 0
        %2758 = vmatprep.subr.mxu0 0.0
        %2759 = vmatpush1.msra.mxu0 %v2756
        %2760 = vmatprep.subr.mxu0 0.0
        %2761 = vmatpush1.msra.mxu0 0.0
        %2762 = vmatprep.subr.mxu0 0.0
        %2763 = vmatpush1.msra.mxu0 0.0
        %2764 = vmatprep.subr.mxu0 0.0
        %2765 = vmatpush1.msra.mxu0 0.0
        %2766 = vmatprep.subr.mxu0 0.0
        %2767 = vmatpush1.msra.mxu0 0.0
        %2768 = vmatprep.subr.mxu0 0.0
        %2769 = vmatpush1.msra.mxu0 0.0
        %2770 = vmatprep.subr.mxu0 0.0
        %2771 = vmatpush1.msra.mxu0 0.0
        %2772 = vmatprep.subr.mxu0 0.0
        %2773 = vmatpush1.msra.mxu0 0.0
        %2774 = vmatprep.subr.mxu0 0.0
        %2775 = vmatpush1.msra.mxu0 0.0
        %2776 = vmatprep.subr.mxu0 0.0
        %2777 = vmatpush1.msra.mxu0 0.0
        %2778 = vmatprep.subr.mxu0 0.0
        %2779 = vmatpush1.msra.mxu0 0.0
        %2780 = vmatprep.subr.mxu0 0.0
        %2781 = vmatpush1.msra.mxu0 0.0
        %2782 = vmatprep.subr.mxu0 0.0
        %2783 = vmatpush1.msra.mxu0 0.0
        %2784 = vmatprep.subr.mxu0 0.0
        %2785 = vmatpush1.msra.mxu0 0.0
        %2786 = vmatprep.subr.mxu0 0.0
        %2787 = vmatpush1.msra.mxu0 0.0
        %2788 = vmatprep.subr.mxu0 0.0
        %2789 = vmatpush1.msra.mxu0 0.0
        %2790 = vmatprep.subr.mxu0 0.0
        %2791 = vmatpush1.msra.mxu0 0.0
        %2792 = vmatprep.subr.mxu0 0.0
        %2793 = vmatpush1.msra.mxu0 0.0
        %2794 = vmatprep.subr.mxu0 0.0
        %2795 = vmatpush1.msra.mxu0 0.0
        %2796 = vmatprep.subr.mxu0 0.0
        %2797 = vmatpush1.msra.mxu0 0.0
        %2798 = vmatprep.subr.mxu0 0.0
        %2799 = vmatpush1.msra.mxu0 0.0
        %2800 = vmatprep.subr.mxu0 0.0
        %2801 = vmatpush1.msra.mxu0 0.0
        %2802 = vmatprep.subr.mxu0 0.0
        %2803 = vmatpush1.msra.mxu0 0.0
        %2804 = vmatprep.subr.mxu0 0.0
        %2805 = vmatpush1.msra.mxu0 0.0
        %2806 = vmatprep.subr.mxu0 0.0
        %2807 = vmatpush1.msra.mxu0 0.0
        %2808 = vmatprep.subr.mxu0 0.0
        %2809 = vmatpush1.msra.mxu0 0.0
        %2810 = vmatprep.subr.mxu0 0.0
        %2811 = vmatpush1.msra.mxu0 0.0
        %2812 = vmatprep.subr.mxu0 0.0
        %2813 = vmatpush1.msra.mxu0 0.0
        %2814 = vmatprep.subr.mxu0 0.0
        %2815 = vmatpush1.msra.mxu0 0.0
        %2816 = vmatprep.subr.mxu0 0.0
        %2817 = vmatpush1.msra.mxu0 0.0
        %2818 = vmatprep.subr.mxu0 0.0
        %2819 = vmatpush1.msra.mxu0 0.0
        %2820 = vmatprep.subr.mxu0 0.0
        %2821 = vmatpush1.msra.mxu0 0.0
        %2822 = vmatprep.mubr.f32.mxu0 0.0
        %2823 = vmatmul.mubr.f32.gmra.mrb[0].mxu0 %v2675
        %v2824 = vpop.f32.mrb[0].mxu0
        %v2825 = vadd.f32 0.0, %v2824
        %v2826 = vpop.f32.mrb[0].mxu0
        %2827 = vdwg.mxu0
        %v2829 = vsel %vm2673, %v2752, 0
        %v2832 = vsel %vm2677, %v2825, 0
        %2834 = vmatprep.subr.mxu0 0.0
        %2835 = vmatpush1.msra.mxu0 %v2832
        %2836 = vmatprep.subr.mxu0 0.0
        %2837 = vmatpush1.msra.mxu0 0.0
        %2838 = vmatprep.subr.mxu0 0.0
        %2839 = vmatpush1.msra.mxu0 0.0
        %2840 = vmatprep.subr.mxu0 0.0
        %2841 = vmatpush1.msra.mxu0 0.0
        %2842 = vmatprep.subr.mxu0 0.0
        %2843 = vmatpush1.msra.mxu0 0.0
        %2844 = vmatprep.subr.mxu0 0.0
        %2845 = vmatpush1.msra.mxu0 0.0
        %2846 = vmatprep.subr.mxu0 0.0
        %2847 = vmatpush1.msra.mxu0 0.0
        %2848 = vmatprep.subr.mxu0 0.0
        %2849 = vmatpush1.msra.mxu0 0.0
        %2850 = vmatprep.subr.mxu0 0.0
        %2851 = vmatpush1.msra.mxu0 0.0
        %2852 = vmatprep.subr.mxu0 0.0
        %2853 = vmatpush1.msra.mxu0 0.0
        %2854 = vmatprep.subr.mxu0 0.0
        %2855 = vmatpush1.msra.mxu0 0.0
        %2856 = vmatprep.subr.mxu0 0.0
        %2857 = vmatpush1.msra.mxu0 0.0
        %2858 = vmatprep.subr.mxu0 0.0
        %2859 = vmatpush1.msra.mxu0 0.0
        %2860 = vmatprep.subr.mxu0 0.0
        %2861 = vmatpush1.msra.mxu0 0.0
        %2862 = vmatprep.subr.mxu0 0.0
        %2863 = vmatpush1.msra.mxu0 0.0
        %2864 = vmatprep.subr.mxu0 0.0
        %2865 = vmatpush1.msra.mxu0 0.0
        %2866 = vmatprep.subr.mxu0 0.0
        %2867 = vmatpush1.msra.mxu0 0.0
        %2868 = vmatprep.subr.mxu0 0.0
        %2869 = vmatpush1.msra.mxu0 0.0
        %2870 = vmatprep.subr.mxu0 0.0
        %2871 = vmatpush1.msra.mxu0 0.0
        %2872 = vmatprep.subr.mxu0 0.0
        %2873 = vmatpush1.msra.mxu0 0.0
        %2874 = vmatprep.subr.mxu0 0.0
        %2875 = vmatpush1.msra.mxu0 0.0
        %2876 = vmatprep.subr.mxu0 0.0
        %2877 = vmatpush1.msra.mxu0 0.0
        %2878 = vmatprep.subr.mxu0 0.0
        %2879 = vmatpush1.msra.mxu0 0.0
        %2880 = vmatprep.subr.mxu0 0.0
        %2881 = vmatpush1.msra.mxu0 0.0
        %2882 = vmatprep.subr.mxu0 0.0
        %2883 = vmatpush1.msra.mxu0 0.0
        %2884 = vmatprep.subr.mxu0 0.0
        %2885 = vmatpush1.msra.mxu0 0.0
        %2886 = vmatprep.subr.mxu0 0.0
        %2887 = vmatpush1.msra.mxu0 0.0
        %2888 = vmatprep.subr.mxu0 0.0
        %2889 = vmatpush1.msra.mxu0 0.0
        %2890 = vmatprep.subr.mxu0 0.0
        %2891 = vmatpush1.msra.mxu0 0.0
        %2892 = vmatprep.subr.mxu0 0.0
        %2893 = vmatpush1.msra.mxu0 0.0
        %2894 = vmatprep.subr.mxu0 0.0
        %2895 = vmatpush1.msra.mxu0 0.0
        %2896 = vmatprep.subr.mxu0 0.0
        %2897 = vmatpush1.msra.mxu0 0.0
        %2898 = vmatprep.mubr.f32.mxu0 0.0
        %2899 = vmatmul.mubr.f32.gmra.mrb[0].mxu0 %v2829
        %v2900 = vpop.f32.mrb[0].mxu0
        %v2901 = vadd.f32 0.0, %v2900
        %v2902 = vpop.f32.mrb[0].mxu0
        %2903 = vdwg.mxu0
        %v2905 = vsel %vm2673, %v2670, 0
        %v2908 = vsel %vm2677, %v2748, 0
        %2910 = vmatprep.subr.mxu0 0.0
        %2911 = vmatpush1.msra.mxu0 %v2908
        %2912 = vmatprep.subr.mxu0 0.0
        %2913 = vmatpush1.msra.mxu0 0.0
        %2914 = vmatprep.subr.mxu0 0.0
        %2915 = vmatpush1.msra.mxu0 0.0
        %2916 = vmatprep.subr.mxu0 0.0
        %2917 = vmatpush1.msra.mxu0 0.0
        %2918 = vmatprep.subr.mxu0 0.0
        %2919 = vmatpush1.msra.mxu0 0.0
        %2920 = vmatprep.subr.mxu0 0.0
        %2921 = vmatpush1.msra.mxu0 0.0
        %2922 = vmatprep.subr.mxu0 0.0
        %2923 = vmatpush1.msra.mxu0 0.0
        %2924 = vmatprep.subr.mxu0 0.0
        %2925 = vmatpush1.msra.mxu0 0.0
        %2926 = vmatprep.subr.mxu0 0.0
        %2927 = vmatpush1.msra.mxu0 0.0
        %2928 = vmatprep.subr.mxu0 0.0
        %2929 = vmatpush1.msra.mxu0 0.0
        %2930 = vmatprep.subr.mxu0 0.0
        %2931 = vmatpush1.msra.mxu0 0.0
        %2932 = vmatprep.subr.mxu0 0.0
        %2933 = vmatpush1.msra.mxu0 0.0
        %2934 = vmatprep.subr.mxu0 0.0
        %2935 = vmatpush1.msra.mxu0 0.0
        %2936 = vmatprep.subr.mxu0 0.0
        %2937 = vmatpush1.msra.mxu0 0.0
        %2938 = vmatprep.subr.mxu0 0.0
        %2939 = vmatpush1.msra.mxu0 0.0
        %2940 = vmatprep.subr.mxu0 0.0
        %2941 = vmatpush1.msra.mxu0 0.0
        %2942 = vmatprep.subr.mxu0 0.0
        %2943 = vmatpush1.msra.mxu0 0.0
        %2944 = vmatprep.subr.mxu0 0.0
        %2945 = vmatpush1.msra.mxu0 0.0
        %2946 = vmatprep.subr.mxu0 0.0
        %2947 = vmatpush1.msra.mxu0 0.0
        %2948 = vmatprep.subr.mxu0 0.0
        %2949 = vmatpush1.msra.mxu0 0.0
        %2950 = vmatprep.subr.mxu0 0.0
        %2951 = vmatpush1.msra.mxu0 0.0
        %2952 = vmatprep.subr.mxu0 0.0
        %2953 = vmatpush1.msra.mxu0 0.0
        %2954 = vmatprep.subr.mxu0 0.0
        %2955 = vmatpush1.msra.mxu0 0.0
        %2956 = vmatprep.subr.mxu0 0.0
        %2957 = vmatpush1.msra.mxu0 0.0
        %2958 = vmatprep.subr.mxu0 0.0
        %2959 = vmatpush1.msra.mxu0 0.0
        %2960 = vmatprep.subr.mxu0 0.0
        %2961 = vmatpush1.msra.mxu0 0.0
        %2962 = vmatprep.subr.mxu0 0.0
        %2963 = vmatpush1.msra.mxu0 0.0
        %2964 = vmatprep.subr.mxu0 0.0
        %2965 = vmatpush1.msra.mxu0 0.0
        %2966 = vmatprep.subr.mxu0 0.0
        %2967 = vmatpush1.msra.mxu0 0.0
        %2968 = vmatprep.subr.mxu0 0.0
        %2969 = vmatpush1.msra.mxu0 0.0
        %2970 = vmatprep.subr.mxu0 0.0
        %2971 = vmatpush1.msra.mxu0 0.0
        %2972 = vmatprep.subr.mxu0 0.0
        %2973 = vmatpush1.msra.mxu0 0.0
        %2974 = vmatprep.mubr.f32.mxu0 0.0
        %2975 = vmatmul.mubr.f32.gmra.mrb[0].mxu0 %v2905
        %v2976 = vpop.f32.mrb[0].mxu0
        %v2977 = vadd.f32 %v2901, %v2976
        %v2978 = vpop.f32.mrb[0].mxu0
        %2979 = vdwg.mxu0
        %s2980 = scalar_lea.vmem %s2, 272
        %v2981 = vld [vmem:[%s2980] sm:$0x3]
        %s2982 = scalar_lea.vmem %s4, 80
        %v2983 = vld [vmem:[%s2982] sm:$0x3]
        %v2985 = vsel %vm2677, %v2983, 0
        %2987 = vmatprep.subr.mxu0 0.0
        %2988 = vmatpush1.msra.mxu0 %v2985
        %2989 = vmatprep.subr.mxu0 0.0
        %2990 = vmatpush1.msra.mxu0 0.0
        %2991 = vmatprep.subr.mxu0 0.0
        %2992 = vmatpush1.msra.mxu0 0.0
        %2993 = vmatprep.subr.mxu0 0.0
        %2994 = vmatpush1.msra.mxu0 0.0
        %2995 = vmatprep.subr.mxu0 0.0
        %2996 = vmatpush1.msra.mxu0 0.0
        %2997 = vmatprep.subr.mxu0 0.0
        %2998 = vmatpush1.msra.mxu0 0.0
        %2999 = vmatprep.subr.mxu0 0.0
        %3000 = vmatpush1.msra.mxu0 0.0
        %3001 = vmatprep.subr.mxu0 0.0
        %3002 = vmatpush1.msra.mxu0 0.0
        %3003 = vmatprep.subr.mxu0 0.0
        %3004 = vmatpush1.msra.mxu0 0.0
        %3005 = vmatprep.subr.mxu0 0.0
        %3006 = vmatpush1.msra.mxu0 0.0
        %3007 = vmatprep.subr.mxu0 0.0
        %3008 = vmatpush1.msra.mxu0 0.0
        %3009 = vmatprep.subr.mxu0 0.0
        %3010 = vmatpush1.msra.mxu0 0.0
        %3011 = vmatprep.subr.mxu0 0.0
        %3012 = vmatpush1.msra.mxu0 0.0
        %3013 = vmatprep.subr.mxu0 0.0
        %3014 = vmatpush1.msra.mxu0 0.0
        %3015 = vmatprep.subr.mxu0 0.0
        %3016 = vmatpush1.msra.mxu0 0.0
        %3017 = vmatprep.subr.mxu0 0.0
        %3018 = vmatpush1.msra.mxu0 0.0
        %3019 = vmatprep.subr.mxu0 0.0
        %3020 = vmatpush1.msra.mxu0 0.0
        %3021 = vmatprep.subr.mxu0 0.0
        %3022 = vmatpush1.msra.mxu0 0.0
        %3023 = vmatprep.subr.mxu0 0.0
        %3024 = vmatpush1.msra.mxu0 0.0
        %3025 = vmatprep.subr.mxu0 0.0
        %3026 = vmatpush1.msra.mxu0 0.0
        %3027 = vmatprep.subr.mxu0 0.0
        %3028 = vmatpush1.msra.mxu0 0.0
        %3029 = vmatprep.subr.mxu0 0.0
        %3030 = vmatpush1.msra.mxu0 0.0
        %3031 = vmatprep.subr.mxu0 0.0
        %3032 = vmatpush1.msra.mxu0 0.0
        %3033 = vmatprep.subr.mxu0 0.0
        %3034 = vmatpush1.msra.mxu0 0.0
        %3035 = vmatprep.subr.mxu0 0.0
        %3036 = vmatpush1.msra.mxu0 0.0
        %3037 = vmatprep.subr.mxu0 0.0
        %3038 = vmatpush1.msra.mxu0 0.0
        %3039 = vmatprep.subr.mxu0 0.0
        %3040 = vmatpush1.msra.mxu0 0.0
        %3041 = vmatprep.subr.mxu0 0.0
        %3042 = vmatpush1.msra.mxu0 0.0
        %3043 = vmatprep.subr.mxu0 0.0
        %3044 = vmatpush1.msra.mxu0 0.0
        %3045 = vmatprep.subr.mxu0 0.0
        %3046 = vmatpush1.msra.mxu0 0.0
        %3047 = vmatprep.subr.mxu0 0.0
        %3048 = vmatpush1.msra.mxu0 0.0
        %3049 = vmatprep.subr.mxu0 0.0
        %3050 = vmatpush1.msra.mxu0 0.0
        %3051 = vmatprep.mubr.f32.mxu0 0.0
        %3052 = vmatmul.mubr.f32.gmra.mrb[0].mxu0 %v2675
        %v3053 = vpop.f32.mrb[0].mxu0
        %v3054 = vadd.f32 0.0, %v3053
        %v3055 = vpop.f32.mrb[0].mxu0
        %3056 = vdwg.mxu0
        %v3058 = vsel %vm2673, %v2981, 0
        %v3061 = vsel %vm2677, %v3054, 0
        %3063 = vmatprep.subr.mxu0 0.0
        %3064 = vmatpush1.msra.mxu0 %v3061
        %3065 = vmatprep.subr.mxu0 0.0
        %3066 = vmatpush1.msra.mxu0 0.0
        %3067 = vmatprep.subr.mxu0 0.0
        %3068 = vmatpush1.msra.mxu0 0.0
        %3069 = vmatprep.subr.mxu0 0.0
        %3070 = vmatpush1.msra.mxu0 0.0
        %3071 = vmatprep.subr.mxu0 0.0
        %3072 = vmatpush1.msra.mxu0 0.0
        %3073 = vmatprep.subr.mxu0 0.0
        %3074 = vmatpush1.msra.mxu0 0.0
        %3075 = vmatprep.subr.mxu0 0.0
        %3076 = vmatpush1.msra.mxu0 0.0
        %3077 = vmatprep.subr.mxu0 0.0
        %3078 = vmatpush1.msra.mxu0 0.0
        %3079 = vmatprep.subr.mxu0 0.0
        %3080 = vmatpush1.msra.mxu0 0.0
        %3081 = vmatprep.subr.mxu0 0.0
        %3082 = vmatpush1.msra.mxu0 0.0
        %3083 = vmatprep.subr.mxu0 0.0
        %3084 = vmatpush1.msra.mxu0 0.0
        %3085 = vmatprep.subr.mxu0 0.0
        %3086 = vmatpush1.msra.mxu0 0.0
        %3087 = vmatprep.subr.mxu0 0.0
        %3088 = vmatpush1.msra.mxu0 0.0
        %3089 = vmatprep.subr.mxu0 0.0
        %3090 = vmatpush1.msra.mxu0 0.0
        %3091 = vmatprep.subr.mxu0 0.0
        %3092 = vmatpush1.msra.mxu0 0.0
        %3093 = vmatprep.subr.mxu0 0.0
        %3094 = vmatpush1.msra.mxu0 0.0
        %3095 = vmatprep.subr.mxu0 0.0
        %3096 = vmatpush1.msra.mxu0 0.0
        %3097 = vmatprep.subr.mxu0 0.0
        %3098 = vmatpush1.msra.mxu0 0.0
        %3099 = vmatprep.subr.mxu0 0.0
        %3100 = vmatpush1.msra.mxu0 0.0
        %3101 = vmatprep.subr.mxu0 0.0
        %3102 = vmatpush1.msra.mxu0 0.0
        %3103 = vmatprep.subr.mxu0 0.0
        %3104 = vmatpush1.msra.mxu0 0.0
        %3105 = vmatprep.subr.mxu0 0.0
        %3106 = vmatpush1.msra.mxu0 0.0
        %3107 = vmatprep.subr.mxu0 0.0
        %3108 = vmatpush1.msra.mxu0 0.0
        %3109 = vmatprep.subr.mxu0 0.0
        %3110 = vmatpush1.msra.mxu0 0.0
        %3111 = vmatprep.subr.mxu0 0.0
        %3112 = vmatpush1.msra.mxu0 0.0
        %3113 = vmatprep.subr.mxu0 0.0
        %3114 = vmatpush1.msra.mxu0 0.0
        %3115 = vmatprep.subr.mxu0 0.0
        %3116 = vmatpush1.msra.mxu0 0.0
        %3117 = vmatprep.subr.mxu0 0.0
        %3118 = vmatpush1.msra.mxu0 0.0
        %3119 = vmatprep.subr.mxu0 0.0
        %3120 = vmatpush1.msra.mxu0 0.0
        %3121 = vmatprep.subr.mxu0 0.0
        %3122 = vmatpush1.msra.mxu0 0.0
        %3123 = vmatprep.subr.mxu0 0.0
        %3124 = vmatpush1.msra.mxu0 0.0
        %3125 = vmatprep.subr.mxu0 0.0
        %3126 = vmatpush1.msra.mxu0 0.0
        %3127 = vmatprep.mubr.f32.mxu0 0.0
        %3128 = vmatmul.mubr.f32.gmra.mrb[0].mxu0 %v3058
        %v3129 = vpop.f32.mrb[0].mxu0
        %v3130 = vadd.f32 0.0, %v3129
        %v3131 = vpop.f32.mrb[0].mxu0
        %3132 = vdwg.mxu0
        %v3133 = vadd.f32 %v2977, %v3130
        %s3134 = sld [smem:[#allocation2 + $0x4]]
        %v3135 = vstv %s3134
        %v3136 = vadd.f32 %v3133, %v3135
        %v3137 = vmax.f32 %v3136, 0.0
        %s3138 = scalar_lea.vmem %s2, 288
        %v3139 = vld [vmem:[%s3138] sm:$0xf]
        %s3140 = scalar_lea.vmem %s4, 88
        %v3141 = vld [vmem:[%s3140] sm:$0xf]
        %v3143 = vsel %vm2208, %v3141, 0
        %3145 = vmatprep.subr.mxu0 0.0
        %3146 = vmatpush1.msra.mxu0 %v3143
        %3147 = vmatprep.subr.mxu0 0.0
        %3148 = vmatpush1.msra.mxu0 0.0
        %3149 = vmatprep.subr.mxu0 0.0
        %3150 = vmatpush1.msra.mxu0 0.0
        %3151 = vmatprep.subr.mxu0 0.0
        %3152 = vmatpush1.msra.mxu0 0.0
        %3153 = vmatprep.subr.mxu0 0.0
        %3154 = vmatpush1.msra.mxu0 0.0
        %3155 = vmatprep.subr.mxu0 0.0
        %3156 = vmatpush1.msra.mxu0 0.0
        %3157 = vmatprep.subr.mxu0 0.0
        %3158 = vmatpush1.msra.mxu0 0.0
        %3159 = vmatprep.subr.mxu0 0.0
        %3160 = vmatpush1.msra.mxu0 0.0
        %3161 = vmatprep.subr.mxu0 0.0
        %3162 = vmatpush1.msra.mxu0 0.0
        %3163 = vmatprep.subr.mxu0 0.0
        %3164 = vmatpush1.msra.mxu0 0.0
        %3165 = vmatprep.subr.mxu0 0.0
        %3166 = vmatpush1.msra.mxu0 0.0
        %3167 = vmatprep.subr.mxu0 0.0
        %3168 = vmatpush1.msra.mxu0 0.0
        %3169 = vmatprep.subr.mxu0 0.0
        %3170 = vmatpush1.msra.mxu0 0.0
        %3171 = vmatprep.subr.mxu0 0.0
        %3172 = vmatpush1.msra.mxu0 0.0
        %3173 = vmatprep.subr.mxu0 0.0
        %3174 = vmatpush1.msra.mxu0 0.0
        %3175 = vmatprep.subr.mxu0 0.0
        %3176 = vmatpush1.msra.mxu0 0.0
        %3177 = vmatprep.subr.mxu0 0.0
        %3178 = vmatpush1.msra.mxu0 0.0
        %3179 = vmatprep.subr.mxu0 0.0
        %3180 = vmatpush1.msra.mxu0 0.0
        %3181 = vmatprep.subr.mxu0 0.0
        %3182 = vmatpush1.msra.mxu0 0.0
        %3183 = vmatprep.subr.mxu0 0.0
        %3184 = vmatpush1.msra.mxu0 0.0
        %3185 = vmatprep.subr.mxu0 0.0
        %3186 = vmatpush1.msra.mxu0 0.0
        %3187 = vmatprep.subr.mxu0 0.0
        %3188 = vmatpush1.msra.mxu0 0.0
        %3189 = vmatprep.subr.mxu0 0.0
        %3190 = vmatpush1.msra.mxu0 0.0
        %3191 = vmatprep.subr.mxu0 0.0
        %3192 = vmatpush1.msra.mxu0 0.0
        %3193 = vmatprep.subr.mxu0 0.0
        %3194 = vmatpush1.msra.mxu0 0.0
        %3195 = vmatprep.subr.mxu0 0.0
        %3196 = vmatpush1.msra.mxu0 0.0
        %3197 = vmatprep.subr.mxu0 0.0
        %3198 = vmatpush1.msra.mxu0 0.0
        %3199 = vmatprep.subr.mxu0 0.0
        %3200 = vmatpush1.msra.mxu0 0.0
        %3201 = vmatprep.subr.mxu0 0.0
        %3202 = vmatpush1.msra.mxu0 0.0
        %3203 = vmatprep.subr.mxu0 0.0
        %3204 = vmatpush1.msra.mxu0 0.0
        %3205 = vmatprep.subr.mxu0 0.0
        %3206 = vmatpush1.msra.mxu0 0.0
        %3207 = vmatprep.subr.mxu0 0.0
        %3208 = vmatpush1.msra.mxu0 0.0
        %3209 = vmatprep.mubr.f32.mxu0 0.0
        %3210 = vmatmul.mubr.f32.gmra.mrb[0].mxu0 %v2206
        %v3211 = vpop.f32.mrb[0].mxu0
        %v3212 = vadd.f32 0.0, %v3211
        %v3213 = vpop.f32.mrb[0].mxu0
        %3214 = vdwg.mxu0
        %s3215 = scalar_lea.vmem %s2, 304
        %v3216 = vld [vmem:[%s3215] sm:$0xf]
        %s3217 = scalar_lea.vmem %s4, 96
        %v3218 = vld [vmem:[%s3217] sm:$0xf]
        %v3220 = vsel %vm2208, %v3218, 0
        %3222 = vmatprep.subr.mxu0 0.0
        %3223 = vmatpush1.msra.mxu0 %v3220
        %3224 = vmatprep.subr.mxu0 0.0
        %3225 = vmatpush1.msra.mxu0 0.0
        %3226 = vmatprep.subr.mxu0 0.0
        %3227 = vmatpush1.msra.mxu0 0.0
        %3228 = vmatprep.subr.mxu0 0.0
        %3229 = vmatpush1.msra.mxu0 0.0
        %3230 = vmatprep.subr.mxu0 0.0
        %3231 = vmatpush1.msra.mxu0 0.0
        %3232 = vmatprep.subr.mxu0 0.0
        %3233 = vmatpush1.msra.mxu0 0.0
        %3234 = vmatprep.subr.mxu0 0.0
        %3235 = vmatpush1.msra.mxu0 0.0
        %3236 = vmatprep.subr.mxu0 0.0
        %3237 = vmatpush1.msra.mxu0 0.0
        %3238 = vmatprep.subr.mxu0 0.0
        %3239 = vmatpush1.msra.mxu0 0.0
        %3240 = vmatprep.subr.mxu0 0.0
        %3241 = vmatpush1.msra.mxu0 0.0
        %3242 = vmatprep.subr.mxu0 0.0
        %3243 = vmatpush1.msra.mxu0 0.0
        %3244 = vmatprep.subr.mxu0 0.0
        %3245 = vmatpush1.msra.mxu0 0.0
        %3246 = vmatprep.subr.mxu0 0.0
        %3247 = vmatpush1.msra.mxu0 0.0
        %3248 = vmatprep.subr.mxu0 0.0
        %3249 = vmatpush1.msra.mxu0 0.0
        %3250 = vmatprep.subr.mxu0 0.0
        %3251 = vmatpush1.msra.mxu0 0.0
        %3252 = vmatprep.subr.mxu0 0.0
        %3253 = vmatpush1.msra.mxu0 0.0
        %3254 = vmatprep.subr.mxu0 0.0
        %3255 = vmatpush1.msra.mxu0 0.0
        %3256 = vmatprep.subr.mxu0 0.0
        %3257 = vmatpush1.msra.mxu0 0.0
        %3258 = vmatprep.subr.mxu0 0.0
        %3259 = vmatpush1.msra.mxu0 0.0
        %3260 = vmatprep.subr.mxu0 0.0
        %3261 = vmatpush1.msra.mxu0 0.0
        %3262 = vmatprep.subr.mxu0 0.0
        %3263 = vmatpush1.msra.mxu0 0.0
        %3264 = vmatprep.subr.mxu0 0.0
        %3265 = vmatpush1.msra.mxu0 0.0
        %3266 = vmatprep.subr.mxu0 0.0
        %3267 = vmatpush1.msra.mxu0 0.0
        %3268 = vmatprep.subr.mxu0 0.0
        %3269 = vmatpush1.msra.mxu0 0.0
        %3270 = vmatprep.subr.mxu0 0.0
        %3271 = vmatpush1.msra.mxu0 0.0
        %3272 = vmatprep.subr.mxu0 0.0
        %3273 = vmatpush1.msra.mxu0 0.0
        %3274 = vmatprep.subr.mxu0 0.0
        %3275 = vmatpush1.msra.mxu0 0.0
        %3276 = vmatprep.subr.mxu0 0.0
        %3277 = vmatpush1.msra.mxu0 0.0
        %3278 = vmatprep.subr.mxu0 0.0
        %3279 = vmatpush1.msra.mxu0 0.0
        %3280 = vmatprep.subr.mxu0 0.0
        %3281 = vmatpush1.msra.mxu0 0.0
        %3282 = vmatprep.subr.mxu0 0.0
        %3283 = vmatpush1.msra.mxu0 0.0
        %3284 = vmatprep.subr.mxu0 0.0
        %3285 = vmatpush1.msra.mxu0 0.0
        %3286 = vmatprep.mubr.f32.mxu0 0.0
        %3287 = vmatmul.mubr.f32.gmra.mrb[0].mxu0 %v2206
        %v3288 = vpop.f32.mrb[0].mxu0
        %v3289 = vadd.f32 0.0, %v3288
        %v3290 = vpop.f32.mrb[0].mxu0
        %3291 = vdwg.mxu0
        %v3293 = vsel %vm2204, %v3216, 0
        %v3296 = vsel %vm2208, %v3289, 0
        %3298 = vmatprep.subr.mxu0 0.0
        %3299 = vmatpush1.msra.mxu0 %v3296
        %3300 = vmatprep.subr.mxu0 0.0
        %3301 = vmatpush1.msra.mxu0 0.0
        %3302 = vmatprep.subr.mxu0 0.0
        %3303 = vmatpush1.msra.mxu0 0.0
        %3304 = vmatprep.subr.mxu0 0.0
        %3305 = vmatpush1.msra.mxu0 0.0
        %3306 = vmatprep.subr.mxu0 0.0
        %3307 = vmatpush1.msra.mxu0 0.0
        %3308 = vmatprep.subr.mxu0 0.0
        %3309 = vmatpush1.msra.mxu0 0.0
        %3310 = vmatprep.subr.mxu0 0.0
        %3311 = vmatpush1.msra.mxu0 0.0
        %3312 = vmatprep.subr.mxu0 0.0
        %3313 = vmatpush1.msra.mxu0 0.0
        %3314 = vmatprep.subr.mxu0 0.0
        %3315 = vmatpush1.msra.mxu0 0.0
        %3316 = vmatprep.subr.mxu0 0.0
        %3317 = vmatpush1.msra.mxu0 0.0
        %3318 = vmatprep.subr.mxu0 0.0
        %3319 = vmatpush1.msra.mxu0 0.0
        %3320 = vmatprep.subr.mxu0 0.0
        %3321 = vmatpush1.msra.mxu0 0.0
        %3322 = vmatprep.subr.mxu0 0.0
        %3323 = vmatpush1.msra.mxu0 0.0
        %3324 = vmatprep.subr.mxu0 0.0
        %3325 = vmatpush1.msra.mxu0 0.0
        %3326 = vmatprep.subr.mxu0 0.0
        %3327 = vmatpush1.msra.mxu0 0.0
        %3328 = vmatprep.subr.mxu0 0.0
        %3329 = vmatpush1.msra.mxu0 0.0
        %3330 = vmatprep.subr.mxu0 0.0
        %3331 = vmatpush1.msra.mxu0 0.0
        %3332 = vmatprep.subr.mxu0 0.0
        %3333 = vmatpush1.msra.mxu0 0.0
        %3334 = vmatprep.subr.mxu0 0.0
        %3335 = vmatpush1.msra.mxu0 0.0
        %3336 = vmatprep.subr.mxu0 0.0
        %3337 = vmatpush1.msra.mxu0 0.0
        %3338 = vmatprep.subr.mxu0 0.0
        %3339 = vmatpush1.msra.mxu0 0.0
        %3340 = vmatprep.subr.mxu0 0.0
        %3341 = vmatpush1.msra.mxu0 0.0
        %3342 = vmatprep.subr.mxu0 0.0
        %3343 = vmatpush1.msra.mxu0 0.0
        %3344 = vmatprep.subr.mxu0 0.0
        %3345 = vmatpush1.msra.mxu0 0.0
        %3346 = vmatprep.subr.mxu0 0.0
        %3347 = vmatpush1.msra.mxu0 0.0
        %3348 = vmatprep.subr.mxu0 0.0
        %3349 = vmatpush1.msra.mxu0 0.0
        %3350 = vmatprep.subr.mxu0 0.0
        %3351 = vmatpush1.msra.mxu0 0.0
        %3352 = vmatprep.subr.mxu0 0.0
        %3353 = vmatpush1.msra.mxu0 0.0
        %3354 = vmatprep.subr.mxu0 0.0
        %3355 = vmatpush1.msra.mxu0 0.0
        %3356 = vmatprep.subr.mxu0 0.0
        %3357 = vmatpush1.msra.mxu0 0.0
        %3358 = vmatprep.subr.mxu0 0.0
        %3359 = vmatpush1.msra.mxu0 0.0
        %3360 = vmatprep.subr.mxu0 0.0
        %3361 = vmatpush1.msra.mxu0 0.0
        %3362 = vmatprep.mubr.f32.mxu0 0.0
        %3363 = vmatmul.mubr.f32.gmra.mrb[0].mxu0 %v3293
        %v3364 = vpop.f32.mrb[0].mxu0
        %v3365 = vadd.f32 0.0, %v3364
        %v3366 = vpop.f32.mrb[0].mxu0
        %3367 = vdwg.mxu0
        %v3369 = vsel %vm2204, %v3139, 0
        %v3372 = vsel %vm2208, %v3212, 0
        %3374 = vmatprep.subr.mxu0 0.0
        %3375 = vmatpush1.msra.mxu0 %v3372
        %3376 = vmatprep.subr.mxu0 0.0
        %3377 = vmatpush1.msra.mxu0 0.0
        %3378 = vmatprep.subr.mxu0 0.0
        %3379 = vmatpush1.msra.mxu0 0.0
        %3380 = vmatprep.subr.mxu0 0.0
        %3381 = vmatpush1.msra.mxu0 0.0
        %3382 = vmatprep.subr.mxu0 0.0
        %3383 = vmatpush1.msra.mxu0 0.0
        %3384 = vmatprep.subr.mxu0 0.0
        %3385 = vmatpush1.msra.mxu0 0.0
        %3386 = vmatprep.subr.mxu0 0.0
        %3387 = vmatpush1.msra.mxu0 0.0
        %3388 = vmatprep.subr.mxu0 0.0
        %3389 = vmatpush1.msra.mxu0 0.0
        %3390 = vmatprep.subr.mxu0 0.0
        %3391 = vmatpush1.msra.mxu0 0.0
        %3392 = vmatprep.subr.mxu0 0.0
        %3393 = vmatpush1.msra.mxu0 0.0
        %3394 = vmatprep.subr.mxu0 0.0
        %3395 = vmatpush1.msra.mxu0 0.0
        %3396 = vmatprep.subr.mxu0 0.0
        %3397 = vmatpush1.msra.mxu0 0.0
        %3398 = vmatprep.subr.mxu0 0.0
        %3399 = vmatpush1.msra.mxu0 0.0
        %3400 = vmatprep.subr.mxu0 0.0
        %3401 = vmatpush1.msra.mxu0 0.0
        %3402 = vmatprep.subr.mxu0 0.0
        %3403 = vmatpush1.msra.mxu0 0.0
        %3404 = vmatprep.subr.mxu0 0.0
        %3405 = vmatpush1.msra.mxu0 0.0
        %3406 = vmatprep.subr.mxu0 0.0
        %3407 = vmatpush1.msra.mxu0 0.0
        %3408 = vmatprep.subr.mxu0 0.0
        %3409 = vmatpush1.msra.mxu0 0.0
        %3410 = vmatprep.subr.mxu0 0.0
        %3411 = vmatpush1.msra.mxu0 0.0
        %3412 = vmatprep.subr.mxu0 0.0
        %3413 = vmatpush1.msra.mxu0 0.0
        %3414 = vmatprep.subr.mxu0 0.0
        %3415 = vmatpush1.msra.mxu0 0.0
        %3416 = vmatprep.subr.mxu0 0.0
        %3417 = vmatpush1.msra.mxu0 0.0
        %3418 = vmatprep.subr.mxu0 0.0
        %3419 = vmatpush1.msra.mxu0 0.0
        %3420 = vmatprep.subr.mxu0 0.0
        %3421 = vmatpush1.msra.mxu0 0.0
        %3422 = vmatprep.subr.mxu0 0.0
        %3423 = vmatpush1.msra.mxu0 0.0
        %3424 = vmatprep.subr.mxu0 0.0
        %3425 = vmatpush1.msra.mxu0 0.0
        %3426 = vmatprep.subr.mxu0 0.0
        %3427 = vmatpush1.msra.mxu0 0.0
        %3428 = vmatprep.subr.mxu0 0.0
        %3429 = vmatpush1.msra.mxu0 0.0
        %3430 = vmatprep.subr.mxu0 0.0
        %3431 = vmatpush1.msra.mxu0 0.0
        %3432 = vmatprep.subr.mxu0 0.0
        %3433 = vmatpush1.msra.mxu0 0.0
        %3434 = vmatprep.subr.mxu0 0.0
        %3435 = vmatpush1.msra.mxu0 0.0
        %3436 = vmatprep.subr.mxu0 0.0
        %3437 = vmatpush1.msra.mxu0 0.0
        %3438 = vmatprep.mubr.f32.mxu0 0.0
        %3439 = vmatmul.mubr.f32.gmra.mrb[0].mxu0 %v3369
        %v3440 = vpop.f32.mrb[0].mxu0
        %v3441 = vadd.f32 %v3365, %v3440
        %v3442 = vpop.f32.mrb[0].mxu0
        %3443 = vdwg.mxu0
        %s3444 = scalar_lea.vmem %s2, 320
        %v3445 = vld [vmem:[%s3444] sm:$0xf]
        %s3446 = scalar_lea.vmem %s4, 104
        %v3447 = vld [vmem:[%s3446] sm:$0xf]
        %v3449 = vsel %vm2208, %v3447, 0
        %3451 = vmatprep.subr.mxu0 0.0
        %3452 = vmatpush1.msra.mxu0 %v3449
        %3453 = vmatprep.subr.mxu0 0.0
        %3454 = vmatpush1.msra.mxu0 0.0
        %3455 = vmatprep.subr.mxu0 0.0
        %3456 = vmatpush1.msra.mxu0 0.0
        %3457 = vmatprep.subr.mxu0 0.0
        %3458 = vmatpush1.msra.mxu0 0.0
        %3459 = vmatprep.subr.mxu0 0.0
        %3460 = vmatpush1.msra.mxu0 0.0
        %3461 = vmatprep.subr.mxu0 0.0
        %3462 = vmatpush1.msra.mxu0 0.0
        %3463 = vmatprep.subr.mxu0 0.0
        %3464 = vmatpush1.msra.mxu0 0.0
        %3465 = vmatprep.subr.mxu0 0.0
        %3466 = vmatpush1.msra.mxu0 0.0
        %3467 = vmatprep.subr.mxu0 0.0
        %3468 = vmatpush1.msra.mxu0 0.0
        %3469 = vmatprep.subr.mxu0 0.0
        %3470 = vmatpush1.msra.mxu0 0.0
        %3471 = vmatprep.subr.mxu0 0.0
        %3472 = vmatpush1.msra.mxu0 0.0
        %3473 = vmatprep.subr.mxu0 0.0
        %3474 = vmatpush1.msra.mxu0 0.0
        %3475 = vmatprep.subr.mxu0 0.0
        %3476 = vmatpush1.msra.mxu0 0.0
        %3477 = vmatprep.subr.mxu0 0.0
        %3478 = vmatpush1.msra.mxu0 0.0
        %3479 = vmatprep.subr.mxu0 0.0
        %3480 = vmatpush1.msra.mxu0 0.0
        %3481 = vmatprep.subr.mxu0 0.0
        %3482 = vmatpush1.msra.mxu0 0.0
        %3483 = vmatprep.subr.mxu0 0.0
        %3484 = vmatpush1.msra.mxu0 0.0
        %3485 = vmatprep.subr.mxu0 0.0
        %3486 = vmatpush1.msra.mxu0 0.0
        %3487 = vmatprep.subr.mxu0 0.0
        %3488 = vmatpush1.msra.mxu0 0.0
        %3489 = vmatprep.subr.mxu0 0.0
        %3490 = vmatpush1.msra.mxu0 0.0
        %3491 = vmatprep.subr.mxu0 0.0
        %3492 = vmatpush1.msra.mxu0 0.0
        %3493 = vmatprep.subr.mxu0 0.0
        %3494 = vmatpush1.msra.mxu0 0.0
        %3495 = vmatprep.subr.mxu0 0.0
        %3496 = vmatpush1.msra.mxu0 0.0
        %3497 = vmatprep.subr.mxu0 0.0
        %3498 = vmatpush1.msra.mxu0 0.0
        %3499 = vmatprep.subr.mxu0 0.0
        %3500 = vmatpush1.msra.mxu0 0.0
        %3501 = vmatprep.subr.mxu0 0.0
        %3502 = vmatpush1.msra.mxu0 0.0
        %3503 = vmatprep.subr.mxu0 0.0
        %3504 = vmatpush1.msra.mxu0 0.0
        %3505 = vmatprep.subr.mxu0 0.0
        %3506 = vmatpush1.msra.mxu0 0.0
        %3507 = vmatprep.subr.mxu0 0.0
        %3508 = vmatpush1.msra.mxu0 0.0
        %3509 = vmatprep.subr.mxu0 0.0
        %3510 = vmatpush1.msra.mxu0 0.0
        %3511 = vmatprep.subr.mxu0 0.0
        %3512 = vmatpush1.msra.mxu0 0.0
        %3513 = vmatprep.subr.mxu0 0.0
        %3514 = vmatpush1.msra.mxu0 0.0
        %3515 = vmatprep.mubr.f32.mxu0 0.0
        %3516 = vmatmul.mubr.f32.gmra.mrb[0].mxu0 %v2206
        %v3517 = vpop.f32.mrb[0].mxu0
        %v3518 = vadd.f32 0.0, %v3517
        %v3519 = vpop.f32.mrb[0].mxu0
        %3520 = vdwg.mxu0
        %v3522 = vsel %vm2204, %v3445, 0
        %v3525 = vsel %vm2208, %v3518, 0
        %3527 = vmatprep.subr.mxu0 0.0
        %3528 = vmatpush1.msra.mxu0 %v3525
        %3529 = vmatprep.subr.mxu0 0.0
        %3530 = vmatpush1.msra.mxu0 0.0
        %3531 = vmatprep.subr.mxu0 0.0
        %3532 = vmatpush1.msra.mxu0 0.0
        %3533 = vmatprep.subr.mxu0 0.0
        %3534 = vmatpush1.msra.mxu0 0.0
        %3535 = vmatprep.subr.mxu0 0.0
        %3536 = vmatpush1.msra.mxu0 0.0
        %3537 = vmatprep.subr.mxu0 0.0
        %3538 = vmatpush1.msra.mxu0 0.0
        %3539 = vmatprep.subr.mxu0 0.0
        %3540 = vmatpush1.msra.mxu0 0.0
        %3541 = vmatprep.subr.mxu0 0.0
        %3542 = vmatpush1.msra.mxu0 0.0
        %3543 = vmatprep.subr.mxu0 0.0
        %3544 = vmatpush1.msra.mxu0 0.0
        %3545 = vmatprep.subr.mxu0 0.0
        %3546 = vmatpush1.msra.mxu0 0.0
        %3547 = vmatprep.subr.mxu0 0.0
        %3548 = vmatpush1.msra.mxu0 0.0
        %3549 = vmatprep.subr.mxu0 0.0
        %3550 = vmatpush1.msra.mxu0 0.0
        %3551 = vmatprep.subr.mxu0 0.0
        %3552 = vmatpush1.msra.mxu0 0.0
        %3553 = vmatprep.subr.mxu0 0.0
        %3554 = vmatpush1.msra.mxu0 0.0
        %3555 = vmatprep.subr.mxu0 0.0
        %3556 = vmatpush1.msra.mxu0 0.0
        %3557 = vmatprep.subr.mxu0 0.0
        %3558 = vmatpush1.msra.mxu0 0.0
        %3559 = vmatprep.subr.mxu0 0.0
        %3560 = vmatpush1.msra.mxu0 0.0
        %3561 = vmatprep.subr.mxu0 0.0
        %3562 = vmatpush1.msra.mxu0 0.0
        %3563 = vmatprep.subr.mxu0 0.0
        %3564 = vmatpush1.msra.mxu0 0.0
        %3565 = vmatprep.subr.mxu0 0.0
        %3566 = vmatpush1.msra.mxu0 0.0
        %3567 = vmatprep.subr.mxu0 0.0
        %3568 = vmatpush1.msra.mxu0 0.0
        %3569 = vmatprep.subr.mxu0 0.0
        %3570 = vmatpush1.msra.mxu0 0.0
        %3571 = vmatprep.subr.mxu0 0.0
        %3572 = vmatpush1.msra.mxu0 0.0
        %3573 = vmatprep.subr.mxu0 0.0
        %3574 = vmatpush1.msra.mxu0 0.0
        %3575 = vmatprep.subr.mxu0 0.0
        %3576 = vmatpush1.msra.mxu0 0.0
        %3577 = vmatprep.subr.mxu0 0.0
        %3578 = vmatpush1.msra.mxu0 0.0
        %3579 = vmatprep.subr.mxu0 0.0
        %3580 = vmatpush1.msra.mxu0 0.0
        %3581 = vmatprep.subr.mxu0 0.0
        %3582 = vmatpush1.msra.mxu0 0.0
        %3583 = vmatprep.subr.mxu0 0.0
        %3584 = vmatpush1.msra.mxu0 0.0
        %3585 = vmatprep.subr.mxu0 0.0
        %3586 = vmatpush1.msra.mxu0 0.0
        %3587 = vmatprep.subr.mxu0 0.0
        %3588 = vmatpush1.msra.mxu0 0.0
        %3589 = vmatprep.subr.mxu0 0.0
        %3590 = vmatpush1.msra.mxu0 0.0
        %3591 = vmatprep.mubr.f32.mxu0 0.0
        %3592 = vmatmul.mubr.f32.gmra.mrb[0].mxu0 %v3522
        %v3593 = vpop.f32.mrb[0].mxu0
        %v3594 = vadd.f32 0.0, %v3593
        %v3595 = vpop.f32.mrb[0].mxu0
        %3596 = vdwg.mxu0
        %v3597 = vadd.f32 %v3441, %v3594
        %s3598 = scalar_lea.vmem %s2, 336
        %v3599 = vld [vmem:[%s3598] sm:$0xf]
        %s3600 = scalar_lea.vmem %s4, 112
        %v3601 = vld [vmem:[%s3600] sm:$0xf]
        %v3603 = vsel %vm2208, %v3601, 0
        %3605 = vmatprep.subr.mxu0 0.0
        %3606 = vmatpush1.msra.mxu0 %v3603
        %3607 = vmatprep.subr.mxu0 0.0
        %3608 = vmatpush1.msra.mxu0 0.0
        %3609 = vmatprep.subr.mxu0 0.0
        %3610 = vmatpush1.msra.mxu0 0.0
        %3611 = vmatprep.subr.mxu0 0.0
        %3612 = vmatpush1.msra.mxu0 0.0
        %3613 = vmatprep.subr.mxu0 0.0
        %3614 = vmatpush1.msra.mxu0 0.0
        %3615 = vmatprep.subr.mxu0 0.0
        %3616 = vmatpush1.msra.mxu0 0.0
        %3617 = vmatprep.subr.mxu0 0.0
        %3618 = vmatpush1.msra.mxu0 0.0
        %3619 = vmatprep.subr.mxu0 0.0
        %3620 = vmatpush1.msra.mxu0 0.0
        %3621 = vmatprep.subr.mxu0 0.0
        %3622 = vmatpush1.msra.mxu0 0.0
        %3623 = vmatprep.subr.mxu0 0.0
        %3624 = vmatpush1.msra.mxu0 0.0
        %3625 = vmatprep.subr.mxu0 0.0
        %3626 = vmatpush1.msra.mxu0 0.0
        %3627 = vmatprep.subr.mxu0 0.0
        %3628 = vmatpush1.msra.mxu0 0.0
        %3629 = vmatprep.subr.mxu0 0.0
        %3630 = vmatpush1.msra.mxu0 0.0
        %3631 = vmatprep.subr.mxu0 0.0
        %3632 = vmatpush1.msra.mxu0 0.0
        %3633 = vmatprep.subr.mxu0 0.0
        %3634 = vmatpush1.msra.mxu0 0.0
        %3635 = vmatprep.subr.mxu0 0.0
        %3636 = vmatpush1.msra.mxu0 0.0
        %3637 = vmatprep.subr.mxu0 0.0
        %3638 = vmatpush1.msra.mxu0 0.0
        %3639 = vmatprep.subr.mxu0 0.0
        %3640 = vmatpush1.msra.mxu0 0.0
        %3641 = vmatprep.subr.mxu0 0.0
        %3642 = vmatpush1.msra.mxu0 0.0
        %3643 = vmatprep.subr.mxu0 0.0
        %3644 = vmatpush1.msra.mxu0 0.0
        %3645 = vmatprep.subr.mxu0 0.0
        %3646 = vmatpush1.msra.mxu0 0.0
        %3647 = vmatprep.subr.mxu0 0.0
        %3648 = vmatpush1.msra.mxu0 0.0
        %3649 = vmatprep.subr.mxu0 0.0
        %3650 = vmatpush1.msra.mxu0 0.0
        %3651 = vmatprep.subr.mxu0 0.0
        %3652 = vmatpush1.msra.mxu0 0.0
        %3653 = vmatprep.subr.mxu0 0.0
        %3654 = vmatpush1.msra.mxu0 0.0
        %3655 = vmatprep.subr.mxu0 0.0
        %3656 = vmatpush1.msra.mxu0 0.0
        %3657 = vmatprep.subr.mxu0 0.0
        %3658 = vmatpush1.msra.mxu0 0.0
        %3659 = vmatprep.subr.mxu0 0.0
        %3660 = vmatpush1.msra.mxu0 0.0
        %3661 = vmatprep.subr.mxu0 0.0
        %3662 = vmatpush1.msra.mxu0 0.0
        %3663 = vmatprep.subr.mxu0 0.0
        %3664 = vmatpush1.msra.mxu0 0.0
        %3665 = vmatprep.subr.mxu0 0.0
        %3666 = vmatpush1.msra.mxu0 0.0
        %3667 = vmatprep.subr.mxu0 0.0
        %3668 = vmatpush1.msra.mxu0 0.0
        %3669 = vmatprep.mubr.f32.mxu0 0.0
        %3670 = vmatmul.mubr.f32.gmra.mrb[0].mxu0 %v2206
        %v3671 = vpop.f32.mrb[0].mxu0
        %v3672 = vadd.f32 0.0, %v3671
        %v3673 = vpop.f32.mrb[0].mxu0
        %3674 = vdwg.mxu0
        %v3676 = vsel %vm2204, %v3599, 0
        %v3679 = vsel %vm2208, %v3672, 0
        %3681 = vmatprep.subr.mxu0 0.0
        %3682 = vmatpush1.msra.mxu0 %v3679
        %3683 = vmatprep.subr.mxu0 0.0
        %3684 = vmatpush1.msra.mxu0 0.0
        %3685 = vmatprep.subr.mxu0 0.0
        %3686 = vmatpush1.msra.mxu0 0.0
        %3687 = vmatprep.subr.mxu0 0.0
        %3688 = vmatpush1.msra.mxu0 0.0
        %3689 = vmatprep.subr.mxu0 0.0
        %3690 = vmatpush1.msra.mxu0 0.0
        %3691 = vmatprep.subr.mxu0 0.0
        %3692 = vmatpush1.msra.mxu0 0.0
        %3693 = vmatprep.subr.mxu0 0.0
        %3694 = vmatpush1.msra.mxu0 0.0
        %3695 = vmatprep.subr.mxu0 0.0
        %3696 = vmatpush1.msra.mxu0 0.0
        %3697 = vmatprep.subr.mxu0 0.0
        %3698 = vmatpush1.msra.mxu0 0.0
        %3699 = vmatprep.subr.mxu0 0.0
        %3700 = vmatpush1.msra.mxu0 0.0
        %3701 = vmatprep.subr.mxu0 0.0
        %3702 = vmatpush1.msra.mxu0 0.0
        %3703 = vmatprep.subr.mxu0 0.0
        %3704 = vmatpush1.msra.mxu0 0.0
        %3705 = vmatprep.subr.mxu0 0.0
        %3706 = vmatpush1.msra.mxu0 0.0
        %3707 = vmatprep.subr.mxu0 0.0
        %3708 = vmatpush1.msra.mxu0 0.0
        %3709 = vmatprep.subr.mxu0 0.0
        %3710 = vmatpush1.msra.mxu0 0.0
        %3711 = vmatprep.subr.mxu0 0.0
        %3712 = vmatpush1.msra.mxu0 0.0
        %3713 = vmatprep.subr.mxu0 0.0
        %3714 = vmatpush1.msra.mxu0 0.0
        %3715 = vmatprep.subr.mxu0 0.0
        %3716 = vmatpush1.msra.mxu0 0.0
        %3717 = vmatprep.subr.mxu0 0.0
        %3718 = vmatpush1.msra.mxu0 0.0
        %3719 = vmatprep.subr.mxu0 0.0
        %3720 = vmatpush1.msra.mxu0 0.0
        %3721 = vmatprep.subr.mxu0 0.0
        %3722 = vmatpush1.msra.mxu0 0.0
        %3723 = vmatprep.subr.mxu0 0.0
        %3724 = vmatpush1.msra.mxu0 0.0
        %3725 = vmatprep.subr.mxu0 0.0
        %3726 = vmatpush1.msra.mxu0 0.0
        %3727 = vmatprep.subr.mxu0 0.0
        %3728 = vmatpush1.msra.mxu0 0.0
        %3729 = vmatprep.subr.mxu0 0.0
        %3730 = vmatpush1.msra.mxu0 0.0
        %3731 = vmatprep.subr.mxu0 0.0
        %3732 = vmatpush1.msra.mxu0 0.0
        %3733 = vmatprep.subr.mxu0 0.0
        %3734 = vmatpush1.msra.mxu0 0.0
        %3735 = vmatprep.subr.mxu0 0.0
        %3736 = vmatpush1.msra.mxu0 0.0
        %3737 = vmatprep.subr.mxu0 0.0
        %3738 = vmatpush1.msra.mxu0 0.0
        %3739 = vmatprep.subr.mxu0 0.0
        %3740 = vmatpush1.msra.mxu0 0.0
        %3741 = vmatprep.subr.mxu0 0.0
        %3742 = vmatpush1.msra.mxu0 0.0
        %3743 = vmatprep.subr.mxu0 0.0
        %3744 = vmatpush1.msra.mxu0 0.0
        %3745 = vmatprep.mubr.f32.mxu0 0.0
        %3746 = vmatmul.mubr.f32.gmra.mrb[0].mxu0 %v3676
        %v3747 = vpop.f32.mrb[0].mxu0
        %v3748 = vadd.f32 0.0, %v3747
        %v3749 = vpop.f32.mrb[0].mxu0
        %3750 = vdwg.mxu0
        %v3751 = vadd.f32 %v3597, %v3748
        %s3752 = scalar_lea.vmem %s2, 352
        %v3753 = vld [vmem:[%s3752] sm:$0xf]
        %s3754 = scalar_lea.vmem %s4, 120
        %v3755 = vld [vmem:[%s3754] sm:$0xf]
        %v3757 = vsel %vm2208, %v3755, 0
        %3759 = vmatprep.subr.mxu0 0.0
        %3760 = vmatpush1.msra.mxu0 %v3757
        %3761 = vmatprep.subr.mxu0 0.0
        %3762 = vmatpush1.msra.mxu0 0.0
        %3763 = vmatprep.subr.mxu0 0.0
        %3764 = vmatpush1.msra.mxu0 0.0
        %3765 = vmatprep.subr.mxu0 0.0
        %3766 = vmatpush1.msra.mxu0 0.0
        %3767 = vmatprep.subr.mxu0 0.0
        %3768 = vmatpush1.msra.mxu0 0.0
        %3769 = vmatprep.subr.mxu0 0.0
        %3770 = vmatpush1.msra.mxu0 0.0
        %3771 = vmatprep.subr.mxu0 0.0
        %3772 = vmatpush1.msra.mxu0 0.0
        %3773 = vmatprep.subr.mxu0 0.0
        %3774 = vmatpush1.msra.mxu0 0.0
        %3775 = vmatprep.subr.mxu0 0.0
        %3776 = vmatpush1.msra.mxu0 0.0
        %3777 = vmatprep.subr.mxu0 0.0
        %3778 = vmatpush1.msra.mxu0 0.0
        %3779 = vmatprep.subr.mxu0 0.0
        %3780 = vmatpush1.msra.mxu0 0.0
        %3781 = vmatprep.subr.mxu0 0.0
        %3782 = vmatpush1.msra.mxu0 0.0
        %3783 = vmatprep.subr.mxu0 0.0
        %3784 = vmatpush1.msra.mxu0 0.0
        %3785 = vmatprep.subr.mxu0 0.0
        %3786 = vmatpush1.msra.mxu0 0.0
        %3787 = vmatprep.subr.mxu0 0.0
        %3788 = vmatpush1.msra.mxu0 0.0
        %3789 = vmatprep.subr.mxu0 0.0
        %3790 = vmatpush1.msra.mxu0 0.0
        %3791 = vmatprep.subr.mxu0 0.0
        %3792 = vmatpush1.msra.mxu0 0.0
        %3793 = vmatprep.subr.mxu0 0.0
        %3794 = vmatpush1.msra.mxu0 0.0
        %3795 = vmatprep.subr.mxu0 0.0
        %3796 = vmatpush1.msra.mxu0 0.0
        %3797 = vmatprep.subr.mxu0 0.0
        %3798 = vmatpush1.msra.mxu0 0.0
        %3799 = vmatprep.subr.mxu0 0.0
        %3800 = vmatpush1.msra.mxu0 0.0
        %3801 = vmatprep.subr.mxu0 0.0
        %3802 = vmatpush1.msra.mxu0 0.0
        %3803 = vmatprep.subr.mxu0 0.0
        %3804 = vmatpush1.msra.mxu0 0.0
        %3805 = vmatprep.subr.mxu0 0.0
        %3806 = vmatpush1.msra.mxu0 0.0
        %3807 = vmatprep.subr.mxu0 0.0
        %3808 = vmatpush1.msra.mxu0 0.0
        %3809 = vmatprep.subr.mxu0 0.0
        %3810 = vmatpush1.msra.mxu0 0.0
        %3811 = vmatprep.subr.mxu0 0.0
        %3812 = vmatpush1.msra.mxu0 0.0
        %3813 = vmatprep.subr.mxu0 0.0
        %3814 = vmatpush1.msra.mxu0 0.0
        %3815 = vmatprep.subr.mxu0 0.0
        %3816 = vmatpush1.msra.mxu0 0.0
        %3817 = vmatprep.subr.mxu0 0.0
        %3818 = vmatpush1.msra.mxu0 0.0
        %3819 = vmatprep.subr.mxu0 0.0
        %3820 = vmatpush1.msra.mxu0 0.0
        %3821 = vmatprep.subr.mxu0 0.0
        %3822 = vmatpush1.msra.mxu0 0.0
        %3823 = vmatprep.mubr.f32.mxu0 0.0
        %3824 = vmatmul.mubr.f32.gmra.mrb[0].mxu0 %v2206
        %v3825 = vpop.f32.mrb[0].mxu0
        %v3826 = vadd.f32 0.0, %v3825
        %v3827 = vpop.f32.mrb[0].mxu0
        %3828 = vdwg.mxu0
        %v3830 = vsel %vm2204, %v3753, 0
        %v3833 = vsel %vm2208, %v3826, 0
        %3835 = vmatprep.subr.mxu0 0.0
        %3836 = vmatpush1.msra.mxu0 %v3833
        %3837 = vmatprep.subr.mxu0 0.0
        %3838 = vmatpush1.msra.mxu0 0.0
        %3839 = vmatprep.subr.mxu0 0.0
        %3840 = vmatpush1.msra.mxu0 0.0
        %3841 = vmatprep.subr.mxu0 0.0
        %3842 = vmatpush1.msra.mxu0 0.0
        %3843 = vmatprep.subr.mxu0 0.0
        %3844 = vmatpush1.msra.mxu0 0.0
        %3845 = vmatprep.subr.mxu0 0.0
        %3846 = vmatpush1.msra.mxu0 0.0
        %3847 = vmatprep.subr.mxu0 0.0
        %3848 = vmatpush1.msra.mxu0 0.0
        %3849 = vmatprep.subr.mxu0 0.0
        %3850 = vmatpush1.msra.mxu0 0.0
        %3851 = vmatprep.subr.mxu0 0.0
        %3852 = vmatpush1.msra.mxu0 0.0
        %3853 = vmatprep.subr.mxu0 0.0
        %3854 = vmatpush1.msra.mxu0 0.0
        %3855 = vmatprep.subr.mxu0 0.0
        %3856 = vmatpush1.msra.mxu0 0.0
        %3857 = vmatprep.subr.mxu0 0.0
        %3858 = vmatpush1.msra.mxu0 0.0
        %3859 = vmatprep.subr.mxu0 0.0
        %3860 = vmatpush1.msra.mxu0 0.0
        %3861 = vmatprep.subr.mxu0 0.0
        %3862 = vmatpush1.msra.mxu0 0.0
        %3863 = vmatprep.subr.mxu0 0.0
        %3864 = vmatpush1.msra.mxu0 0.0
        %3865 = vmatprep.subr.mxu0 0.0
        %3866 = vmatpush1.msra.mxu0 0.0
        %3867 = vmatprep.subr.mxu0 0.0
        %3868 = vmatpush1.msra.mxu0 0.0
        %3869 = vmatprep.subr.mxu0 0.0
        %3870 = vmatpush1.msra.mxu0 0.0
        %3871 = vmatprep.subr.mxu0 0.0
        %3872 = vmatpush1.msra.mxu0 0.0
        %3873 = vmatprep.subr.mxu0 0.0
        %3874 = vmatpush1.msra.mxu0 0.0
        %3875 = vmatprep.subr.mxu0 0.0
        %3876 = vmatpush1.msra.mxu0 0.0
        %3877 = vmatprep.subr.mxu0 0.0
        %3878 = vmatpush1.msra.mxu0 0.0
        %3879 = vmatprep.subr.mxu0 0.0
        %3880 = vmatpush1.msra.mxu0 0.0
        %3881 = vmatprep.subr.mxu0 0.0
        %3882 = vmatpush1.msra.mxu0 0.0
        %3883 = vmatprep.subr.mxu0 0.0
        %3884 = vmatpush1.msra.mxu0 0.0
        %3885 = vmatprep.subr.mxu0 0.0
        %3886 = vmatpush1.msra.mxu0 0.0
        %3887 = vmatprep.subr.mxu0 0.0
        %3888 = vmatpush1.msra.mxu0 0.0
        %3889 = vmatprep.subr.mxu0 0.0
        %3890 = vmatpush1.msra.mxu0 0.0
        %3891 = vmatprep.subr.mxu0 0.0
        %3892 = vmatpush1.msra.mxu0 0.0
        %3893 = vmatprep.subr.mxu0 0.0
        %3894 = vmatpush1.msra.mxu0 0.0
        %3895 = vmatprep.subr.mxu0 0.0
        %3896 = vmatpush1.msra.mxu0 0.0
        %3897 = vmatprep.subr.mxu0 0.0
        %3898 = vmatpush1.msra.mxu0 0.0
        %3899 = vmatprep.mubr.f32.mxu0 0.0
        %3900 = vmatmul.mubr.f32.gmra.mrb[0].mxu0 %v3830
        %v3901 = vpop.f32.mrb[0].mxu0
        %v3902 = vadd.f32 0.0, %v3901
        %v3903 = vpop.f32.mrb[0].mxu0
        %3904 = vdwg.mxu0
        %v3905 = vadd.f32 %v3751, %v3902
        %s3906 = sld [smem:[#allocation2 + $0x5]]
        %v3907 = vstv %s3906
        %v3908 = vadd.f32 %v3905, %v3907
        %v3909 = vmax.f32 %v3908, 0.0
        %s3910 = scalar_lea.vmem %s2, 480
        %v3911 = vld [vmem:[%s3910] sm:$0xf]
        %s3912 = scalar_lea.vmem %s4, 184
        %v3913 = vld [vmem:[%s3912] sm:$0x3]
        %v3915 = vsel %vm2673, %v3137, 0
        %v3918 = vsel %vm2677, %v3913, 0
        %3920 = vmatprep.subr.mxu0 0.0
        %3921 = vmatpush1.msra.mxu0 %v3918
        %3922 = vmatprep.subr.mxu0 0.0
        %3923 = vmatpush1.msra.mxu0 0.0
        %3924 = vmatprep.subr.mxu0 0.0
        %3925 = vmatpush1.msra.mxu0 0.0
        %3926 = vmatprep.subr.mxu0 0.0
        %3927 = vmatpush1.msra.mxu0 0.0
        %3928 = vmatprep.subr.mxu0 0.0
        %3929 = vmatpush1.msra.mxu0 0.0
        %3930 = vmatprep.subr.mxu0 0.0
        %3931 = vmatpush1.msra.mxu0 0.0
        %3932 = vmatprep.subr.mxu0 0.0
        %3933 = vmatpush1.msra.mxu0 0.0
        %3934 = vmatprep.subr.mxu0 0.0
        %3935 = vmatpush1.msra.mxu0 0.0
        %3936 = vmatprep.subr.mxu0 0.0
        %3937 = vmatpush1.msra.mxu0 0.0
        %3938 = vmatprep.subr.mxu0 0.0
        %3939 = vmatpush1.msra.mxu0 0.0
        %3940 = vmatprep.subr.mxu0 0.0
        %3941 = vmatpush1.msra.mxu0 0.0
        %3942 = vmatprep.subr.mxu0 0.0
        %3943 = vmatpush1.msra.mxu0 0.0
        %3944 = vmatprep.subr.mxu0 0.0
        %3945 = vmatpush1.msra.mxu0 0.0
        %3946 = vmatprep.subr.mxu0 0.0
        %3947 = vmatpush1.msra.mxu0 0.0
        %3948 = vmatprep.subr.mxu0 0.0
        %3949 = vmatpush1.msra.mxu0 0.0
        %3950 = vmatprep.subr.mxu0 0.0
        %3951 = vmatpush1.msra.mxu0 0.0
        %3952 = vmatprep.subr.mxu0 0.0
        %3953 = vmatpush1.msra.mxu0 0.0
        %3954 = vmatprep.subr.mxu0 0.0
        %3955 = vmatpush1.msra.mxu0 0.0
        %3956 = vmatprep.subr.mxu0 0.0
        %3957 = vmatpush1.msra.mxu0 0.0
        %3958 = vmatprep.subr.mxu0 0.0
        %3959 = vmatpush1.msra.mxu0 0.0
        %3960 = vmatprep.subr.mxu0 0.0
        %3961 = vmatpush1.msra.mxu0 0.0
        %3962 = vmatprep.subr.mxu0 0.0
        %3963 = vmatpush1.msra.mxu0 0.0
        %3964 = vmatprep.subr.mxu0 0.0
        %3965 = vmatpush1.msra.mxu0 0.0
        %3966 = vmatprep.subr.mxu0 0.0
        %3967 = vmatpush1.msra.mxu0 0.0
        %3968 = vmatprep.subr.mxu0 0.0
        %3969 = vmatpush1.msra.mxu0 0.0
        %3970 = vmatprep.subr.mxu0 0.0
        %3971 = vmatpush1.msra.mxu0 0.0
        %3972 = vmatprep.subr.mxu0 0.0
        %3973 = vmatpush1.msra.mxu0 0.0
        %3974 = vmatprep.subr.mxu0 0.0
        %3975 = vmatpush1.msra.mxu0 0.0
        %3976 = vmatprep.subr.mxu0 0.0
        %3977 = vmatpush1.msra.mxu0 0.0
        %3978 = vmatprep.subr.mxu0 0.0
        %3979 = vmatpush1.msra.mxu0 0.0
        %3980 = vmatprep.subr.mxu0 0.0
        %3981 = vmatpush1.msra.mxu0 0.0
        %3982 = vmatprep.subr.mxu0 0.0
        %3983 = vmatpush1.msra.mxu0 0.0
        %3984 = vmatprep.mubr.f32.mxu0 0.0
        %3985 = vmatmul.mubr.f32.gmra.mrb[0].mxu0 %v3915
        %v3986 = vpop.f32.mrb[0].mxu0
        %v3987 = vadd.f32 0.0, %v3986
        %v3988 = vpop.f32.mrb[0].mxu0
        %3989 = vdwg.mxu0
        %v3991 = vsel %vm2673, %v3911, 0
        %v3994 = vsel %vm2677, %v3987, 0
        %3996 = vmatprep.subr.mxu0 0.0
        %3997 = vmatpush1.msra.mxu0 %v3994
        %3998 = vmatprep.subr.mxu0 0.0
        %3999 = vmatpush1.msra.mxu0 0.0
        %4000 = vmatprep.subr.mxu0 0.0
        %4001 = vmatpush1.msra.mxu0 0.0
        %4002 = vmatprep.subr.mxu0 0.0
        %4003 = vmatpush1.msra.mxu0 0.0
        %4004 = vmatprep.subr.mxu0 0.0
        %4005 = vmatpush1.msra.mxu0 0.0
        %4006 = vmatprep.subr.mxu0 0.0
        %4007 = vmatpush1.msra.mxu0 0.0
        %4008 = vmatprep.subr.mxu0 0.0
        %4009 = vmatpush1.msra.mxu0 0.0
        %4010 = vmatprep.subr.mxu0 0.0
        %4011 = vmatpush1.msra.mxu0 0.0
        %4012 = vmatprep.subr.mxu0 0.0
        %4013 = vmatpush1.msra.mxu0 0.0
        %4014 = vmatprep.subr.mxu0 0.0
        %4015 = vmatpush1.msra.mxu0 0.0
        %4016 = vmatprep.subr.mxu0 0.0
        %4017 = vmatpush1.msra.mxu0 0.0
        %4018 = vmatprep.subr.mxu0 0.0
        %4019 = vmatpush1.msra.mxu0 0.0
        %4020 = vmatprep.subr.mxu0 0.0
        %4021 = vmatpush1.msra.mxu0 0.0
        %4022 = vmatprep.subr.mxu0 0.0
        %4023 = vmatpush1.msra.mxu0 0.0
        %4024 = vmatprep.subr.mxu0 0.0
        %4025 = vmatpush1.msra.mxu0 0.0
        %4026 = vmatprep.subr.mxu0 0.0
        %4027 = vmatpush1.msra.mxu0 0.0
        %4028 = vmatprep.subr.mxu0 0.0
        %4029 = vmatpush1.msra.mxu0 0.0
        %4030 = vmatprep.subr.mxu0 0.0
        %4031 = vmatpush1.msra.mxu0 0.0
        %4032 = vmatprep.subr.mxu0 0.0
        %4033 = vmatpush1.msra.mxu0 0.0
        %4034 = vmatprep.subr.mxu0 0.0
        %4035 = vmatpush1.msra.mxu0 0.0
        %4036 = vmatprep.subr.mxu0 0.0
        %4037 = vmatpush1.msra.mxu0 0.0
        %4038 = vmatprep.subr.mxu0 0.0
        %4039 = vmatpush1.msra.mxu0 0.0
        %4040 = vmatprep.subr.mxu0 0.0
        %4041 = vmatpush1.msra.mxu0 0.0
        %4042 = vmatprep.subr.mxu0 0.0
        %4043 = vmatpush1.msra.mxu0 0.0
        %4044 = vmatprep.subr.mxu0 0.0
        %4045 = vmatpush1.msra.mxu0 0.0
        %4046 = vmatprep.subr.mxu0 0.0
        %4047 = vmatpush1.msra.mxu0 0.0
        %4048 = vmatprep.subr.mxu0 0.0
        %4049 = vmatpush1.msra.mxu0 0.0
        %4050 = vmatprep.subr.mxu0 0.0
        %4051 = vmatpush1.msra.mxu0 0.0
        %4052 = vmatprep.subr.mxu0 0.0
        %4053 = vmatpush1.msra.mxu0 0.0
        %4054 = vmatprep.subr.mxu0 0.0
        %4055 = vmatpush1.msra.mxu0 0.0
        %4056 = vmatprep.subr.mxu0 0.0
        %4057 = vmatpush1.msra.mxu0 0.0
        %4058 = vmatprep.subr.mxu0 0.0
        %4059 = vmatpush1.msra.mxu0 0.0
        %4060 = vmatprep.mubr.f32.mxu0 0.0
        %4061 = vmatmul.mubr.f32.gmra.mrb[0].mxu0 %v3991
        %v4062 = vpop.f32.mrb[0].mxu0
        %v4063 = vadd.f32 0.0, %v4062
        %v4064 = vpop.f32.mrb[0].mxu0
        %4065 = vdwg.mxu0
        %v4066 = vadd.f32 %v3909, %v4063
        %s4067 = scalar_lea.vmem %s2, 368
        %v4068 = vld [vmem:[%s4067] sm:$0xff]
        %s4069 = scalar_lea.vmem %s4, 128
        %v4070 = vld [vmem:[%s4069] sm:$0xff]
        %4071 = vmatprep.subr.mxu0 0.0
        %4072 = vmatpush1.msra.mxu0 %v4070
        %4073 = vmatprep.subr.mxu0 0.0
        %4074 = vmatpush1.msra.mxu0 0.0
        %4075 = vmatprep.subr.mxu0 0.0
        %4076 = vmatpush1.msra.mxu0 0.0
        %4077 = vmatprep.subr.mxu0 0.0
        %4078 = vmatpush1.msra.mxu0 0.0
        %4079 = vmatprep.subr.mxu0 0.0
        %4080 = vmatpush1.msra.mxu0 0.0
        %4081 = vmatprep.subr.mxu0 0.0
        %4082 = vmatpush1.msra.mxu0 0.0
        %4083 = vmatprep.subr.mxu0 0.0
        %4084 = vmatpush1.msra.mxu0 0.0
        %4085 = vmatprep.subr.mxu0 0.0
        %4086 = vmatpush1.msra.mxu0 0.0
        %4087 = vmatprep.subr.mxu0 0.0
        %4088 = vmatpush1.msra.mxu0 0.0
        %4089 = vmatprep.subr.mxu0 0.0
        %4090 = vmatpush1.msra.mxu0 0.0
        %4091 = vmatprep.subr.mxu0 0.0
        %4092 = vmatpush1.msra.mxu0 0.0
        %4093 = vmatprep.subr.mxu0 0.0
        %4094 = vmatpush1.msra.mxu0 0.0
        %4095 = vmatprep.subr.mxu0 0.0
        %4096 = vmatpush1.msra.mxu0 0.0
        %4097 = vmatprep.subr.mxu0 0.0
        %4098 = vmatpush1.msra.mxu0 0.0
        %4099 = vmatprep.subr.mxu0 0.0
        %4100 = vmatpush1.msra.mxu0 0.0
        %4101 = vmatprep.subr.mxu0 0.0
        %4102 = vmatpush1.msra.mxu0 0.0
        %4103 = vmatprep.subr.mxu0 0.0
        %4104 = vmatpush1.msra.mxu0 0.0
        %4105 = vmatprep.subr.mxu0 0.0
        %4106 = vmatpush1.msra.mxu0 0.0
        %4107 = vmatprep.subr.mxu0 0.0
        %4108 = vmatpush1.msra.mxu0 0.0
        %4109 = vmatprep.subr.mxu0 0.0
        %4110 = vmatpush1.msra.mxu0 0.0
        %4111 = vmatprep.subr.mxu0 0.0
        %4112 = vmatpush1.msra.mxu0 0.0
        %4113 = vmatprep.subr.mxu0 0.0
        %4114 = vmatpush1.msra.mxu0 0.0
        %4115 = vmatprep.subr.mxu0 0.0
        %4116 = vmatpush1.msra.mxu0 0.0
        %4117 = vmatprep.subr.mxu0 0.0
        %4118 = vmatpush1.msra.mxu0 0.0
        %4119 = vmatprep.subr.mxu0 0.0
        %4120 = vmatpush1.msra.mxu0 0.0
        %4121 = vmatprep.subr.mxu0 0.0
        %4122 = vmatpush1.msra.mxu0 0.0
        %4123 = vmatprep.subr.mxu0 0.0
        %4124 = vmatpush1.msra.mxu0 0.0
        %4125 = vmatprep.subr.mxu0 0.0
        %4126 = vmatpush1.msra.mxu0 0.0
        %4127 = vmatprep.subr.mxu0 0.0
        %4128 = vmatpush1.msra.mxu0 0.0
        %4129 = vmatprep.subr.mxu0 0.0
        %4130 = vmatpush1.msra.mxu0 0.0
        %4131 = vmatprep.subr.mxu0 0.0
        %4132 = vmatpush1.msra.mxu0 0.0
        %4133 = vmatprep.subr.mxu0 0.0
        %4134 = vmatpush1.msra.mxu0 0.0
        %4135 = vmatprep.mubr.f32.mxu0 0.0
        %4136 = vmatmul.mubr.f32.gmra.mrb[0].mxu0 %v1460
        %v4137 = vpop.f32.mrb[0].mxu0
        %v4138 = vadd.f32 0.0, %v4137
        %v4139 = vpop.f32.mrb[0].mxu0
        %4140 = vdwg.mxu0
        %s4141 = scalar_lea.vmem %s2, 384
        %v4142 = vld [vmem:[%s4141] sm:$0xff]
        %s4143 = scalar_lea.vmem %s4, 136
        %v4144 = vld [vmem:[%s4143] sm:$0xff]
        %4145 = vmatprep.subr.mxu0 0.0
        %4146 = vmatpush1.msra.mxu0 %v4144
        %4147 = vmatprep.subr.mxu0 0.0
        %4148 = vmatpush1.msra.mxu0 0.0
        %4149 = vmatprep.subr.mxu0 0.0
        %4150 = vmatpush1.msra.mxu0 0.0
        %4151 = vmatprep.subr.mxu0 0.0
        %4152 = vmatpush1.msra.mxu0 0.0
        %4153 = vmatprep.subr.mxu0 0.0
        %4154 = vmatpush1.msra.mxu0 0.0
        %4155 = vmatprep.subr.mxu0 0.0
        %4156 = vmatpush1.msra.mxu0 0.0
        %4157 = vmatprep.subr.mxu0 0.0
        %4158 = vmatpush1.msra.mxu0 0.0
        %4159 = vmatprep.subr.mxu0 0.0
        %4160 = vmatpush1.msra.mxu0 0.0
        %4161 = vmatprep.subr.mxu0 0.0
        %4162 = vmatpush1.msra.mxu0 0.0
        %4163 = vmatprep.subr.mxu0 0.0
        %4164 = vmatpush1.msra.mxu0 0.0
        %4165 = vmatprep.subr.mxu0 0.0
        %4166 = vmatpush1.msra.mxu0 0.0
        %4167 = vmatprep.subr.mxu0 0.0
        %4168 = vmatpush1.msra.mxu0 0.0
        %4169 = vmatprep.subr.mxu0 0.0
        %4170 = vmatpush1.msra.mxu0 0.0
        %4171 = vmatprep.subr.mxu0 0.0
        %4172 = vmatpush1.msra.mxu0 0.0
        %4173 = vmatprep.subr.mxu0 0.0
        %4174 = vmatpush1.msra.mxu0 0.0
        %4175 = vmatprep.subr.mxu0 0.0
        %4176 = vmatpush1.msra.mxu0 0.0
        %4177 = vmatprep.subr.mxu0 0.0
        %4178 = vmatpush1.msra.mxu0 0.0
        %4179 = vmatprep.subr.mxu0 0.0
        %4180 = vmatpush1.msra.mxu0 0.0
        %4181 = vmatprep.subr.mxu0 0.0
        %4182 = vmatpush1.msra.mxu0 0.0
        %4183 = vmatprep.subr.mxu0 0.0
        %4184 = vmatpush1.msra.mxu0 0.0
        %4185 = vmatprep.subr.mxu0 0.0
        %4186 = vmatpush1.msra.mxu0 0.0
        %4187 = vmatprep.subr.mxu0 0.0
        %4188 = vmatpush1.msra.mxu0 0.0
        %4189 = vmatprep.subr.mxu0 0.0
        %4190 = vmatpush1.msra.mxu0 0.0
        %4191 = vmatprep.subr.mxu0 0.0
        %4192 = vmatpush1.msra.mxu0 0.0
        %4193 = vmatprep.subr.mxu0 0.0
        %4194 = vmatpush1.msra.mxu0 0.0
        %4195 = vmatprep.subr.mxu0 0.0
        %4196 = vmatpush1.msra.mxu0 0.0
        %4197 = vmatprep.subr.mxu0 0.0
        %4198 = vmatpush1.msra.mxu0 0.0
        %4199 = vmatprep.subr.mxu0 0.0
        %4200 = vmatpush1.msra.mxu0 0.0
        %4201 = vmatprep.subr.mxu0 0.0
        %4202 = vmatpush1.msra.mxu0 0.0
        %4203 = vmatprep.subr.mxu0 0.0
        %4204 = vmatpush1.msra.mxu0 0.0
        %4205 = vmatprep.subr.mxu0 0.0
        %4206 = vmatpush1.msra.mxu0 0.0
        %4207 = vmatprep.subr.mxu0 0.0
        %4208 = vmatpush1.msra.mxu0 0.0
        %4209 = vmatprep.mubr.f32.mxu0 0.0
        %4210 = vmatmul.mubr.f32.gmra.mrb[0].mxu0 %v1460
        %v4211 = vpop.f32.mrb[0].mxu0
        %v4212 = vadd.f32 0.0, %v4211
        %v4213 = vpop.f32.mrb[0].mxu0
        %4214 = vdwg.mxu0
        %v4216 = vsel %vm1458, %v4142, 0
        %4218 = vmatprep.subr.mxu0 0.0
        %4219 = vmatpush1.msra.mxu0 %v4212
        %4220 = vmatprep.subr.mxu0 0.0
        %4221 = vmatpush1.msra.mxu0 0.0
        %4222 = vmatprep.subr.mxu0 0.0
        %4223 = vmatpush1.msra.mxu0 0.0
        %4224 = vmatprep.subr.mxu0 0.0
        %4225 = vmatpush1.msra.mxu0 0.0
        %4226 = vmatprep.subr.mxu0 0.0
        %4227 = vmatpush1.msra.mxu0 0.0
        %4228 = vmatprep.subr.mxu0 0.0
        %4229 = vmatpush1.msra.mxu0 0.0
        %4230 = vmatprep.subr.mxu0 0.0
        %4231 = vmatpush1.msra.mxu0 0.0
        %4232 = vmatprep.subr.mxu0 0.0
        %4233 = vmatpush1.msra.mxu0 0.0
        %4234 = vmatprep.subr.mxu0 0.0
        %4235 = vmatpush1.msra.mxu0 0.0
        %4236 = vmatprep.subr.mxu0 0.0
        %4237 = vmatpush1.msra.mxu0 0.0
        %4238 = vmatprep.subr.mxu0 0.0
        %4239 = vmatpush1.msra.mxu0 0.0
        %4240 = vmatprep.subr.mxu0 0.0
        %4241 = vmatpush1.msra.mxu0 0.0
        %4242 = vmatprep.subr.mxu0 0.0
        %4243 = vmatpush1.msra.mxu0 0.0
        %4244 = vmatprep.subr.mxu0 0.0
        %4245 = vmatpush1.msra.mxu0 0.0
        %4246 = vmatprep.subr.mxu0 0.0
        %4247 = vmatpush1.msra.mxu0 0.0
        %4248 = vmatprep.subr.mxu0 0.0
        %4249 = vmatpush1.msra.mxu0 0.0
        %4250 = vmatprep.subr.mxu0 0.0
        %4251 = vmatpush1.msra.mxu0 0.0
        %4252 = vmatprep.subr.mxu0 0.0
        %4253 = vmatpush1.msra.mxu0 0.0
        %4254 = vmatprep.subr.mxu0 0.0
        %4255 = vmatpush1.msra.mxu0 0.0
        %4256 = vmatprep.subr.mxu0 0.0
        %4257 = vmatpush1.msra.mxu0 0.0
        %4258 = vmatprep.subr.mxu0 0.0
        %4259 = vmatpush1.msra.mxu0 0.0
        %4260 = vmatprep.subr.mxu0 0.0
        %4261 = vmatpush1.msra.mxu0 0.0
        %4262 = vmatprep.subr.mxu0 0.0
        %4263 = vmatpush1.msra.mxu0 0.0
        %4264 = vmatprep.subr.mxu0 0.0
        %4265 = vmatpush1.msra.mxu0 0.0
        %4266 = vmatprep.subr.mxu0 0.0
        %4267 = vmatpush1.msra.mxu0 0.0
        %4268 = vmatprep.subr.mxu0 0.0
        %4269 = vmatpush1.msra.mxu0 0.0
        %4270 = vmatprep.subr.mxu0 0.0
        %4271 = vmatpush1.msra.mxu0 0.0
        %4272 = vmatprep.subr.mxu0 0.0
        %4273 = vmatpush1.msra.mxu0 0.0
        %4274 = vmatprep.subr.mxu0 0.0
        %4275 = vmatpush1.msra.mxu0 0.0
        %4276 = vmatprep.subr.mxu0 0.0
        %4277 = vmatpush1.msra.mxu0 0.0
        %4278 = vmatprep.subr.mxu0 0.0
        %4279 = vmatpush1.msra.mxu0 0.0
        %4280 = vmatprep.subr.mxu0 0.0
        %4281 = vmatpush1.msra.mxu0 0.0
        %4282 = vmatprep.mubr.f32.mxu0 0.0
        %4283 = vmatmul.mubr.f32.gmra.mrb[0].mxu0 %v4216
        %v4284 = vpop.f32.mrb[0].mxu0
        %v4285 = vadd.f32 0.0, %v4284
        %v4286 = vpop.f32.mrb[0].mxu0
        %4287 = vdwg.mxu0
        %v4289 = vsel %vm1458, %v4068, 0
        %4291 = vmatprep.subr.mxu0 0.0
        %4292 = vmatpush1.msra.mxu0 %v4138
        %4293 = vmatprep.subr.mxu0 0.0
        %4294 = vmatpush1.msra.mxu0 0.0
        %4295 = vmatprep.subr.mxu0 0.0
        %4296 = vmatpush1.msra.mxu0 0.0
        %4297 = vmatprep.subr.mxu0 0.0
        %4298 = vmatpush1.msra.mxu0 0.0
        %4299 = vmatprep.subr.mxu0 0.0
        %4300 = vmatpush1.msra.mxu0 0.0
        %4301 = vmatprep.subr.mxu0 0.0
        %4302 = vmatpush1.msra.mxu0 0.0
        %4303 = vmatprep.subr.mxu0 0.0
        %4304 = vmatpush1.msra.mxu0 0.0
        %4305 = vmatprep.subr.mxu0 0.0
        %4306 = vmatpush1.msra.mxu0 0.0
        %4307 = vmatprep.subr.mxu0 0.0
        %4308 = vmatpush1.msra.mxu0 0.0
        %4309 = vmatprep.subr.mxu0 0.0
        %4310 = vmatpush1.msra.mxu0 0.0
        %4311 = vmatprep.subr.mxu0 0.0
        %4312 = vmatpush1.msra.mxu0 0.0
        %4313 = vmatprep.subr.mxu0 0.0
        %4314 = vmatpush1.msra.mxu0 0.0
        %4315 = vmatprep.subr.mxu0 0.0
        %4316 = vmatpush1.msra.mxu0 0.0
        %4317 = vmatprep.subr.mxu0 0.0
        %4318 = vmatpush1.msra.mxu0 0.0
        %4319 = vmatprep.subr.mxu0 0.0
        %4320 = vmatpush1.msra.mxu0 0.0
        %4321 = vmatprep.subr.mxu0 0.0
        %4322 = vmatpush1.msra.mxu0 0.0
        %4323 = vmatprep.subr.mxu0 0.0
        %4324 = vmatpush1.msra.mxu0 0.0
        %4325 = vmatprep.subr.mxu0 0.0
        %4326 = vmatpush1.msra.mxu0 0.0
        %4327 = vmatprep.subr.mxu0 0.0
        %4328 = vmatpush1.msra.mxu0 0.0
        %4329 = vmatprep.subr.mxu0 0.0
        %4330 = vmatpush1.msra.mxu0 0.0
        %4331 = vmatprep.subr.mxu0 0.0
        %4332 = vmatpush1.msra.mxu0 0.0
        %4333 = vmatprep.subr.mxu0 0.0
        %4334 = vmatpush1.msra.mxu0 0.0
        %4335 = vmatprep.subr.mxu0 0.0
        %4336 = vmatpush1.msra.mxu0 0.0
        %4337 = vmatprep.subr.mxu0 0.0
        %4338 = vmatpush1.msra.mxu0 0.0
        %4339 = vmatprep.subr.mxu0 0.0
        %4340 = vmatpush1.msra.mxu0 0.0
        %4341 = vmatprep.subr.mxu0 0.0
        %4342 = vmatpush1.msra.mxu0 0.0
        %4343 = vmatprep.subr.mxu0 0.0
        %4344 = vmatpush1.msra.mxu0 0.0
        %4345 = vmatprep.subr.mxu0 0.0
        %4346 = vmatpush1.msra.mxu0 0.0
        %4347 = vmatprep.subr.mxu0 0.0
        %4348 = vmatpush1.msra.mxu0 0.0
        %4349 = vmatprep.subr.mxu0 0.0
        %4350 = vmatpush1.msra.mxu0 0.0
        %4351 = vmatprep.subr.mxu0 0.0
        %4352 = vmatpush1.msra.mxu0 0.0
        %4353 = vmatprep.subr.mxu0 0.0
        %4354 = vmatpush1.msra.mxu0 0.0
        %4355 = vmatprep.mubr.f32.mxu0 0.0
        %4356 = vmatmul.mubr.f32.gmra.mrb[0].mxu0 %v4289
        %v4357 = vpop.f32.mrb[0].mxu0
        %v4358 = vadd.f32 %v4285, %v4357
        %v4359 = vpop.f32.mrb[0].mxu0
        %4360 = vdwg.mxu0
        %s4361 = scalar_lea.vmem %s2, 400
        %v4362 = vld [vmem:[%s4361] sm:$0xff]
        %s4363 = scalar_lea.vmem %s4, 144
        %v4364 = vld [vmem:[%s4363] sm:$0xff]
        %4365 = vmatprep.subr.mxu0 0.0
        %4366 = vmatpush1.msra.mxu0 %v4364
        %4367 = vmatprep.subr.mxu0 0.0
        %4368 = vmatpush1.msra.mxu0 0.0
        %4369 = vmatprep.subr.mxu0 0.0
        %4370 = vmatpush1.msra.mxu0 0.0
        %4371 = vmatprep.subr.mxu0 0.0
        %4372 = vmatpush1.msra.mxu0 0.0
        %4373 = vmatprep.subr.mxu0 0.0
        %4374 = vmatpush1.msra.mxu0 0.0
        %4375 = vmatprep.subr.mxu0 0.0
        %4376 = vmatpush1.msra.mxu0 0.0
        %4377 = vmatprep.subr.mxu0 0.0
        %4378 = vmatpush1.msra.mxu0 0.0
        %4379 = vmatprep.subr.mxu0 0.0
        %4380 = vmatpush1.msra.mxu0 0.0
        %4381 = vmatprep.subr.mxu0 0.0
        %4382 = vmatpush1.msra.mxu0 0.0
        %4383 = vmatprep.subr.mxu0 0.0
        %4384 = vmatpush1.msra.mxu0 0.0
        %4385 = vmatprep.subr.mxu0 0.0
        %4386 = vmatpush1.msra.mxu0 0.0
        %4387 = vmatprep.subr.mxu0 0.0
        %4388 = vmatpush1.msra.mxu0 0.0
        %4389 = vmatprep.subr.mxu0 0.0
        %4390 = vmatpush1.msra.mxu0 0.0
        %4391 = vmatprep.subr.mxu0 0.0
        %4392 = vmatpush1.msra.mxu0 0.0
        %4393 = vmatprep.subr.mxu0 0.0
        %4394 = vmatpush1.msra.mxu0 0.0
        %4395 = vmatprep.subr.mxu0 0.0
        %4396 = vmatpush1.msra.mxu0 0.0
        %4397 = vmatprep.subr.mxu0 0.0
        %4398 = vmatpush1.msra.mxu0 0.0
        %4399 = vmatprep.subr.mxu0 0.0
        %4400 = vmatpush1.msra.mxu0 0.0
        %4401 = vmatprep.subr.mxu0 0.0
        %4402 = vmatpush1.msra.mxu0 0.0
        %4403 = vmatprep.subr.mxu0 0.0
        %4404 = vmatpush1.msra.mxu0 0.0
        %4405 = vmatprep.subr.mxu0 0.0
        %4406 = vmatpush1.msra.mxu0 0.0
        %4407 = vmatprep.subr.mxu0 0.0
        %4408 = vmatpush1.msra.mxu0 0.0
        %4409 = vmatprep.subr.mxu0 0.0
        %4410 = vmatpush1.msra.mxu0 0.0
        %4411 = vmatprep.subr.mxu0 0.0
        %4412 = vmatpush1.msra.mxu0 0.0
        %4413 = vmatprep.subr.mxu0 0.0
        %4414 = vmatpush1.msra.mxu0 0.0
        %4415 = vmatprep.subr.mxu0 0.0
        %4416 = vmatpush1.msra.mxu0 0.0
        %4417 = vmatprep.subr.mxu0 0.0
        %4418 = vmatpush1.msra.mxu0 0.0
        %4419 = vmatprep.subr.mxu0 0.0
        %4420 = vmatpush1.msra.mxu0 0.0
        %4421 = vmatprep.subr.mxu0 0.0
        %4422 = vmatpush1.msra.mxu0 0.0
        %4423 = vmatprep.subr.mxu0 0.0
        %4424 = vmatpush1.msra.mxu0 0.0
        %4425 = vmatprep.subr.mxu0 0.0
        %4426 = vmatpush1.msra.mxu0 0.0
        %4427 = vmatprep.subr.mxu0 0.0
        %4428 = vmatpush1.msra.mxu0 0.0
        %4429 = vmatprep.mubr.f32.mxu0 0.0
        %4430 = vmatmul.mubr.f32.gmra.mrb[0].mxu0 %v1460
        %v4431 = vpop.f32.mrb[0].mxu0
        %v4432 = vadd.f32 0.0, %v4431
        %v4433 = vpop.f32.mrb[0].mxu0
        %4434 = vdwg.mxu0
        %v4436 = vsel %vm1458, %v4362, 0
        %4438 = vmatprep.subr.mxu0 0.0
        %4439 = vmatpush1.msra.mxu0 %v4432
        %4440 = vmatprep.subr.mxu0 0.0
        %4441 = vmatpush1.msra.mxu0 0.0
        %4442 = vmatprep.subr.mxu0 0.0
        %4443 = vmatpush1.msra.mxu0 0.0
        %4444 = vmatprep.subr.mxu0 0.0
        %4445 = vmatpush1.msra.mxu0 0.0
        %4446 = vmatprep.subr.mxu0 0.0
        %4447 = vmatpush1.msra.mxu0 0.0
        %4448 = vmatprep.subr.mxu0 0.0
        %4449 = vmatpush1.msra.mxu0 0.0
        %4450 = vmatprep.subr.mxu0 0.0
        %4451 = vmatpush1.msra.mxu0 0.0
        %4452 = vmatprep.subr.mxu0 0.0
        %4453 = vmatpush1.msra.mxu0 0.0
        %4454 = vmatprep.subr.mxu0 0.0
        %4455 = vmatpush1.msra.mxu0 0.0
        %4456 = vmatprep.subr.mxu0 0.0
        %4457 = vmatpush1.msra.mxu0 0.0
        %4458 = vmatprep.subr.mxu0 0.0
        %4459 = vmatpush1.msra.mxu0 0.0
        %4460 = vmatprep.subr.mxu0 0.0
        %4461 = vmatpush1.msra.mxu0 0.0
        %4462 = vmatprep.subr.mxu0 0.0
        %4463 = vmatpush1.msra.mxu0 0.0
        %4464 = vmatprep.subr.mxu0 0.0
        %4465 = vmatpush1.msra.mxu0 0.0
        %4466 = vmatprep.subr.mxu0 0.0
        %4467 = vmatpush1.msra.mxu0 0.0
        %4468 = vmatprep.subr.mxu0 0.0
        %4469 = vmatpush1.msra.mxu0 0.0
        %4470 = vmatprep.subr.mxu0 0.0
        %4471 = vmatpush1.msra.mxu0 0.0
        %4472 = vmatprep.subr.mxu0 0.0
        %4473 = vmatpush1.msra.mxu0 0.0
        %4474 = vmatprep.subr.mxu0 0.0
        %4475 = vmatpush1.msra.mxu0 0.0
        %4476 = vmatprep.subr.mxu0 0.0
        %4477 = vmatpush1.msra.mxu0 0.0
        %4478 = vmatprep.subr.mxu0 0.0
        %4479 = vmatpush1.msra.mxu0 0.0
        %4480 = vmatprep.subr.mxu0 0.0
        %4481 = vmatpush1.msra.mxu0 0.0
        %4482 = vmatprep.subr.mxu0 0.0
        %4483 = vmatpush1.msra.mxu0 0.0
        %4484 = vmatprep.subr.mxu0 0.0
        %4485 = vmatpush1.msra.mxu0 0.0
        %4486 = vmatprep.subr.mxu0 0.0
        %4487 = vmatpush1.msra.mxu0 0.0
        %4488 = vmatprep.subr.mxu0 0.0
        %4489 = vmatpush1.msra.mxu0 0.0
        %4490 = vmatprep.subr.mxu0 0.0
        %4491 = vmatpush1.msra.mxu0 0.0
        %4492 = vmatprep.subr.mxu0 0.0
        %4493 = vmatpush1.msra.mxu0 0.0
        %4494 = vmatprep.subr.mxu0 0.0
        %4495 = vmatpush1.msra.mxu0 0.0
        %4496 = vmatprep.subr.mxu0 0.0
        %4497 = vmatpush1.msra.mxu0 0.0
        %4498 = vmatprep.subr.mxu0 0.0
        %4499 = vmatpush1.msra.mxu0 0.0
        %4500 = vmatprep.subr.mxu0 0.0
        %4501 = vmatpush1.msra.mxu0 0.0
        %4502 = vmatprep.mubr.f32.mxu0 0.0
        %4503 = vmatmul.mubr.f32.gmra.mrb[0].mxu0 %v4436
        %v4504 = vpop.f32.mrb[0].mxu0
        %v4505 = vadd.f32 0.0, %v4504
        %v4506 = vpop.f32.mrb[0].mxu0
        %4507 = vdwg.mxu0
        %v4508 = vadd.f32 %v4358, %v4505
        %s4509 = scalar_lea.vmem %s2, 416
        %v4510 = vld [vmem:[%s4509] sm:$0xff]
        %s4511 = scalar_lea.vmem %s4, 152
        %v4512 = vld [vmem:[%s4511] sm:$0xff]
        %4513 = vmatprep.subr.mxu0 0.0
        %4514 = vmatpush1.msra.mxu0 %v4512
        %4515 = vmatprep.subr.mxu0 0.0
        %4516 = vmatpush1.msra.mxu0 0.0
        %4517 = vmatprep.subr.mxu0 0.0
        %4518 = vmatpush1.msra.mxu0 0.0
        %4519 = vmatprep.subr.mxu0 0.0
        %4520 = vmatpush1.msra.mxu0 0.0
        %4521 = vmatprep.subr.mxu0 0.0
        %4522 = vmatpush1.msra.mxu0 0.0
        %4523 = vmatprep.subr.mxu0 0.0
        %4524 = vmatpush1.msra.mxu0 0.0
        %4525 = vmatprep.subr.mxu0 0.0
        %4526 = vmatpush1.msra.mxu0 0.0
        %4527 = vmatprep.subr.mxu0 0.0
        %4528 = vmatpush1.msra.mxu0 0.0
        %4529 = vmatprep.subr.mxu0 0.0
        %4530 = vmatpush1.msra.mxu0 0.0
        %4531 = vmatprep.subr.mxu0 0.0
        %4532 = vmatpush1.msra.mxu0 0.0
        %4533 = vmatprep.subr.mxu0 0.0
        %4534 = vmatpush1.msra.mxu0 0.0
        %4535 = vmatprep.subr.mxu0 0.0
        %4536 = vmatpush1.msra.mxu0 0.0
        %4537 = vmatprep.subr.mxu0 0.0
        %4538 = vmatpush1.msra.mxu0 0.0
        %4539 = vmatprep.subr.mxu0 0.0
        %4540 = vmatpush1.msra.mxu0 0.0
        %4541 = vmatprep.subr.mxu0 0.0
        %4542 = vmatpush1.msra.mxu0 0.0
        %4543 = vmatprep.subr.mxu0 0.0
        %4544 = vmatpush1.msra.mxu0 0.0
        %4545 = vmatprep.subr.mxu0 0.0
        %4546 = vmatpush1.msra.mxu0 0.0
        %4547 = vmatprep.subr.mxu0 0.0
        %4548 = vmatpush1.msra.mxu0 0.0
        %4549 = vmatprep.subr.mxu0 0.0
        %4550 = vmatpush1.msra.mxu0 0.0
        %4551 = vmatprep.subr.mxu0 0.0
        %4552 = vmatpush1.msra.mxu0 0.0
        %4553 = vmatprep.subr.mxu0 0.0
        %4554 = vmatpush1.msra.mxu0 0.0
        %4555 = vmatprep.subr.mxu0 0.0
        %4556 = vmatpush1.msra.mxu0 0.0
        %4557 = vmatprep.subr.mxu0 0.0
        %4558 = vmatpush1.msra.mxu0 0.0
        %4559 = vmatprep.subr.mxu0 0.0
        %4560 = vmatpush1.msra.mxu0 0.0
        %4561 = vmatprep.subr.mxu0 0.0
        %4562 = vmatpush1.msra.mxu0 0.0
        %4563 = vmatprep.subr.mxu0 0.0
        %4564 = vmatpush1.msra.mxu0 0.0
        %4565 = vmatprep.subr.mxu0 0.0
        %4566 = vmatpush1.msra.mxu0 0.0
        %4567 = vmatprep.subr.mxu0 0.0
        %4568 = vmatpush1.msra.mxu0 0.0
        %4569 = vmatprep.subr.mxu0 0.0
        %4570 = vmatpush1.msra.mxu0 0.0
        %4571 = vmatprep.subr.mxu0 0.0
        %4572 = vmatpush1.msra.mxu0 0.0
        %4573 = vmatprep.subr.mxu0 0.0
        %4574 = vmatpush1.msra.mxu0 0.0
        %4575 = vmatprep.subr.mxu0 0.0
        %4576 = vmatpush1.msra.mxu0 0.0
        %4577 = vmatprep.mubr.f32.mxu0 0.0
        %4578 = vmatmul.mubr.f32.gmra.mrb[0].mxu0 %v1460
        %v4579 = vpop.f32.mrb[0].mxu0
        %v4580 = vadd.f32 0.0, %v4579
        %v4581 = vpop.f32.mrb[0].mxu0
        %4582 = vdwg.mxu0
        %v4584 = vsel %vm1458, %v4510, 0
        %4586 = vmatprep.subr.mxu0 0.0
        %4587 = vmatpush1.msra.mxu0 %v4580
        %4588 = vmatprep.subr.mxu0 0.0
        %4589 = vmatpush1.msra.mxu0 0.0
        %4590 = vmatprep.subr.mxu0 0.0
        %4591 = vmatpush1.msra.mxu0 0.0
        %4592 = vmatprep.subr.mxu0 0.0
        %4593 = vmatpush1.msra.mxu0 0.0
        %4594 = vmatprep.subr.mxu0 0.0
        %4595 = vmatpush1.msra.mxu0 0.0
        %4596 = vmatprep.subr.mxu0 0.0
        %4597 = vmatpush1.msra.mxu0 0.0
        %4598 = vmatprep.subr.mxu0 0.0
        %4599 = vmatpush1.msra.mxu0 0.0
        %4600 = vmatprep.subr.mxu0 0.0
        %4601 = vmatpush1.msra.mxu0 0.0
        %4602 = vmatprep.subr.mxu0 0.0
        %4603 = vmatpush1.msra.mxu0 0.0
        %4604 = vmatprep.subr.mxu0 0.0
        %4605 = vmatpush1.msra.mxu0 0.0
        %4606 = vmatprep.subr.mxu0 0.0
        %4607 = vmatpush1.msra.mxu0 0.0
        %4608 = vmatprep.subr.mxu0 0.0
        %4609 = vmatpush1.msra.mxu0 0.0
        %4610 = vmatprep.subr.mxu0 0.0
        %4611 = vmatpush1.msra.mxu0 0.0
        %4612 = vmatprep.subr.mxu0 0.0
        %4613 = vmatpush1.msra.mxu0 0.0
        %4614 = vmatprep.subr.mxu0 0.0
        %4615 = vmatpush1.msra.mxu0 0.0
        %4616 = vmatprep.subr.mxu0 0.0
        %4617 = vmatpush1.msra.mxu0 0.0
        %4618 = vmatprep.subr.mxu0 0.0
        %4619 = vmatpush1.msra.mxu0 0.0
        %4620 = vmatprep.subr.mxu0 0.0
        %4621 = vmatpush1.msra.mxu0 0.0
        %4622 = vmatprep.subr.mxu0 0.0
        %4623 = vmatpush1.msra.mxu0 0.0
        %4624 = vmatprep.subr.mxu0 0.0
        %4625 = vmatpush1.msra.mxu0 0.0
        %4626 = vmatprep.subr.mxu0 0.0
        %4627 = vmatpush1.msra.mxu0 0.0
        %4628 = vmatprep.subr.mxu0 0.0
        %4629 = vmatpush1.msra.mxu0 0.0
        %4630 = vmatprep.subr.mxu0 0.0
        %4631 = vmatpush1.msra.mxu0 0.0
        %4632 = vmatprep.subr.mxu0 0.0
        %4633 = vmatpush1.msra.mxu0 0.0
        %4634 = vmatprep.subr.mxu0 0.0
        %4635 = vmatpush1.msra.mxu0 0.0
        %4636 = vmatprep.subr.mxu0 0.0
        %4637 = vmatpush1.msra.mxu0 0.0
        %4638 = vmatprep.subr.mxu0 0.0
        %4639 = vmatpush1.msra.mxu0 0.0
        %4640 = vmatprep.subr.mxu0 0.0
        %4641 = vmatpush1.msra.mxu0 0.0
        %4642 = vmatprep.subr.mxu0 0.0
        %4643 = vmatpush1.msra.mxu0 0.0
        %4644 = vmatprep.subr.mxu0 0.0
        %4645 = vmatpush1.msra.mxu0 0.0
        %4646 = vmatprep.subr.mxu0 0.0
        %4647 = vmatpush1.msra.mxu0 0.0
        %4648 = vmatprep.subr.mxu0 0.0
        %4649 = vmatpush1.msra.mxu0 0.0
        %4650 = vmatprep.mubr.f32.mxu0 0.0
        %4651 = vmatmul.mubr.f32.gmra.mrb[0].mxu0 %v4584
        %v4652 = vpop.f32.mrb[0].mxu0
        %v4653 = vadd.f32 0.0, %v4652
        %v4654 = vpop.f32.mrb[0].mxu0
        %4655 = vdwg.mxu0
        %v4656 = vadd.f32 %v4508, %v4653
        %s4657 = scalar_lea.vmem %s2, 432
        %v4658 = vld [vmem:[%s4657] sm:$0xff]
        %s4659 = scalar_lea.vmem %s4, 160
        %v4660 = vld [vmem:[%s4659] sm:$0xff]
        %4661 = vmatprep.subr.mxu0 0.0
        %4662 = vmatpush1.msra.mxu0 %v4660
        %4663 = vmatprep.subr.mxu0 0.0
        %4664 = vmatpush1.msra.mxu0 0.0
        %4665 = vmatprep.subr.mxu0 0.0
        %4666 = vmatpush1.msra.mxu0 0.0
        %4667 = vmatprep.subr.mxu0 0.0
        %4668 = vmatpush1.msra.mxu0 0.0
        %4669 = vmatprep.subr.mxu0 0.0
        %4670 = vmatpush1.msra.mxu0 0.0
        %4671 = vmatprep.subr.mxu0 0.0
        %4672 = vmatpush1.msra.mxu0 0.0
        %4673 = vmatprep.subr.mxu0 0.0
        %4674 = vmatpush1.msra.mxu0 0.0
        %4675 = vmatprep.subr.mxu0 0.0
        %4676 = vmatpush1.msra.mxu0 0.0
        %4677 = vmatprep.subr.mxu0 0.0
        %4678 = vmatpush1.msra.mxu0 0.0
        %4679 = vmatprep.subr.mxu0 0.0
        %4680 = vmatpush1.msra.mxu0 0.0
        %4681 = vmatprep.subr.mxu0 0.0
        %4682 = vmatpush1.msra.mxu0 0.0
        %4683 = vmatprep.subr.mxu0 0.0
        %4684 = vmatpush1.msra.mxu0 0.0
        %4685 = vmatprep.subr.mxu0 0.0
        %4686 = vmatpush1.msra.mxu0 0.0
        %4687 = vmatprep.subr.mxu0 0.0
        %4688 = vmatpush1.msra.mxu0 0.0
        %4689 = vmatprep.subr.mxu0 0.0
        %4690 = vmatpush1.msra.mxu0 0.0
        %4691 = vmatprep.subr.mxu0 0.0
        %4692 = vmatpush1.msra.mxu0 0.0
        %4693 = vmatprep.subr.mxu0 0.0
        %4694 = vmatpush1.msra.mxu0 0.0
        %4695 = vmatprep.subr.mxu0 0.0
        %4696 = vmatpush1.msra.mxu0 0.0
        %4697 = vmatprep.subr.mxu0 0.0
        %4698 = vmatpush1.msra.mxu0 0.0
        %4699 = vmatprep.subr.mxu0 0.0
        %4700 = vmatpush1.msra.mxu0 0.0
        %4701 = vmatprep.subr.mxu0 0.0
        %4702 = vmatpush1.msra.mxu0 0.0
        %4703 = vmatprep.subr.mxu0 0.0
        %4704 = vmatpush1.msra.mxu0 0.0
        %4705 = vmatprep.subr.mxu0 0.0
        %4706 = vmatpush1.msra.mxu0 0.0
        %4707 = vmatprep.subr.mxu0 0.0
        %4708 = vmatpush1.msra.mxu0 0.0
        %4709 = vmatprep.subr.mxu0 0.0
        %4710 = vmatpush1.msra.mxu0 0.0
        %4711 = vmatprep.subr.mxu0 0.0
        %4712 = vmatpush1.msra.mxu0 0.0
        %4713 = vmatprep.subr.mxu0 0.0
        %4714 = vmatpush1.msra.mxu0 0.0
        %4715 = vmatprep.subr.mxu0 0.0
        %4716 = vmatpush1.msra.mxu0 0.0
        %4717 = vmatprep.subr.mxu0 0.0
        %4718 = vmatpush1.msra.mxu0 0.0
        %4719 = vmatprep.subr.mxu0 0.0
        %4720 = vmatpush1.msra.mxu0 0.0
        %4721 = vmatprep.subr.mxu0 0.0
        %4722 = vmatpush1.msra.mxu0 0.0
        %4723 = vmatprep.subr.mxu0 0.0
        %4724 = vmatpush1.msra.mxu0 0.0
        %4725 = vmatprep.mubr.f32.mxu0 0.0
        %4726 = vmatmul.mubr.f32.gmra.mrb[0].mxu0 %v1460
        %v4727 = vpop.f32.mrb[0].mxu0
        %v4728 = vadd.f32 0.0, %v4727
        %v4729 = vpop.f32.mrb[0].mxu0
        %4730 = vdwg.mxu0
        %v4732 = vsel %vm1458, %v4658, 0
        %4734 = vmatprep.subr.mxu0 0.0
        %4735 = vmatpush1.msra.mxu0 %v4728
        %4736 = vmatprep.subr.mxu0 0.0
        %4737 = vmatpush1.msra.mxu0 0.0
        %4738 = vmatprep.subr.mxu0 0.0
        %4739 = vmatpush1.msra.mxu0 0.0
        %4740 = vmatprep.subr.mxu0 0.0
        %4741 = vmatpush1.msra.mxu0 0.0
        %4742 = vmatprep.subr.mxu0 0.0
        %4743 = vmatpush1.msra.mxu0 0.0
        %4744 = vmatprep.subr.mxu0 0.0
        %4745 = vmatpush1.msra.mxu0 0.0
        %4746 = vmatprep.subr.mxu0 0.0
        %4747 = vmatpush1.msra.mxu0 0.0
        %4748 = vmatprep.subr.mxu0 0.0
        %4749 = vmatpush1.msra.mxu0 0.0
        %4750 = vmatprep.subr.mxu0 0.0
        %4751 = vmatpush1.msra.mxu0 0.0
        %4752 = vmatprep.subr.mxu0 0.0
        %4753 = vmatpush1.msra.mxu0 0.0
        %4754 = vmatprep.subr.mxu0 0.0
        %4755 = vmatpush1.msra.mxu0 0.0
        %4756 = vmatprep.subr.mxu0 0.0
        %4757 = vmatpush1.msra.mxu0 0.0
        %4758 = vmatprep.subr.mxu0 0.0
        %4759 = vmatpush1.msra.mxu0 0.0
        %4760 = vmatprep.subr.mxu0 0.0
        %4761 = vmatpush1.msra.mxu0 0.0
        %4762 = vmatprep.subr.mxu0 0.0
        %4763 = vmatpush1.msra.mxu0 0.0
        %4764 = vmatprep.subr.mxu0 0.0
        %4765 = vmatpush1.msra.mxu0 0.0
        %4766 = vmatprep.subr.mxu0 0.0
        %4767 = vmatpush1.msra.mxu0 0.0
        %4768 = vmatprep.subr.mxu0 0.0
        %4769 = vmatpush1.msra.mxu0 0.0
        %4770 = vmatprep.subr.mxu0 0.0
        %4771 = vmatpush1.msra.mxu0 0.0
        %4772 = vmatprep.subr.mxu0 0.0
        %4773 = vmatpush1.msra.mxu0 0.0
        %4774 = vmatprep.subr.mxu0 0.0
        %4775 = vmatpush1.msra.mxu0 0.0
        %4776 = vmatprep.subr.mxu0 0.0
        %4777 = vmatpush1.msra.mxu0 0.0
        %4778 = vmatprep.subr.mxu0 0.0
        %4779 = vmatpush1.msra.mxu0 0.0
        %4780 = vmatprep.subr.mxu0 0.0
        %4781 = vmatpush1.msra.mxu0 0.0
        %4782 = vmatprep.subr.mxu0 0.0
        %4783 = vmatpush1.msra.mxu0 0.0
        %4784 = vmatprep.subr.mxu0 0.0
        %4785 = vmatpush1.msra.mxu0 0.0
        %4786 = vmatprep.subr.mxu0 0.0
        %4787 = vmatpush1.msra.mxu0 0.0
        %4788 = vmatprep.subr.mxu0 0.0
        %4789 = vmatpush1.msra.mxu0 0.0
        %4790 = vmatprep.subr.mxu0 0.0
        %4791 = vmatpush1.msra.mxu0 0.0
        %4792 = vmatprep.subr.mxu0 0.0
        %4793 = vmatpush1.msra.mxu0 0.0
        %4794 = vmatprep.subr.mxu0 0.0
        %4795 = vmatpush1.msra.mxu0 0.0
        %4796 = vmatprep.subr.mxu0 0.0
        %4797 = vmatpush1.msra.mxu0 0.0
        %4798 = vmatprep.mubr.f32.mxu0 0.0
        %4799 = vmatmul.mubr.f32.gmra.mrb[0].mxu0 %v4732
        %v4800 = vpop.f32.mrb[0].mxu0
        %v4801 = vadd.f32 0.0, %v4800
        %v4802 = vpop.f32.mrb[0].mxu0
        %4803 = vdwg.mxu0
        %v4804 = vadd.f32 %v4656, %v4801
        %s4805 = scalar_lea.vmem %s2, 448
        %v4806 = vld [vmem:[%s4805] sm:$0xff]
        %s4807 = scalar_lea.vmem %s4, 168
        %v4808 = vld [vmem:[%s4807] sm:$0xff]
        %4809 = vmatprep.subr.mxu0 0.0
        %4810 = vmatpush1.msra.mxu0 %v4808
        %4811 = vmatprep.subr.mxu0 0.0
        %4812 = vmatpush1.msra.mxu0 0.0
        %4813 = vmatprep.subr.mxu0 0.0
        %4814 = vmatpush1.msra.mxu0 0.0
        %4815 = vmatprep.subr.mxu0 0.0
        %4816 = vmatpush1.msra.mxu0 0.0
        %4817 = vmatprep.subr.mxu0 0.0
        %4818 = vmatpush1.msra.mxu0 0.0
        %4819 = vmatprep.subr.mxu0 0.0
        %4820 = vmatpush1.msra.mxu0 0.0
        %4821 = vmatprep.subr.mxu0 0.0
        %4822 = vmatpush1.msra.mxu0 0.0
        %4823 = vmatprep.subr.mxu0 0.0
        %4824 = vmatpush1.msra.mxu0 0.0
        %4825 = vmatprep.subr.mxu0 0.0
        %4826 = vmatpush1.msra.mxu0 0.0
        %4827 = vmatprep.subr.mxu0 0.0
        %4828 = vmatpush1.msra.mxu0 0.0
        %4829 = vmatprep.subr.mxu0 0.0
        %4830 = vmatpush1.msra.mxu0 0.0
        %4831 = vmatprep.subr.mxu0 0.0
        %4832 = vmatpush1.msra.mxu0 0.0
        %4833 = vmatprep.subr.mxu0 0.0
        %4834 = vmatpush1.msra.mxu0 0.0
        %4835 = vmatprep.subr.mxu0 0.0
        %4836 = vmatpush1.msra.mxu0 0.0
        %4837 = vmatprep.subr.mxu0 0.0
        %4838 = vmatpush1.msra.mxu0 0.0
        %4839 = vmatprep.subr.mxu0 0.0
        %4840 = vmatpush1.msra.mxu0 0.0
        %4841 = vmatprep.subr.mxu0 0.0
        %4842 = vmatpush1.msra.mxu0 0.0
        %4843 = vmatprep.subr.mxu0 0.0
        %4844 = vmatpush1.msra.mxu0 0.0
        %4845 = vmatprep.subr.mxu0 0.0
        %4846 = vmatpush1.msra.mxu0 0.0
        %4847 = vmatprep.subr.mxu0 0.0
        %4848 = vmatpush1.msra.mxu0 0.0
        %4849 = vmatprep.subr.mxu0 0.0
        %4850 = vmatpush1.msra.mxu0 0.0
        %4851 = vmatprep.subr.mxu0 0.0
        %4852 = vmatpush1.msra.mxu0 0.0
        %4853 = vmatprep.subr.mxu0 0.0
        %4854 = vmatpush1.msra.mxu0 0.0
        %4855 = vmatprep.subr.mxu0 0.0
        %4856 = vmatpush1.msra.mxu0 0.0
        %4857 = vmatprep.subr.mxu0 0.0
        %4858 = vmatpush1.msra.mxu0 0.0
        %4859 = vmatprep.subr.mxu0 0.0
        %4860 = vmatpush1.msra.mxu0 0.0
        %4861 = vmatprep.subr.mxu0 0.0
        %4862 = vmatpush1.msra.mxu0 0.0
        %4863 = vmatprep.subr.mxu0 0.0
        %4864 = vmatpush1.msra.mxu0 0.0
        %4865 = vmatprep.subr.mxu0 0.0
        %4866 = vmatpush1.msra.mxu0 0.0
        %4867 = vmatprep.subr.mxu0 0.0
        %4868 = vmatpush1.msra.mxu0 0.0
        %4869 = vmatprep.subr.mxu0 0.0
        %4870 = vmatpush1.msra.mxu0 0.0
        %4871 = vmatprep.subr.mxu0 0.0
        %4872 = vmatpush1.msra.mxu0 0.0
        %4873 = vmatprep.mubr.f32.mxu0 0.0
        %4874 = vmatmul.mubr.f32.gmra.mrb[0].mxu0 %v1460
        %v4875 = vpop.f32.mrb[0].mxu0
        %v4876 = vadd.f32 0.0, %v4875
        %v4877 = vpop.f32.mrb[0].mxu0
        %4878 = vdwg.mxu0
        %v4880 = vsel %vm1458, %v4806, 0
        %4882 = vmatprep.subr.mxu0 0.0
        %4883 = vmatpush1.msra.mxu0 %v4876
        %4884 = vmatprep.subr.mxu0 0.0
        %4885 = vmatpush1.msra.mxu0 0.0
        %4886 = vmatprep.subr.mxu0 0.0
        %4887 = vmatpush1.msra.mxu0 0.0
        %4888 = vmatprep.subr.mxu0 0.0
        %4889 = vmatpush1.msra.mxu0 0.0
        %4890 = vmatprep.subr.mxu0 0.0
        %4891 = vmatpush1.msra.mxu0 0.0
        %4892 = vmatprep.subr.mxu0 0.0
        %4893 = vmatpush1.msra.mxu0 0.0
        %4894 = vmatprep.subr.mxu0 0.0
        %4895 = vmatpush1.msra.mxu0 0.0
        %4896 = vmatprep.subr.mxu0 0.0
        %4897 = vmatpush1.msra.mxu0 0.0
        %4898 = vmatprep.subr.mxu0 0.0
        %4899 = vmatpush1.msra.mxu0 0.0
        %4900 = vmatprep.subr.mxu0 0.0
        %4901 = vmatpush1.msra.mxu0 0.0
        %4902 = vmatprep.subr.mxu0 0.0
        %4903 = vmatpush1.msra.mxu0 0.0
        %4904 = vmatprep.subr.mxu0 0.0
        %4905 = vmatpush1.msra.mxu0 0.0
        %4906 = vmatprep.subr.mxu0 0.0
        %4907 = vmatpush1.msra.mxu0 0.0
        %4908 = vmatprep.subr.mxu0 0.0
        %4909 = vmatpush1.msra.mxu0 0.0
        %4910 = vmatprep.subr.mxu0 0.0
        %4911 = vmatpush1.msra.mxu0 0.0
        %4912 = vmatprep.subr.mxu0 0.0
        %4913 = vmatpush1.msra.mxu0 0.0
        %4914 = vmatprep.subr.mxu0 0.0
        %4915 = vmatpush1.msra.mxu0 0.0
        %4916 = vmatprep.subr.mxu0 0.0
        %4917 = vmatpush1.msra.mxu0 0.0
        %4918 = vmatprep.subr.mxu0 0.0
        %4919 = vmatpush1.msra.mxu0 0.0
        %4920 = vmatprep.subr.mxu0 0.0
        %4921 = vmatpush1.msra.mxu0 0.0
        %4922 = vmatprep.subr.mxu0 0.0
        %4923 = vmatpush1.msra.mxu0 0.0
        %4924 = vmatprep.subr.mxu0 0.0
        %4925 = vmatpush1.msra.mxu0 0.0
        %4926 = vmatprep.subr.mxu0 0.0
        %4927 = vmatpush1.msra.mxu0 0.0
        %4928 = vmatprep.subr.mxu0 0.0
        %4929 = vmatpush1.msra.mxu0 0.0
        %4930 = vmatprep.subr.mxu0 0.0
        %4931 = vmatpush1.msra.mxu0 0.0
        %4932 = vmatprep.subr.mxu0 0.0
        %4933 = vmatpush1.msra.mxu0 0.0
        %4934 = vmatprep.subr.mxu0 0.0
        %4935 = vmatpush1.msra.mxu0 0.0
        %4936 = vmatprep.subr.mxu0 0.0
        %4937 = vmatpush1.msra.mxu0 0.0
        %4938 = vmatprep.subr.mxu0 0.0
        %4939 = vmatpush1.msra.mxu0 0.0
        %4940 = vmatprep.subr.mxu0 0.0
        %4941 = vmatpush1.msra.mxu0 0.0
        %4942 = vmatprep.subr.mxu0 0.0
        %4943 = vmatpush1.msra.mxu0 0.0
        %4944 = vmatprep.subr.mxu0 0.0
        %4945 = vmatpush1.msra.mxu0 0.0
        %4946 = vmatprep.mubr.f32.mxu0 0.0
        %4947 = vmatmul.mubr.f32.gmra.mrb[0].mxu0 %v4880
        %v4948 = vpop.f32.mrb[0].mxu0
        %v4949 = vadd.f32 0.0, %v4948
        %v4950 = vpop.f32.mrb[0].mxu0
        %4951 = vdwg.mxu0
        %v4952 = vadd.f32 %v4804, %v4949
        %s4953 = scalar_lea.vmem %s2, 464
        %v4954 = vld [vmem:[%s4953] sm:$0xff]
        %s4955 = scalar_lea.vmem %s4, 176
        %v4956 = vld [vmem:[%s4955] sm:$0xff]
        %4957 = vmatprep.subr.mxu0 0.0
        %4958 = vmatpush1.msra.mxu0 %v4956
        %4959 = vmatprep.subr.mxu0 0.0
        %4960 = vmatpush1.msra.mxu0 0.0
        %4961 = vmatprep.subr.mxu0 0.0
        %4962 = vmatpush1.msra.mxu0 0.0
        %4963 = vmatprep.subr.mxu0 0.0
        %4964 = vmatpush1.msra.mxu0 0.0
        %4965 = vmatprep.subr.mxu0 0.0
        %4966 = vmatpush1.msra.mxu0 0.0
        %4967 = vmatprep.subr.mxu0 0.0
        %4968 = vmatpush1.msra.mxu0 0.0
        %4969 = vmatprep.subr.mxu0 0.0
        %4970 = vmatpush1.msra.mxu0 0.0
        %4971 = vmatprep.subr.mxu0 0.0
        %4972 = vmatpush1.msra.mxu0 0.0
        %4973 = vmatprep.subr.mxu0 0.0
        %4974 = vmatpush1.msra.mxu0 0.0
        %4975 = vmatprep.subr.mxu0 0.0
        %4976 = vmatpush1.msra.mxu0 0.0
        %4977 = vmatprep.subr.mxu0 0.0
        %4978 = vmatpush1.msra.mxu0 0.0
        %4979 = vmatprep.subr.mxu0 0.0
        %4980 = vmatpush1.msra.mxu0 0.0
        %4981 = vmatprep.subr.mxu0 0.0
        %4982 = vmatpush1.msra.mxu0 0.0
        %4983 = vmatprep.subr.mxu0 0.0
        %4984 = vmatpush1.msra.mxu0 0.0
        %4985 = vmatprep.subr.mxu0 0.0
        %4986 = vmatpush1.msra.mxu0 0.0
        %4987 = vmatprep.subr.mxu0 0.0
        %4988 = vmatpush1.msra.mxu0 0.0
        %4989 = vmatprep.subr.mxu0 0.0
        %4990 = vmatpush1.msra.mxu0 0.0
        %4991 = vmatprep.subr.mxu0 0.0
        %4992 = vmatpush1.msra.mxu0 0.0
        %4993 = vmatprep.subr.mxu0 0.0
        %4994 = vmatpush1.msra.mxu0 0.0
        %4995 = vmatprep.subr.mxu0 0.0
        %4996 = vmatpush1.msra.mxu0 0.0
        %4997 = vmatprep.subr.mxu0 0.0
        %4998 = vmatpush1.msra.mxu0 0.0
        %4999 = vmatprep.subr.mxu0 0.0
        %5000 = vmatpush1.msra.mxu0 0.0
        %5001 = vmatprep.subr.mxu0 0.0
        %5002 = vmatpush1.msra.mxu0 0.0
        %5003 = vmatprep.subr.mxu0 0.0
        %5004 = vmatpush1.msra.mxu0 0.0
        %5005 = vmatprep.subr.mxu0 0.0
        %5006 = vmatpush1.msra.mxu0 0.0
        %5007 = vmatprep.subr.mxu0 0.0
        %5008 = vmatpush1.msra.mxu0 0.0
        %5009 = vmatprep.subr.mxu0 0.0
        %5010 = vmatpush1.msra.mxu0 0.0
        %5011 = vmatprep.subr.mxu0 0.0
        %5012 = vmatpush1.msra.mxu0 0.0
        %5013 = vmatprep.subr.mxu0 0.0
        %5014 = vmatpush1.msra.mxu0 0.0
        %5015 = vmatprep.subr.mxu0 0.0
        %5016 = vmatpush1.msra.mxu0 0.0
        %5017 = vmatprep.subr.mxu0 0.0
        %5018 = vmatpush1.msra.mxu0 0.0
        %5019 = vmatprep.subr.mxu0 0.0
        %5020 = vmatpush1.msra.mxu0 0.0
        %5021 = vmatprep.mubr.f32.mxu0 0.0
        %5022 = vmatmul.mubr.f32.gmra.mrb[0].mxu0 %v1460
        %v5023 = vpop.f32.mrb[0].mxu0
        %v5024 = vadd.f32 0.0, %v5023
        %v5025 = vpop.f32.mrb[0].mxu0
        %5026 = vdwg.mxu0
        %v5028 = vsel %vm1458, %v4954, 0
        %5030 = vmatprep.subr.mxu0 0.0
        %5031 = vmatpush1.msra.mxu0 %v5024
        %5032 = vmatprep.subr.mxu0 0.0
        %5033 = vmatpush1.msra.mxu0 0.0
        %5034 = vmatprep.subr.mxu0 0.0
        %5035 = vmatpush1.msra.mxu0 0.0
        %5036 = vmatprep.subr.mxu0 0.0
        %5037 = vmatpush1.msra.mxu0 0.0
        %5038 = vmatprep.subr.mxu0 0.0
        %5039 = vmatpush1.msra.mxu0 0.0
        %5040 = vmatprep.subr.mxu0 0.0
        %5041 = vmatpush1.msra.mxu0 0.0
        %5042 = vmatprep.subr.mxu0 0.0
        %5043 = vmatpush1.msra.mxu0 0.0
        %5044 = vmatprep.subr.mxu0 0.0
        %5045 = vmatpush1.msra.mxu0 0.0
        %5046 = vmatprep.subr.mxu0 0.0
        %5047 = vmatpush1.msra.mxu0 0.0
        %5048 = vmatprep.subr.mxu0 0.0
        %5049 = vmatpush1.msra.mxu0 0.0
        %5050 = vmatprep.subr.mxu0 0.0
        %5051 = vmatpush1.msra.mxu0 0.0
        %5052 = vmatprep.subr.mxu0 0.0
        %5053 = vmatpush1.msra.mxu0 0.0
        %5054 = vmatprep.subr.mxu0 0.0
        %5055 = vmatpush1.msra.mxu0 0.0
        %5056 = vmatprep.subr.mxu0 0.0
        %5057 = vmatpush1.msra.mxu0 0.0
        %5058 = vmatprep.subr.mxu0 0.0
        %5059 = vmatpush1.msra.mxu0 0.0
        %5060 = vmatprep.subr.mxu0 0.0
        %5061 = vmatpush1.msra.mxu0 0.0
        %5062 = vmatprep.subr.mxu0 0.0
        %5063 = vmatpush1.msra.mxu0 0.0
        %5064 = vmatprep.subr.mxu0 0.0
        %5065 = vmatpush1.msra.mxu0 0.0
        %5066 = vmatprep.subr.mxu0 0.0
        %5067 = vmatpush1.msra.mxu0 0.0
        %5068 = vmatprep.subr.mxu0 0.0
        %5069 = vmatpush1.msra.mxu0 0.0
        %5070 = vmatprep.subr.mxu0 0.0
        %5071 = vmatpush1.msra.mxu0 0.0
        %5072 = vmatprep.subr.mxu0 0.0
        %5073 = vmatpush1.msra.mxu0 0.0
        %5074 = vmatprep.subr.mxu0 0.0
        %5075 = vmatpush1.msra.mxu0 0.0
        %5076 = vmatprep.subr.mxu0 0.0
        %5077 = vmatpush1.msra.mxu0 0.0
        %5078 = vmatprep.subr.mxu0 0.0
        %5079 = vmatpush1.msra.mxu0 0.0
        %5080 = vmatprep.subr.mxu0 0.0
        %5081 = vmatpush1.msra.mxu0 0.0
        %5082 = vmatprep.subr.mxu0 0.0
        %5083 = vmatpush1.msra.mxu0 0.0
        %5084 = vmatprep.subr.mxu0 0.0
        %5085 = vmatpush1.msra.mxu0 0.0
        %5086 = vmatprep.subr.mxu0 0.0
        %5087 = vmatpush1.msra.mxu0 0.0
        %5088 = vmatprep.subr.mxu0 0.0
        %5089 = vmatpush1.msra.mxu0 0.0
        %5090 = vmatprep.subr.mxu0 0.0
        %5091 = vmatpush1.msra.mxu0 0.0
        %5092 = vmatprep.subr.mxu0 0.0
        %5093 = vmatpush1.msra.mxu0 0.0
        %5094 = vmatprep.mubr.f32.mxu0 0.0
        %5095 = vmatmul.mubr.f32.gmra.mrb[0].mxu0 %v5028
        %v5096 = vpop.f32.mrb[0].mxu0
        %v5097 = vadd.f32 0.0, %v5096
        %v5098 = vpop.f32.mrb[0].mxu0
        %5099 = vdwg.mxu0
        %v5100 = vadd.f32 %v4952, %v5097
        %s5101 = sld [smem:[#allocation2 + $0x6]]
        %v5102 = vstv %s5101
        %v5103 = vadd.f32 %v5100, %v5102
        %v5104 = vmax.f32 %v5103, 0.0
        %s5105 = scalar_lea.vmem %s2, 496
        %v5106 = vld [vmem:[%s5105] sm:$0xff]
        %s5107 = scalar_lea.vmem %s4, 192
        %v5108 = vld [vmem:[%s5107] sm:$0xf]
        %v5110 = vsel %vm2204, %v4066, 0
        %v5113 = vsel %vm2208, %v5108, 0
        %5115 = vmatprep.subr.mxu0 0.0
        %5116 = vmatpush1.msra.mxu0 %v5113
        %5117 = vmatprep.subr.mxu0 0.0
        %5118 = vmatpush1.msra.mxu0 0.0
        %5119 = vmatprep.subr.mxu0 0.0
        %5120 = vmatpush1.msra.mxu0 0.0
        %5121 = vmatprep.subr.mxu0 0.0
        %5122 = vmatpush1.msra.mxu0 0.0
        %5123 = vmatprep.subr.mxu0 0.0
        %5124 = vmatpush1.msra.mxu0 0.0
        %5125 = vmatprep.subr.mxu0 0.0
        %5126 = vmatpush1.msra.mxu0 0.0
        %5127 = vmatprep.subr.mxu0 0.0
        %5128 = vmatpush1.msra.mxu0 0.0
        %5129 = vmatprep.subr.mxu0 0.0
        %5130 = vmatpush1.msra.mxu0 0.0
        %5131 = vmatprep.subr.mxu0 0.0
        %5132 = vmatpush1.msra.mxu0 0.0
        %5133 = vmatprep.subr.mxu0 0.0
        %5134 = vmatpush1.msra.mxu0 0.0
        %5135 = vmatprep.subr.mxu0 0.0
        %5136 = vmatpush1.msra.mxu0 0.0
        %5137 = vmatprep.subr.mxu0 0.0
        %5138 = vmatpush1.msra.mxu0 0.0
        %5139 = vmatprep.subr.mxu0 0.0
        %5140 = vmatpush1.msra.mxu0 0.0
        %5141 = vmatprep.subr.mxu0 0.0
        %5142 = vmatpush1.msra.mxu0 0.0
        %5143 = vmatprep.subr.mxu0 0.0
        %5144 = vmatpush1.msra.mxu0 0.0
        %5145 = vmatprep.subr.mxu0 0.0
        %5146 = vmatpush1.msra.mxu0 0.0
        %5147 = vmatprep.subr.mxu0 0.0
        %5148 = vmatpush1.msra.mxu0 0.0
        %5149 = vmatprep.subr.mxu0 0.0
        %5150 = vmatpush1.msra.mxu0 0.0
        %5151 = vmatprep.subr.mxu0 0.0
        %5152 = vmatpush1.msra.mxu0 0.0
        %5153 = vmatprep.subr.mxu0 0.0
        %5154 = vmatpush1.msra.mxu0 0.0
        %5155 = vmatprep.subr.mxu0 0.0
        %5156 = vmatpush1.msra.mxu0 0.0
        %5157 = vmatprep.subr.mxu0 0.0
        %5158 = vmatpush1.msra.mxu0 0.0
        %5159 = vmatprep.subr.mxu0 0.0
        %5160 = vmatpush1.msra.mxu0 0.0
        %5161 = vmatprep.subr.mxu0 0.0
        %5162 = vmatpush1.msra.mxu0 0.0
        %5163 = vmatprep.subr.mxu0 0.0
        %5164 = vmatpush1.msra.mxu0 0.0
        %5165 = vmatprep.subr.mxu0 0.0
        %5166 = vmatpush1.msra.mxu0 0.0
        %5167 = vmatprep.subr.mxu0 0.0
        %5168 = vmatpush1.msra.mxu0 0.0
        %5169 = vmatprep.subr.mxu0 0.0
        %5170 = vmatpush1.msra.mxu0 0.0
        %5171 = vmatprep.subr.mxu0 0.0
        %5172 = vmatpush1.msra.mxu0 0.0
        %5173 = vmatprep.subr.mxu0 0.0
        %5174 = vmatpush1.msra.mxu0 0.0
        %5175 = vmatprep.subr.mxu0 0.0
        %5176 = vmatpush1.msra.mxu0 0.0
        %5177 = vmatprep.subr.mxu0 0.0
        %5178 = vmatpush1.msra.mxu0 0.0
        %5179 = vmatprep.mubr.f32.mxu0 0.0
        %5180 = vmatmul.mubr.f32.gmra.mrb[0].mxu0 %v5110
        %v5181 = vpop.f32.mrb[0].mxu0
        %v5182 = vadd.f32 0.0, %v5181
        %v5183 = vpop.f32.mrb[0].mxu0
        %5184 = vdwg.mxu0
        %v5186 = vsel %vm2204, %v5106, 0
        %v5189 = vsel %vm2208, %v5182, 0
        %5191 = vmatprep.subr.mxu0 0.0
        %5192 = vmatpush1.msra.mxu0 %v5189
        %5193 = vmatprep.subr.mxu0 0.0
        %5194 = vmatpush1.msra.mxu0 0.0
        %5195 = vmatprep.subr.mxu0 0.0
        %5196 = vmatpush1.msra.mxu0 0.0
        %5197 = vmatprep.subr.mxu0 0.0
        %5198 = vmatpush1.msra.mxu0 0.0
        %5199 = vmatprep.subr.mxu0 0.0
        %5200 = vmatpush1.msra.mxu0 0.0
        %5201 = vmatprep.subr.mxu0 0.0
        %5202 = vmatpush1.msra.mxu0 0.0
        %5203 = vmatprep.subr.mxu0 0.0
        %5204 = vmatpush1.msra.mxu0 0.0
        %5205 = vmatprep.subr.mxu0 0.0
        %5206 = vmatpush1.msra.mxu0 0.0
        %5207 = vmatprep.subr.mxu0 0.0
        %5208 = vmatpush1.msra.mxu0 0.0
        %5209 = vmatprep.subr.mxu0 0.0
        %5210 = vmatpush1.msra.mxu0 0.0
        %5211 = vmatprep.subr.mxu0 0.0
        %5212 = vmatpush1.msra.mxu0 0.0
        %5213 = vmatprep.subr.mxu0 0.0
        %5214 = vmatpush1.msra.mxu0 0.0
        %5215 = vmatprep.subr.mxu0 0.0
        %5216 = vmatpush1.msra.mxu0 0.0
        %5217 = vmatprep.subr.mxu0 0.0
        %5218 = vmatpush1.msra.mxu0 0.0
        %5219 = vmatprep.subr.mxu0 0.0
        %5220 = vmatpush1.msra.mxu0 0.0
        %5221 = vmatprep.subr.mxu0 0.0
        %5222 = vmatpush1.msra.mxu0 0.0
        %5223 = vmatprep.subr.mxu0 0.0
        %5224 = vmatpush1.msra.mxu0 0.0
        %5225 = vmatprep.subr.mxu0 0.0
        %5226 = vmatpush1.msra.mxu0 0.0
        %5227 = vmatprep.subr.mxu0 0.0
        %5228 = vmatpush1.msra.mxu0 0.0
        %5229 = vmatprep.subr.mxu0 0.0
        %5230 = vmatpush1.msra.mxu0 0.0
        %5231 = vmatprep.subr.mxu0 0.0
        %5232 = vmatpush1.msra.mxu0 0.0
        %5233 = vmatprep.subr.mxu0 0.0
        %5234 = vmatpush1.msra.mxu0 0.0
        %5235 = vmatprep.subr.mxu0 0.0
        %5236 = vmatpush1.msra.mxu0 0.0
        %5237 = vmatprep.subr.mxu0 0.0
        %5238 = vmatpush1.msra.mxu0 0.0
        %5239 = vmatprep.subr.mxu0 0.0
        %5240 = vmatpush1.msra.mxu0 0.0
        %5241 = vmatprep.subr.mxu0 0.0
        %5242 = vmatpush1.msra.mxu0 0.0
        %5243 = vmatprep.subr.mxu0 0.0
        %5244 = vmatpush1.msra.mxu0 0.0
        %5245 = vmatprep.subr.mxu0 0.0
        %5246 = vmatpush1.msra.mxu0 0.0
        %5247 = vmatprep.subr.mxu0 0.0
        %5248 = vmatpush1.msra.mxu0 0.0
        %5249 = vmatprep.subr.mxu0 0.0
        %5250 = vmatpush1.msra.mxu0 0.0
        %5251 = vmatprep.subr.mxu0 0.0
        %5252 = vmatpush1.msra.mxu0 0.0
        %5253 = vmatprep.subr.mxu0 0.0
        %5254 = vmatpush1.msra.mxu0 0.0
        %5255 = vmatprep.mubr.f32.mxu0 0.0
        %5256 = vmatmul.mubr.f32.gmra.mrb[0].mxu0 %v5186
        %v5257 = vpop.f32.mrb[0].mxu0
        %v5258 = vadd.f32 0.0, %v5257
        %v5259 = vpop.f32.mrb[0].mxu0
        %5260 = vdwg.mxu0
        %v5261 = vadd.f32 %v5104, %v5258
        %s5262 = scalar_lea.vmem %s2, 512
        %v5263 = vld [vmem:[%s5262] sm:$0xff]
        %v5264 = vld [vmem:[%s5262 + $0x8] sm:$0xff]
        %s5265 = scalar_lea.vmem %s4, 200
        %v5266 = vld [vmem:[%s5265] sm:$0xff]
        %v5268 = vsel %vm1458, %v5261, 0
        %5270 = vmatprep.subr.mxu0 0.0
        %5271 = vmatpush1.msra.mxu0 %v5266
        %5272 = vmatprep.subr.mxu0 0.0
        %5273 = vmatpush1.msra.mxu0 0.0
        %5274 = vmatprep.subr.mxu0 0.0
        %5275 = vmatpush1.msra.mxu0 0.0
        %5276 = vmatprep.subr.mxu0 0.0
        %5277 = vmatpush1.msra.mxu0 0.0
        %5278 = vmatprep.subr.mxu0 0.0
        %5279 = vmatpush1.msra.mxu0 0.0
        %5280 = vmatprep.subr.mxu0 0.0
        %5281 = vmatpush1.msra.mxu0 0.0
        %5282 = vmatprep.subr.mxu0 0.0
        %5283 = vmatpush1.msra.mxu0 0.0
        %5284 = vmatprep.subr.mxu0 0.0
        %5285 = vmatpush1.msra.mxu0 0.0
        %5286 = vmatprep.subr.mxu0 0.0
        %5287 = vmatpush1.msra.mxu0 0.0
        %5288 = vmatprep.subr.mxu0 0.0
        %5289 = vmatpush1.msra.mxu0 0.0
        %5290 = vmatprep.subr.mxu0 0.0
        %5291 = vmatpush1.msra.mxu0 0.0
        %5292 = vmatprep.subr.mxu0 0.0
        %5293 = vmatpush1.msra.mxu0 0.0
        %5294 = vmatprep.subr.mxu0 0.0
        %5295 = vmatpush1.msra.mxu0 0.0
        %5296 = vmatprep.subr.mxu0 0.0
        %5297 = vmatpush1.msra.mxu0 0.0
        %5298 = vmatprep.subr.mxu0 0.0
        %5299 = vmatpush1.msra.mxu0 0.0
        %5300 = vmatprep.subr.mxu0 0.0
        %5301 = vmatpush1.msra.mxu0 0.0
        %5302 = vmatprep.subr.mxu0 0.0
        %5303 = vmatpush1.msra.mxu0 0.0
        %5304 = vmatprep.subr.mxu0 0.0
        %5305 = vmatpush1.msra.mxu0 0.0
        %5306 = vmatprep.subr.mxu0 0.0
        %5307 = vmatpush1.msra.mxu0 0.0
        %5308 = vmatprep.subr.mxu0 0.0
        %5309 = vmatpush1.msra.mxu0 0.0
        %5310 = vmatprep.subr.mxu0 0.0
        %5311 = vmatpush1.msra.mxu0 0.0
        %5312 = vmatprep.subr.mxu0 0.0
        %5313 = vmatpush1.msra.mxu0 0.0
        %5314 = vmatprep.subr.mxu0 0.0
        %5315 = vmatpush1.msra.mxu0 0.0
        %5316 = vmatprep.subr.mxu0 0.0
        %5317 = vmatpush1.msra.mxu0 0.0
        %5318 = vmatprep.subr.mxu0 0.0
        %5319 = vmatpush1.msra.mxu0 0.0
        %5320 = vmatprep.subr.mxu0 0.0
        %5321 = vmatpush1.msra.mxu0 0.0
        %5322 = vmatprep.subr.mxu0 0.0
        %5323 = vmatpush1.msra.mxu0 0.0
        %5324 = vmatprep.subr.mxu0 0.0
        %5325 = vmatpush1.msra.mxu0 0.0
        %5326 = vmatprep.subr.mxu0 0.0
        %5327 = vmatpush1.msra.mxu0 0.0
        %5328 = vmatprep.subr.mxu0 0.0
        %5329 = vmatpush1.msra.mxu0 0.0
        %5330 = vmatprep.subr.mxu0 0.0
        %5331 = vmatpush1.msra.mxu0 0.0
        %5332 = vmatprep.subr.mxu0 0.0
        %5333 = vmatpush1.msra.mxu0 0.0
        %5334 = vmatprep.mubr.f32.mxu0 0.0
        %5335 = vmatmul.mubr.f32.gmra.mrb[0].mxu0 %v5268
        %v5336 = vpop.f32.mrb[0].mxu0
        %v5337 = vadd.f32 0.0, %v5336
        %v5338 = vpop.f32.mrb[0].mxu0
        %5339 = vdwg.mxu0
        %v5341 = vsel %vm1458, %v5263, 0
        %v5344 = vsel %vm1458, %v5264, 0
        %5346 = vmatprep.subr.mxu0 0.0
        %5347 = vmatpush1.msra.mxu0 %v5337
        %5348 = vmatprep.subr.mxu0 0.0
        %5349 = vmatpush1.msra.mxu0 0.0
        %5350 = vmatprep.subr.mxu0 0.0
        %5351 = vmatpush1.msra.mxu0 0.0
        %5352 = vmatprep.subr.mxu0 0.0
        %5353 = vmatpush1.msra.mxu0 0.0
        %5354 = vmatprep.subr.mxu0 0.0
        %5355 = vmatpush1.msra.mxu0 0.0
        %5356 = vmatprep.subr.mxu0 0.0
        %5357 = vmatpush1.msra.mxu0 0.0
        %5358 = vmatprep.subr.mxu0 0.0
        %5359 = vmatpush1.msra.mxu0 0.0
        %5360 = vmatprep.subr.mxu0 0.0
        %5361 = vmatpush1.msra.mxu0 0.0
        %5362 = vmatprep.subr.mxu0 0.0
        %5363 = vmatpush1.msra.mxu0 0.0
        %5364 = vmatprep.subr.mxu0 0.0
        %5365 = vmatpush1.msra.mxu0 0.0
        %5366 = vmatprep.subr.mxu0 0.0
        %5367 = vmatpush1.msra.mxu0 0.0
        %5368 = vmatprep.subr.mxu0 0.0
        %5369 = vmatpush1.msra.mxu0 0.0
        %5370 = vmatprep.subr.mxu0 0.0
        %5371 = vmatpush1.msra.mxu0 0.0
        %5372 = vmatprep.subr.mxu0 0.0
        %5373 = vmatpush1.msra.mxu0 0.0
        %5374 = vmatprep.subr.mxu0 0.0
        %5375 = vmatpush1.msra.mxu0 0.0
        %5376 = vmatprep.subr.mxu0 0.0
        %5377 = vmatpush1.msra.mxu0 0.0
        %5378 = vmatprep.subr.mxu0 0.0
        %5379 = vmatpush1.msra.mxu0 0.0
        %5380 = vmatprep.subr.mxu0 0.0
        %5381 = vmatpush1.msra.mxu0 0.0
        %5382 = vmatprep.subr.mxu0 0.0
        %5383 = vmatpush1.msra.mxu0 0.0
        %5384 = vmatprep.subr.mxu0 0.0
        %5385 = vmatpush1.msra.mxu0 0.0
        %5386 = vmatprep.subr.mxu0 0.0
        %5387 = vmatpush1.msra.mxu0 0.0
        %5388 = vmatprep.subr.mxu0 0.0
        %5389 = vmatpush1.msra.mxu0 0.0
        %5390 = vmatprep.subr.mxu0 0.0
        %5391 = vmatpush1.msra.mxu0 0.0
        %5392 = vmatprep.subr.mxu0 0.0
        %5393 = vmatpush1.msra.mxu0 0.0
        %5394 = vmatprep.subr.mxu0 0.0
        %5395 = vmatpush1.msra.mxu0 0.0
        %5396 = vmatprep.subr.mxu0 0.0
        %5397 = vmatpush1.msra.mxu0 0.0
        %5398 = vmatprep.subr.mxu0 0.0
        %5399 = vmatpush1.msra.mxu0 0.0
        %5400 = vmatprep.subr.mxu0 0.0
        %5401 = vmatpush1.msra.mxu0 0.0
        %5402 = vmatprep.subr.mxu0 0.0
        %5403 = vmatpush1.msra.mxu0 0.0
        %5404 = vmatprep.subr.mxu0 0.0
        %5405 = vmatpush1.msra.mxu0 0.0
        %5406 = vmatprep.subr.mxu0 0.0
        %5407 = vmatpush1.msra.mxu0 0.0
        %5408 = vmatprep.subr.mxu0 0.0
        %5409 = vmatpush1.msra.mxu0 0.0
        %5410 = vmatprep.mubr.f32.mxu0 0.0
        %5411 = vmatmul.mubr.f32.gmra.mrb[0].mxu0 %v5341
        %v5412 = vpop.f32.mrb[0].mxu0
        %v5413 = vadd.f32 %v332, %v5412
        %v5414 = vpop.f32.mrb[0].mxu0
        %5415 = vmatprep.mubr.f32.mxu0 0.0
        %5416 = vmatmul.mubr.f32.gmra.mrb[0].mxu0 %v5344
        %v5417 = vpop.f32.mrb[0].mxu0
        %v5418 = vadd.f32 %v333, %v5417
        %v5419 = vpop.f32.mrb[0].mxu0
        %5420 = vdwg.mxu0
        %s5421 = sld [smem:[#allocation2 + $0x7]]
        %v5422 = vstv %s5421
        %v5423 = vmul.f32 %v5413, %v5422
        %v5424 = vmul.f32 %v5418, %v5422
        %s5425 = sld [smem:[#allocation2 + $0x8]]
        %v5426 = vstv %s5425
        %v5427 = vadd.f32 %v5423, %v5426
        %v5428 = vadd.f32 %v5424, %v5426
        %5429 = vst.msk [vmem:[%s231] sm:$0xff] %vm504, %v5427
        %5430 = vst.msk [vmem:[%s231 + $0x8] sm:$0xff] %vm504, %v5428
        %s5431 = sand.u32 %s138, 1
        %s5432 = scalar_lea.sflag [#allocation3], %s5431
        %s5433 = sand.u32 %s138, 1
        %s5434 = smul.addr %s5433, 16
        %s5435 = scalar_lea.vmem [#allocation5], %s5434
        // Predicated region
        $region45: #{apn_forward.1} parent=39 // pred_check
          %p5436 = pneg %p148
        $region46: #{apn_forward.1} parent=39 // pred_check_branch
          %5438 = sbr.rel (%p5436) target = $region48
        $region47: #{apn_forward.1} parent=39 // pred_region
          %s5440 = ssub.s32 256, 256
          %5441 = vsyncadd %s5432, %s5440
          %s5442 = smul.addr %s20, 2
          %s5443 = smul.addr %s5442, 128
          %s5444 = scalar_lea.hbm %s5, %s5443
          %s5445 = sshll.u32 %s5435, 4
          %s5446 = int_to_ptr.vmem [resolvable:$true] %s5445
          %5451 = dma.vmem_to_hbm [thread:$0]  %s5446, 256, %s5444, %s5432, 128, 128, 8
        $region48: #{apn_forward.1} parent=39 // pred_fallthru
          _
      $region40: #{apn_forward.1} parent=5 // pred_fallthru
        _
      %p5452 = scmp.le.s32.totalorder 2, %s15
      // Predicated region
      $region49: #{apn_forward.1} parent=5 // pred_check
        %p5453 = pneg %p5452
      $region50: #{apn_forward.1} parent=5 // pred_check_branch
        %5455 = sbr.rel (%p5453) target = $region52
      $region51: #{apn_forward.1} parent=5 // pred_region
        %s5456 = ssub.s32 %s15, 2
        // Predicated region
        $region53: #{apn_forward.1} parent=51 // pred_check
          %p5457 = pneg %p154
        $region54: #{apn_forward.1} parent=51 // pred_check_branch
          %5459 = sbr.rel (%p5457) target = $region56
        $region55: #{apn_forward.1} parent=51 // pred_region
          %s5460 = sand.u32 %s139, 1
          %s5461 = scalar_lea.sflag [#allocation3], %s5460
          %s5462 = sand.u32 %s139, 1
          %s5463 = smul.addr %s5462, 16
          %s5464 = scalar_lea.vmem [#allocation5], %s5463
          %5465 = dma.done %s5461, 256
        $region56: #{apn_forward.1} parent=51 // pred_fallthru
          _
      $region52: #{apn_forward.1} parent=5 // pred_fallthru
        _
    $region6: #{apn_forward.1} parent=1 // loop_footer
      %s19 = sadd.s32 1, %s15
    $region7: #{apn_forward.1} parent=1 // loop_footer_branch
      %14 = sbr.rel target = $region3
    $region8: #{apn_forward.1} parent=1 // loop_exit
      _
    %5466 = vsyncpa [#allocation3], 1
    %s5467 = scalar_lea.sflag [#allocation3], 1
    %5468 = vsyncpa %s5467, 1
    %5469 = vsyncpa [#allocation4], 1
    %s5470 = scalar_lea.sflag [#allocation4], 1
    %5471 = vsyncpa %s5470, 1

</llo_original>
